<compile_context>
chip_gen: v6e
topology: v6e:2x2x1
jax: 0.10.0
libtpu: 0.0.40
codegen_flags: <defaults>
</compile_context>

<pallas_src>
import jax
import jax.numpy as jnp
from jax.experimental import pallas as pl
from jax.experimental.pallas import tpu as pltpu

# ---- small, forward-consistent hyperparameters -----------------------------
N_QUESTION  = 20          # concepts + 1 (index 0 = padding)
EMBED_L     = 16
N_TIME_BINS = 6           # time bins + 1 (index 0 = padding)
HIDDEN_DIM  = 32
NUM_LAYERS  = 1
FINAL_FC    = 64
DROPOUT     = 0.0         # identity at p = 0.0
Z_WEIGHT    = 0.0
SEQ_LEN     = 8
BATCH       = 4

INPUT_SIZE  = EMBED_L + N_TIME_BINS + 2            # GRU input size   (24)
EXTRA       = EMBED_L + N_TIME_BINS                # FFN reuse cols   (22)
FFN_IN      = HIDDEN_DIM + EXTRA                   # MLP input size   (54)
N_ROWS      = SEQ_LEN * BATCH                      # flattened rows   (32)


# =============================================================================
# Fused kernel: GRU recurrence (shifted hidden) + 3-layer MLP + loss + sigmoid
# =============================================================================
def _dkt_fused_kernel(x_ref, y_ref,
                      w_ih_ref, b_ih_ref,
                      whr_ref, whz_ref, whn_ref,
                      bhr_ref, bhz_ref, bhn_ref,
                      w1h_ref, w1x_ref, b1_ref,
                      w2_ref, b2_ref, w3_ref, b3_ref,
                      loss_ref, prob_ref,
                      hprev_ref):
    H = HIDDEN_DIM
    B = BATCH
    f32 = jnp.float32

    x = x_ref[...]                                   # (N, I), row index = t*B + b

    # ---- hoisted, time-parallel input projection (one MXU push, off the
    #      serial path); gates sliced once, not per step --------------------
    gx = jnp.dot(x, w_ih_ref[...], preferred_element_type=f32) + b_ih_ref[...]
    gx_r = gx[:, 0:H]
    gx_z = gx[:, H:2 * H]
    gx_n = gx[:, 2 * H:3 * H]

    # ---- sequential GRU recurrence, fully unrolled at trace time ----------
    # PyTorch gate order r, z, n ;  n = tanh(gx_n + r * (W_hn h + b_hn))
    # The FFN consumes the *shifted* hidden h_{t-1} (h_0 = zeros).
    h = jnp.zeros((B, H), f32)
    for t in range(SEQ_LEN):
        hprev_ref[t * B:(t + 1) * B, :] = h          # static-slice store
        gh_r = jnp.dot(h, whr_ref[...], preferred_element_type=f32) + bhr_ref[...]
        gh_z = jnp.dot(h, whz_ref[...], preferred_element_type=f32) + bhz_ref[...]
        gh_n = jnp.dot(h, whn_ref[...], preferred_element_type=f32) + bhn_ref[...]
        r = jax.nn.sigmoid(gx_r[t * B:(t + 1) * B] + gh_r)
        z = jax.nn.sigmoid(gx_z[t * B:(t + 1) * B] + gh_z)
        n = jnp.tanh(gx_n[t * B:(t + 1) * B] + r * gh_n)
        h = (1.0 - z) * n + z * h

    h_all = hprev_ref[...]                           # (N, H) shifted hidden states

    # ---- fused MLP head; FFN input never leaves VMEM ----------------------
    # ffn = concat([h_all, q_embed, time_cat]) @ W1  ==  h_all@W1_h + x[:, :E+T]@W1_x
    h1 = jnp.maximum(
        jnp.dot(h_all, w1h_ref[...], preferred_element_type=f32)
        + jnp.dot(x[:, :EXTRA], w1x_ref[...], preferred_element_type=f32)
        + b1_ref[...], 0.0)                          # (N, FINAL_FC)
    h2 = jnp.maximum(
        jnp.dot(h1, w2_ref[...], preferred_element_type=f32) + b2_ref[...], 0.0)  # (N, 128)

    # lane-dense logits: (1,128) x (N,128)^T -> (1, N)
    logits = jnp.einsum('od,nd->on', w3_ref[...], h2,
                        preferred_element_type=f32) + b3_ref[...]                 # (1, N)

    y = y_ref[...]                                   # (1, N)
    # BCEWithLogitsLoss(reduction='none'), numerically stable form
    loss = (jnp.maximum(logits, 0.0) - logits * y
            + jnp.log1p(jnp.exp(-jnp.abs(logits))))
    if Z_WEIGHT != 0.0:                              # trace-time guard: dead compute at 0.0
        eps = 1e-6
        yc = jnp.clip(y, eps, 1.0 - eps)
        zt = jnp.log(yc / (1.0 - yc))
        loss = loss + Z_WEIGHT * jnp.square(zt - logits)

    loss_ref[...] = loss                             # single lane-dense store
    prob_ref[...] = jax.nn.sigmoid(logits)


def _full_spec(*shape):
    return pl.BlockSpec(shape, lambda i: tuple(0 for _ in shape))


def dkt_fused(x_flat, y_row, p):
    N = x_flat.shape[0]
    H = HIDDEN_DIM
    return pl.pallas_call(
        _dkt_fused_kernel,
        out_shape=(jax.ShapeDtypeStruct((1, N), jnp.float32),
                   jax.ShapeDtypeStruct((1, N), jnp.float32)),
        grid=(1,),
        in_specs=[
            _full_spec(N, INPUT_SIZE),               # x (flattened rnn_input)
            _full_spec(1, N),                        # target row
            _full_spec(INPUT_SIZE, 3 * H),           # w_ih
            _full_spec(1, 3 * H),                    # b_ih
            _full_spec(H, H), _full_spec(H, H), _full_spec(H, H),   # w_hh r/z/n
            _full_spec(1, H), _full_spec(1, H), _full_spec(1, H),   # b_hh r/z/n
            _full_spec(H, FINAL_FC),                 # w1 (hidden part)
            _full_spec(EXTRA, FINAL_FC),             # w1 (q_embed+time part)
            _full_spec(1, FINAL_FC),                 # b1
            _full_spec(FINAL_FC, 128),               # w2
            _full_spec(1, 128),                      # b2
            _full_spec(1, 128),                      # w3 (row layout)
            _full_spec(1, 1),                        # b3
        ],
        out_specs=(_full_spec(1, N), _full_spec(1, N)),
        scratch_shapes=[pltpu.VMEM((N, H), jnp.float32)],
        compiler_params=pltpu.CompilerParams(
            dimension_semantics=("arbitrary",)),
    )(x_flat, y_row,
      p["w_ih"], p["b_ih"],
      p["w_hh_r"], p["w_hh_z"], p["w_hh_n"],
      p["b_hh_r"], p["b_hh_z"], p["b_hh_n"],
      p["w1_h"], p["w1_x"], p["b1"],
      p["w2"], p["b2"], p["w3_row"], p["b3"])


# =============================================================================
# Full DKT forward (glue in plain JAX)
# =============================================================================
def dkt_forward(params, q_data, correct_data, attempts_data,
                time_bin_data, target, mask):
    # embedding lookup (padding_idx=0 row is zero) and one-hot time bins
    q_embed  = jnp.take(params["q_embed"], q_data, axis=0)              # (sl,B,E)
    time_cat = jax.nn.one_hot(time_bin_data, N_TIME_BINS, dtype=jnp.float32)

    rnn_input = jnp.concatenate(
        [q_embed, time_cat, correct_data[..., None], attempts_data[..., None]],
        axis=2)                                                         # (sl,B,I)

    x_flat = rnn_input.reshape(-1, INPUT_SIZE)       # (sl*B, I), time-major rows
    y_row  = target.reshape(1, -1)                   # (1, sl*B), same ordering

    loss_row, prob_row = dkt_fused(x_flat, y_row, params)

    loss_flat = loss_row.reshape(-1)
    probs     = prob_row.reshape(-1)
    mask_flat = mask.reshape(-1)
    # TODO(synk): boolean-mask gather has a dynamic shape (not jittable); kept
    # eager in plain JAX outside the kernel, values identical to labels[mask].
    out = loss_flat[mask_flat]
    return out, probs, mask_flat.sum()


# =============================================================================
# Deterministic parameter init + example inputs
# =============================================================================
def init_params(key):
    ks = jax.random.split(key, 16)
    u = lambda k, shape, s: jax.random.uniform(k, shape, jnp.float32, -s, s)

    emb = jax.random.normal(ks[0], (N_QUESTION, EMBED_L), jnp.float32)
    emb = emb.at[0].set(0.0)                         # padding_idx = 0

    H = HIDDEN_DIM
    s_gru = 1.0 / float(H) ** 0.5
    s_fc1 = 1.0 / float(FFN_IN) ** 0.5
    s_fc2 = 1.0 / float(FINAL_FC) ** 0.5
    s_fc3 = 1.0 / 128.0 ** 0.5
    return {
        "q_embed": emb,
        # GRU weights: w_ih (in, 3H) gate order r,z,n ; hidden weights per gate
        "w_ih":   u(ks[1], (INPUT_SIZE, 3 * H), s_gru),
        "b_ih":   u(ks[2], (1, 3 * H), s_gru),
        "w_hh_r": u(ks[3], (H, H), s_gru),
        "w_hh_z": u(ks[4], (H, H), s_gru),
        "w_hh_n": u(ks[5], (H, H), s_gru),
        "b_hh_r": u(ks[6], (1, H), s_gru),
        "b_hh_z": u(ks[7], (1, H), s_gru),
        "b_hh_n": u(ks[8], (1, H), s_gru),
        # MLP head: layer-1 weights pre-split (hidden part | q_embed+time part)
        "w1_h":   u(ks[9],  (H, FINAL_FC), s_fc1),
        "w1_x":   u(ks[10], (EXTRA, FINAL_FC), s_fc1),
        "b1":     u(ks[11], (1, FINAL_FC), s_fc1),
        "w2":     u(ks[12], (FINAL_FC, 128), s_fc2),
        "b2":     u(ks[13], (1, 128), s_fc2),
        "w3_row": u(ks[14], (1, 128), s_fc3),        # final layer stored as a row
        "b3":     u(ks[15], (1, 1), s_fc3),
    }


if __name__ == "__main__":
    key = jax.random.PRNGKey(0)
    kp, k1, k2, k3, k4, k5, k6 = jax.random.split(key, 7)

    params = init_params(kp)

    q_data        = jax.random.randint(k1, (SEQ_LEN, BATCH), 1, N_QUESTION, jnp.int32)
    correct_data  = jax.random.bernoulli(k2, 0.5, (SEQ_LEN, BATCH)).astype(jnp.float32)
    attempts_data = jax.random.randint(k3, (SEQ_LEN, BATCH), 1, 5, jnp.int32).astype(jnp.float32)
    time_bin_data = jax.random.randint(k4, (SEQ_LEN, BATCH), 1, N_TIME_BINS, jnp.int32)
    target        = jax.random.uniform(k5, (SEQ_LEN, BATCH), jnp.float32, 0.0, 1.0)
    mask          = jax.random.bernoulli(k6, 0.8, (SEQ_LEN, BATCH))

    out, sig_preds, n_seen = dkt_forward(
        params, q_data, correct_data, attempts_data, time_bin_data, target, mask)

    jax.block_until_ready(out)
    jax.block_until_ready(sig_preds)
    jax.block_until_ready(n_seen)

    assert out.shape == (int(n_seen),)
    assert sig_preds.shape == (SEQ_LEN * BATCH,)
    assert bool(jnp.all(jnp.isfinite(out)))
    assert bool(jnp.all((sig_preds > 0.0) & (sig_preds < 1.0)))

    print("KERNEL_OK")
</pallas_src>

<mosaic_0001>
module attributes {stable_mosaic.version = 11 : i64} {
  func.func @_dkt_fused_kernel(%arg0: i32, %arg1: memref<32x24xf32, #tpu.memory_space<vmem>>, %arg2: memref<1x32xf32, #tpu.memory_space<vmem>>, %arg3: memref<24x96xf32, #tpu.memory_space<vmem>>, %arg4: memref<1x96xf32, #tpu.memory_space<vmem>>, %arg5: memref<32x32xf32, #tpu.memory_space<vmem>>, %arg6: memref<32x32xf32, #tpu.memory_space<vmem>>, %arg7: memref<32x32xf32, #tpu.memory_space<vmem>>, %arg8: memref<1x32xf32, #tpu.memory_space<vmem>>, %arg9: memref<1x32xf32, #tpu.memory_space<vmem>>, %arg10: memref<1x32xf32, #tpu.memory_space<vmem>>, %arg11: memref<32x64xf32, #tpu.memory_space<vmem>>, %arg12: memref<22x64xf32, #tpu.memory_space<vmem>>, %arg13: memref<1x64xf32, #tpu.memory_space<vmem>>, %arg14: memref<64x128xf32, #tpu.memory_space<vmem>>, %arg15: memref<1x128xf32, #tpu.memory_space<vmem>>, %arg16: memref<1x128xf32, #tpu.memory_space<vmem>>, %arg17: memref<1x1xf32, #tpu.memory_space<vmem>>, %arg18: memref<1x32xf32, #tpu.memory_space<vmem>>, %arg19: memref<1x32xf32, #tpu.memory_space<vmem>>, %arg20: memref<32x32xf32, #tpu.memory_space<vmem>>) attributes {dimension_semantics = [#tpu.dimension_semantics<arbitrary>], iteration_bounds = array<i64: 1>, scalar_prefetch = 0 : i64, scratch_operands = 1 : i64, tpu.core_type = #tpu.core_type<tc>, window_params = [{pipeline_mode = #tpu.pipeline_mode<synchronous>, transform_indices = @transform_0, window_bounds = array<i64: 32, 24>}, {pipeline_mode = #tpu.pipeline_mode<synchronous>, transform_indices = @transform_1, window_bounds = array<i64: 1, 32>}, {pipeline_mode = #tpu.pipeline_mode<synchronous>, transform_indices = @transform_2, window_bounds = array<i64: 24, 96>}, {pipeline_mode = #tpu.pipeline_mode<synchronous>, transform_indices = @transform_3, window_bounds = array<i64: 1, 96>}, {pipeline_mode = #tpu.pipeline_mode<synchronous>, transform_indices = @transform_4, window_bounds = array<i64: 32, 32>}, {pipeline_mode = #tpu.pipeline_mode<synchronous>, transform_indices = @transform_5, window_bounds = array<i64: 32, 32>}, {pipeline_mode = #tpu.pipeline_mode<synchronous>, transform_indices = @transform_6, window_bounds = array<i64: 32, 32>}, {pipeline_mode = #tpu.pipeline_mode<synchronous>, transform_indices = @transform_7, window_bounds = array<i64: 1, 32>}, {pipeline_mode = #tpu.pipeline_mode<synchronous>, transform_indices = @transform_8, window_bounds = array<i64: 1, 32>}, {pipeline_mode = #tpu.pipeline_mode<synchronous>, transform_indices = @transform_9, window_bounds = array<i64: 1, 32>}, {pipeline_mode = #tpu.pipeline_mode<synchronous>, transform_indices = @transform_10, window_bounds = array<i64: 32, 64>}, {pipeline_mode = #tpu.pipeline_mode<synchronous>, transform_indices = @transform_11, window_bounds = array<i64: 22, 64>}, {pipeline_mode = #tpu.pipeline_mode<synchronous>, transform_indices = @transform_12, window_bounds = array<i64: 1, 64>}, {pipeline_mode = #tpu.pipeline_mode<synchronous>, transform_indices = @transform_13, window_bounds = array<i64: 64, 128>}, {pipeline_mode = #tpu.pipeline_mode<synchronous>, transform_indices = @transform_14, window_bounds = array<i64: 1, 128>}, {pipeline_mode = #tpu.pipeline_mode<synchronous>, transform_indices = @transform_15, window_bounds = array<i64: 1, 128>}, {pipeline_mode = #tpu.pipeline_mode<synchronous>, transform_indices = @transform_16, window_bounds = array<i64: 1, 1>}, {pipeline_mode = #tpu.pipeline_mode<synchronous>, transform_indices = @transform_17, window_bounds = array<i64: 1, 32>}, {pipeline_mode = #tpu.pipeline_mode<synchronous>, transform_indices = @transform_18, window_bounds = array<i64: 1, 32>}]} {
    %c0 = arith.constant 0 : index
    %c0_0 = arith.constant 0 : index
    %0 = vector.load %arg1[%c0, %c0_0] : memref<32x24xf32, #tpu.memory_space<vmem>>, vector<32x24xf32>
    %c0_1 = arith.constant 0 : index
    %c0_2 = arith.constant 0 : index
    %1 = vector.load %arg3[%c0_1, %c0_2] : memref<24x96xf32, #tpu.memory_space<vmem>>, vector<24x96xf32>
    %cst = arith.constant dense<0.000000e+00> : vector<32x96xf32>
    %2 = tpu.matmul %0, %1, %cst {dimension_numbers = #tpu.dot_dimension_numbers<[1], [0], [0], [1], [0, 0, 1, 1], [], []>} : vector<32x24xf32>, vector<24x96xf32>, vector<32x96xf32> -> vector<32x96xf32>
    %c0_3 = arith.constant 0 : index
    %c0_4 = arith.constant 0 : index
    %3 = vector.load %arg4[%c0_3, %c0_4] : memref<1x96xf32, #tpu.memory_space<vmem>>, vector<1x96xf32>
    %4 = vector.broadcast %3 : vector<1x96xf32> to vector<32x96xf32>
    %5 = arith.addf %2, %4 : vector<32x96xf32>
    %6 = vector.extract_strided_slice %5 {offsets = [0, 0], sizes = [32, 32], strides = [1, 1]} : vector<32x96xf32> to vector<32x32xf32>
    %7 = vector.extract_strided_slice %5 {offsets = [0, 32], sizes = [32, 32], strides = [1, 1]} : vector<32x96xf32> to vector<32x32xf32>
    %8 = vector.extract_strided_slice %5 {offsets = [0, 64], sizes = [32, 32], strides = [1, 1]} : vector<32x96xf32> to vector<32x32xf32>
    %cst_5 = arith.constant 0.000000e+00 : f32
    %9 = vector.broadcast %cst_5 : f32 to vector<4x32xf32>
    %c0_6 = arith.constant 0 : index
    %c0_7 = arith.constant 0 : index
    %10 = vector.load %arg20[%c0_6, %c0_7] : memref<32x32xf32, #tpu.memory_space<vmem>>, vector<4x32xf32>
    tpu.vector_store %arg20[%c0_6, %c0_7], %9 {strides = array<i32>} : memref<32x32xf32, #tpu.memory_space<vmem>>, vector<4x32xf32>,
    %c0_8 = arith.constant 0 : index
    %c0_9 = arith.constant 0 : index
    %11 = vector.load %arg5[%c0_8, %c0_9] : memref<32x32xf32, #tpu.memory_space<vmem>>, vector<32x32xf32>
    %cst_10 = arith.constant dense<0.000000e+00> : vector<4x32xf32>
    %12 = tpu.matmul %9, %11, %cst_10 {dimension_numbers = #tpu.dot_dimension_numbers<[1], [0], [0], [1], [0, 0, 1, 1], [], []>} : vector<4x32xf32>, vector<32x32xf32>, vector<4x32xf32> -> vector<4x32xf32>
    %c0_11 = arith.constant 0 : index
    %c0_12 = arith.constant 0 : index
    %13 = vector.load %arg8[%c0_11, %c0_12] : memref<1x32xf32, #tpu.memory_space<vmem>>, vector<1x32xf32>
    %14 = vector.broadcast %13 : vector<1x32xf32> to vector<4x32xf32>
    %15 = arith.addf %12, %14 : vector<4x32xf32>
    %c0_13 = arith.constant 0 : index
    %c0_14 = arith.constant 0 : index
    %16 = vector.load %arg6[%c0_13, %c0_14] : memref<32x32xf32, #tpu.memory_space<vmem>>, vector<32x32xf32>
    %cst_15 = arith.constant dense<0.000000e+00> : vector<4x32xf32>
    %17 = tpu.matmul %9, %16, %cst_15 {dimension_numbers = #tpu.dot_dimension_numbers<[1], [0], [0], [1], [0, 0, 1, 1], [], []>} : vector<4x32xf32>, vector<32x32xf32>, vector<4x32xf32> -> vector<4x32xf32>
    %c0_16 = arith.constant 0 : index
    %c0_17 = arith.constant 0 : index
    %18 = vector.load %arg9[%c0_16, %c0_17] : memref<1x32xf32, #tpu.memory_space<vmem>>, vector<1x32xf32>
    %19 = vector.broadcast %18 : vector<1x32xf32> to vector<4x32xf32>
    %20 = arith.addf %17, %19 : vector<4x32xf32>
    %c0_18 = arith.constant 0 : index
    %c0_19 = arith.constant 0 : index
    %21 = vector.load %arg7[%c0_18, %c0_19] : memref<32x32xf32, #tpu.memory_space<vmem>>, vector<32x32xf32>
    %cst_20 = arith.constant dense<0.000000e+00> : vector<4x32xf32>
    %22 = tpu.matmul %9, %21, %cst_20 {dimension_numbers = #tpu.dot_dimension_numbers<[1], [0], [0], [1], [0, 0, 1, 1], [], []>} : vector<4x32xf32>, vector<32x32xf32>, vector<4x32xf32> -> vector<4x32xf32>
    %c0_21 = arith.constant 0 : index
    %c0_22 = arith.constant 0 : index
    %23 = vector.load %arg10[%c0_21, %c0_22] : memref<1x32xf32, #tpu.memory_space<vmem>>, vector<1x32xf32>
    %24 = vector.broadcast %23 : vector<1x32xf32> to vector<4x32xf32>
    %25 = arith.addf %22, %24 : vector<4x32xf32>
    %26 = vector.extract_strided_slice %6 {offsets = [0, 0], sizes = [4, 32], strides = [1, 1]} : vector<32x32xf32> to vector<4x32xf32>
    %27 = arith.addf %26, %15 : vector<4x32xf32>
    %28 = arith.negf %27 : vector<4x32xf32>
    %29 = math.exp %28 : vector<4x32xf32>
    %cst_23 = arith.constant 1.000000e+00 : f32
    %30 = vector.broadcast %cst_23 : f32 to vector<4x32xf32>
    %31 = arith.addf %30, %29 : vector<4x32xf32>
    %32 = arith.divf %30, %31 : vector<4x32xf32>
    %33 = vector.extract_strided_slice %7 {offsets = [0, 0], sizes = [4, 32], strides = [1, 1]} : vector<32x32xf32> to vector<4x32xf32>
    %34 = arith.addf %33, %20 : vector<4x32xf32>
    %35 = arith.negf %34 : vector<4x32xf32>
    %36 = math.exp %35 : vector<4x32xf32>
    %cst_24 = arith.constant 1.000000e+00 : f32
    %37 = vector.broadcast %cst_24 : f32 to vector<4x32xf32>
    %38 = arith.addf %37, %36 : vector<4x32xf32>
    %39 = arith.divf %37, %38 : vector<4x32xf32>
    %40 = vector.extract_strided_slice %8 {offsets = [0, 0], sizes = [4, 32], strides = [1, 1]} : vector<32x32xf32> to vector<4x32xf32>
    %41 = arith.mulf %32, %25 : vector<4x32xf32>
    %42 = arith.addf %40, %41 : vector<4x32xf32>
    %43 = math.tanh %42 : vector<4x32xf32>
    %cst_25 = arith.constant 1.000000e+00 : f32
    %44 = vector.broadcast %cst_25 : f32 to vector<4x32xf32>
    %45 = arith.subf %44, %39 : vector<4x32xf32>
    %46 = arith.mulf %45, %43 : vector<4x32xf32>
    %47 = arith.mulf %39, %9 : vector<4x32xf32>
    %48 = arith.addf %46, %47 : vector<4x32xf32>
    %c4 = arith.constant 4 : index
    %c0_26 = arith.constant 0 : index
    %49 = vector.load %arg20[%c4, %c0_26] : memref<32x32xf32, #tpu.memory_space<vmem>>, vector<4x32xf32>
    tpu.vector_store %arg20[%c4, %c0_26], %48 {strides = array<i32>} : memref<32x32xf32, #tpu.memory_space<vmem>>, vector<4x32xf32>,
    %c0_27 = arith.constant 0 : index
    %c0_28 = arith.constant 0 : index
    %50 = vector.load %arg5[%c0_27, %c0_28] : memref<32x32xf32, #tpu.memory_space<vmem>>, vector<32x32xf32>
    %cst_29 = arith.constant dense<0.000000e+00> : vector<4x32xf32>
    %51 = tpu.matmul %48, %50, %cst_29 {dimension_numbers = #tpu.dot_dimension_numbers<[1], [0], [0], [1], [0, 0, 1, 1], [], []>} : vector<4x32xf32>, vector<32x32xf32>, vector<4x32xf32> -> vector<4x32xf32>
    %c0_30 = arith.constant 0 : index
    %c0_31 = arith.constant 0 : index
    %52 = vector.load %arg8[%c0_30, %c0_31] : memref<1x32xf32, #tpu.memory_space<vmem>>, vector<1x32xf32>
    %53 = vector.broadcast %52 : vector<1x32xf32> to vector<4x32xf32>
    %54 = arith.addf %51, %53 : vector<4x32xf32>
    %c0_32 = arith.constant 0 : index
    %c0_33 = arith.constant 0 : index
    %55 = vector.load %arg6[%c0_32, %c0_33] : memref<32x32xf32, #tpu.memory_space<vmem>>, vector<32x32xf32>
    %cst_34 = arith.constant dense<0.000000e+00> : vector<4x32xf32>
    %56 = tpu.matmul %48, %55, %cst_34 {dimension_numbers = #tpu.dot_dimension_numbers<[1], [0], [0], [1], [0, 0, 1, 1], [], []>} : vector<4x32xf32>, vector<32x32xf32>, vector<4x32xf32> -> vector<4x32xf32>
    %c0_35 = arith.constant 0 : index
    %c0_36 = arith.constant 0 : index
    %57 = vector.load %arg9[%c0_35, %c0_36] : memref<1x32xf32, #tpu.memory_space<vmem>>, vector<1x32xf32>
    %58 = vector.broadcast %57 : vector<1x32xf32> to vector<4x32xf32>
    %59 = arith.addf %56, %58 : vector<4x32xf32>
    %c0_37 = arith.constant 0 : index
    %c0_38 = arith.constant 0 : index
    %60 = vector.load %arg7[%c0_37, %c0_38] : memref<32x32xf32, #tpu.memory_space<vmem>>, vector<32x32xf32>
    %cst_39 = arith.constant dense<0.000000e+00> : vector<4x32xf32>
    %61 = tpu.matmul %48, %60, %cst_39 {dimension_numbers = #tpu.dot_dimension_numbers<[1], [0], [0], [1], [0, 0, 1, 1], [], []>} : vector<4x32xf32>, vector<32x32xf32>, vector<4x32xf32> -> vector<4x32xf32>
    %c0_40 = arith.constant 0 : index
    %c0_41 = arith.constant 0 : index
    %62 = vector.load %arg10[%c0_40, %c0_41] : memref<1x32xf32, #tpu.memory_space<vmem>>, vector<1x32xf32>
    %63 = vector.broadcast %62 : vector<1x32xf32> to vector<4x32xf32>
    %64 = arith.addf %61, %63 : vector<4x32xf32>
    %65 = vector.extract_strided_slice %6 {offsets = [4, 0], sizes = [4, 32], strides = [1, 1]} : vector<32x32xf32> to vector<4x32xf32>
    %66 = arith.addf %65, %54 : vector<4x32xf32>
    %67 = arith.negf %66 : vector<4x32xf32>
    %68 = math.exp %67 : vector<4x32xf32>
    %cst_42 = arith.constant 1.000000e+00 : f32
    %69 = vector.broadcast %cst_42 : f32 to vector<4x32xf32>
    %70 = arith.addf %69, %68 : vector<4x32xf32>
    %71 = arith.divf %69, %70 : vector<4x32xf32>
    %72 = vector.extract_strided_slice %7 {offsets = [4, 0], sizes = [4, 32], strides = [1, 1]} : vector<32x32xf32> to vector<4x32xf32>
    %73 = arith.addf %72, %59 : vector<4x32xf32>
    %74 = arith.negf %73 : vector<4x32xf32>
    %75 = math.exp %74 : vector<4x32xf32>
    %cst_43 = arith.constant 1.000000e+00 : f32
    %76 = vector.broadcast %cst_43 : f32 to vector<4x32xf32>
    %77 = arith.addf %76, %75 : vector<4x32xf32>
    %78 = arith.divf %76, %77 : vector<4x32xf32>
    %79 = vector.extract_strided_slice %8 {offsets = [4, 0], sizes = [4, 32], strides = [1, 1]} : vector<32x32xf32> to vector<4x32xf32>
    %80 = arith.mulf %71, %64 : vector<4x32xf32>
    %81 = arith.addf %79, %80 : vector<4x32xf32>
    %82 = math.tanh %81 : vector<4x32xf32>
    %cst_44 = arith.constant 1.000000e+00 : f32
    %83 = vector.broadcast %cst_44 : f32 to vector<4x32xf32>
    %84 = arith.subf %83, %78 : vector<4x32xf32>
    %85 = arith.mulf %84, %82 : vector<4x32xf32>
    %86 = arith.mulf %78, %48 : vector<4x32xf32>
    %87 = arith.addf %85, %86 : vector<4x32xf32>
    %c8 = arith.constant 8 : index
    %c0_45 = arith.constant 0 : index
    %88 = vector.load %arg20[%c8, %c0_45] : memref<32x32xf32, #tpu.memory_space<vmem>>, vector<4x32xf32>
    tpu.vector_store %arg20[%c8, %c0_45], %87 {strides = array<i32>} : memref<32x32xf32, #tpu.memory_space<vmem>>, vector<4x32xf32>,
    %c0_46 = arith.constant 0 : index
    %c0_47 = arith.constant 0 : index
    %89 = vector.load %arg5[%c0_46, %c0_47] : memref<32x32xf32, #tpu.memory_space<vmem>>, vector<32x32xf32>
    %cst_48 = arith.constant dense<0.000000e+00> : vector<4x32xf32>
    %90 = tpu.matmul %87, %89, %cst_48 {dimension_numbers = #tpu.dot_dimension_numbers<[1], [0], [0], [1], [0, 0, 1, 1], [], []>} : vector<4x32xf32>, vector<32x32xf32>, vector<4x32xf32> -> vector<4x32xf32>
    %c0_49 = arith.constant 0 : index
    %c0_50 = arith.constant 0 : index
    %91 = vector.load %arg8[%c0_49, %c0_50] : memref<1x32xf32, #tpu.memory_space<vmem>>, vector<1x32xf32>
    %92 = vector.broadcast %91 : vector<1x32xf32> to vector<4x32xf32>
    %93 = arith.addf %90, %92 : vector<4x32xf32>
    %c0_51 = arith.constant 0 : index
    %c0_52 = arith.constant 0 : index
    %94 = vector.load %arg6[%c0_51, %c0_52] : memref<32x32xf32, #tpu.memory_space<vmem>>, vector<32x32xf32>
    %cst_53 = arith.constant dense<0.000000e+00> : vector<4x32xf32>
    %95 = tpu.matmul %87, %94, %cst_53 {dimension_numbers = #tpu.dot_dimension_numbers<[1], [0], [0], [1], [0, 0, 1, 1], [], []>} : vector<4x32xf32>, vector<32x32xf32>, vector<4x32xf32> -> vector<4x32xf32>
    %c0_54 = arith.constant 0 : index
    %c0_55 = arith.constant 0 : index
    %96 = vector.load %arg9[%c0_54, %c0_55] : memref<1x32xf32, #tpu.memory_space<vmem>>, vector<1x32xf32>
    %97 = vector.broadcast %96 : vector<1x32xf32> to vector<4x32xf32>
    %98 = arith.addf %95, %97 : vector<4x32xf32>
    %c0_56 = arith.constant 0 : index
    %c0_57 = arith.constant 0 : index
    %99 = vector.load %arg7[%c0_56, %c0_57] : memref<32x32xf32, #tpu.memory_space<vmem>>, vector<32x32xf32>
    %cst_58 = arith.constant dense<0.000000e+00> : vector<4x32xf32>
    %100 = tpu.matmul %87, %99, %cst_58 {dimension_numbers = #tpu.dot_dimension_numbers<[1], [0], [0], [1], [0, 0, 1, 1], [], []>} : vector<4x32xf32>, vector<32x32xf32>, vector<4x32xf32> -> vector<4x32xf32>
    %c0_59 = arith.constant 0 : index
    %c0_60 = arith.constant 0 : index
    %101 = vector.load %arg10[%c0_59, %c0_60] : memref<1x32xf32, #tpu.memory_space<vmem>>, vector<1x32xf32>
    %102 = vector.broadcast %101 : vector<1x32xf32> to vector<4x32xf32>
    %103 = arith.addf %100, %102 : vector<4x32xf32>
    %104 = vector.extract_strided_slice %6 {offsets = [8, 0], sizes = [4, 32], strides = [1, 1]} : vector<32x32xf32> to vector<4x32xf32>
    %105 = arith.addf %104, %93 : vector<4x32xf32>
    %106 = arith.negf %105 : vector<4x32xf32>
    %107 = math.exp %106 : vector<4x32xf32>
    %cst_61 = arith.constant 1.000000e+00 : f32
    %108 = vector.broadcast %cst_61 : f32 to vector<4x32xf32>
    %109 = arith.addf %108, %107 : vector<4x32xf32>
    %110 = arith.divf %108, %109 : vector<4x32xf32>
    %111 = vector.extract_strided_slice %7 {offsets = [8, 0], sizes = [4, 32], strides = [1, 1]} : vector<32x32xf32> to vector<4x32xf32>
    %112 = arith.addf %111, %98 : vector<4x32xf32>
    %113 = arith.negf %112 : vector<4x32xf32>
    %114 = math.exp %113 : vector<4x32xf32>
    %cst_62 = arith.constant 1.000000e+00 : f32
    %115 = vector.broadcast %cst_62 : f32 to vector<4x32xf32>
    %116 = arith.addf %115, %114 : vector<4x32xf32>
    %117 = arith.divf %115, %116 : vector<4x32xf32>
    %118 = vector.extract_strided_slice %8 {offsets = [8, 0], sizes = [4, 32], strides = [1, 1]} : vector<32x32xf32> to vector<4x32xf32>
    %119 = arith.mulf %110, %103 : vector<4x32xf32>
    %120 = arith.addf %118, %119 : vector<4x32xf32>
    %121 = math.tanh %120 : vector<4x32xf32>
    %cst_63 = arith.constant 1.000000e+00 : f32
    %122 = vector.broadcast %cst_63 : f32 to vector<4x32xf32>
    %123 = arith.subf %122, %117 : vector<4x32xf32>
    %124 = arith.mulf %123, %121 : vector<4x32xf32>
    %125 = arith.mulf %117, %87 : vector<4x32xf32>
    %126 = arith.addf %124, %125 : vector<4x32xf32>
    %c12 = arith.constant 12 : index
    %c0_64 = arith.constant 0 : index
    %127 = vector.load %arg20[%c12, %c0_64] : memref<32x32xf32, #tpu.memory_space<vmem>>, vector<4x32xf32>
    tpu.vector_store %arg20[%c12, %c0_64], %126 {strides = array<i32>} : memref<32x32xf32, #tpu.memory_space<vmem>>, vector<4x32xf32>,
    %c0_65 = arith.constant 0 : index
    %c0_66 = arith.constant 0 : index
    %128 = vector.load %arg5[%c0_65, %c0_66] : memref<32x32xf32, #tpu.memory_space<vmem>>, vector<32x32xf32>
    %cst_67 = arith.constant dense<0.000000e+00> : vector<4x32xf32>
    %129 = tpu.matmul %126, %128, %cst_67 {dimension_numbers = #tpu.dot_dimension_numbers<[1], [0], [0], [1], [0, 0, 1, 1], [], []>} : vector<4x32xf32>, vector<32x32xf32>, vector<4x32xf32> -> vector<4x32xf32>
    %c0_68 = arith.constant 0 : index
    %c0_69 = arith.constant 0 : index
    %130 = vector.load %arg8[%c0_68, %c0_69] : memref<1x32xf32, #tpu.memory_space<vmem>>, vector<1x32xf32>
    %131 = vector.broadcast %130 : vector<1x32xf32> to vector<4x32xf32>
    %132 = arith.addf %129, %131 : vector<4x32xf32>
    %c0_70 = arith.constant 0 : index
    %c0_71 = arith.constant 0 : index
    %133 = vector.load %arg6[%c0_70, %c0_71] : memref<32x32xf32, #tpu.memory_space<vmem>>, vector<32x32xf32>
    %cst_72 = arith.constant dense<0.000000e+00> : vector<4x32xf32>
    %134 = tpu.matmul %126, %133, %cst_72 {dimension_numbers = #tpu.dot_dimension_numbers<[1], [0], [0], [1], [0, 0, 1, 1], [], []>} : vector<4x32xf32>, vector<32x32xf32>, vector<4x32xf32> -> vector<4x32xf32>
    %c0_73 = arith.constant 0 : index
    %c0_74 = arith.constant 0 : index
    %135 = vector.load %arg9[%c0_73, %c0_74] : memref<1x32xf32, #tpu.memory_space<vmem>>, vector<1x32xf32>
    %136 = vector.broadcast %135 : vector<1x32xf32> to vector<4x32xf32>
    %137 = arith.addf %134, %136 : vector<4x32xf32>
    %c0_75 = arith.constant 0 : index
    %c0_76 = arith.constant 0 : index
    %138 = vector.load %arg7[%c0_75, %c0_76] : memref<32x32xf32, #tpu.memory_space<vmem>>, vector<32x32xf32>
    %cst_77 = arith.constant dense<0.000000e+00> : vector<4x32xf32>
    %139 = tpu.matmul %126, %138, %cst_77 {dimension_numbers = #tpu.dot_dimension_numbers<[1], [0], [0], [1], [0, 0, 1, 1], [], []>} : vector<4x32xf32>, vector<32x32xf32>, vector<4x32xf32> -> vector<4x32xf32>
    %c0_78 = arith.constant 0 : index
    %c0_79 = arith.constant 0 : index
    %140 = vector.load %arg10[%c0_78, %c0_79] : memref<1x32xf32, #tpu.memory_space<vmem>>, vector<1x32xf32>
    %141 = vector.broadcast %140 : vector<1x32xf32> to vector<4x32xf32>
    %142 = arith.addf %139, %141 : vector<4x32xf32>
    %143 = vector.extract_strided_slice %6 {offsets = [12, 0], sizes = [4, 32], strides = [1, 1]} : vector<32x32xf32> to vector<4x32xf32>
    %144 = arith.addf %143, %132 : vector<4x32xf32>
    %145 = arith.negf %144 : vector<4x32xf32>
    %146 = math.exp %145 : vector<4x32xf32>
    %cst_80 = arith.constant 1.000000e+00 : f32
    %147 = vector.broadcast %cst_80 : f32 to vector<4x32xf32>
    %148 = arith.addf %147, %146 : vector<4x32xf32>
    %149 = arith.divf %147, %148 : vector<4x32xf32>
    %150 = vector.extract_strided_slice %7 {offsets = [12, 0], sizes = [4, 32], strides = [1, 1]} : vector<32x32xf32> to vector<4x32xf32>
    %151 = arith.addf %150, %137 : vector<4x32xf32>
    %152 = arith.negf %151 : vector<4x32xf32>
    %153 = math.exp %152 : vector<4x32xf32>
    %cst_81 = arith.constant 1.000000e+00 : f32
    %154 = vector.broadcast %cst_81 : f32 to vector<4x32xf32>
    %155 = arith.addf %154, %153 : vector<4x32xf32>
    %156 = arith.divf %154, %155 : vector<4x32xf32>
    %157 = vector.extract_strided_slice %8 {offsets = [12, 0], sizes = [4, 32], strides = [1, 1]} : vector<32x32xf32> to vector<4x32xf32>
    %158 = arith.mulf %149, %142 : vector<4x32xf32>
    %159 = arith.addf %157, %158 : vector<4x32xf32>
    %160 = math.tanh %159 : vector<4x32xf32>
    %cst_82 = arith.constant 1.000000e+00 : f32
    %161 = vector.broadcast %cst_82 : f32 to vector<4x32xf32>
    %162 = arith.subf %161, %156 : vector<4x32xf32>
    %163 = arith.mulf %162, %160 : vector<4x32xf32>
    %164 = arith.mulf %156, %126 : vector<4x32xf32>
    %165 = arith.addf %163, %164 : vector<4x32xf32>
    %c16 = arith.constant 16 : index
    %c0_83 = arith.constant 0 : index
    %166 = vector.load %arg20[%c16, %c0_83] : memref<32x32xf32, #tpu.memory_space<vmem>>, vector<4x32xf32>
    tpu.vector_store %arg20[%c16, %c0_83], %165 {strides = array<i32>} : memref<32x32xf32, #tpu.memory_space<vmem>>, vector<4x32xf32>,
    %c0_84 = arith.constant 0 : index
    %c0_85 = arith.constant 0 : index
    %167 = vector.load %arg5[%c0_84, %c0_85] : memref<32x32xf32, #tpu.memory_space<vmem>>, vector<32x32xf32>
    %cst_86 = arith.constant dense<0.000000e+00> : vector<4x32xf32>
    %168 = tpu.matmul %165, %167, %cst_86 {dimension_numbers = #tpu.dot_dimension_numbers<[1], [0], [0], [1], [0, 0, 1, 1], [], []>} : vector<4x32xf32>, vector<32x32xf32>, vector<4x32xf32> -> vector<4x32xf32>
    %c0_87 = arith.constant 0 : index
    %c0_88 = arith.constant 0 : index
    %169 = vector.load %arg8[%c0_87, %c0_88] : memref<1x32xf32, #tpu.memory_space<vmem>>, vector<1x32xf32>
    %170 = vector.broadcast %169 : vector<1x32xf32> to vector<4x32xf32>
    %171 = arith.addf %168, %170 : vector<4x32xf32>
    %c0_89 = arith.constant 0 : index
    %c0_90 = arith.constant 0 : index
    %172 = vector.load %arg6[%c0_89, %c0_90] : memref<32x32xf32, #tpu.memory_space<vmem>>, vector<32x32xf32>
    %cst_91 = arith.constant dense<0.000000e+00> : vector<4x32xf32>
    %173 = tpu.matmul %165, %172, %cst_91 {dimension_numbers = #tpu.dot_dimension_numbers<[1], [0], [0], [1], [0, 0, 1, 1], [], []>} : vector<4x32xf32>, vector<32x32xf32>, vector<4x32xf32> -> vector<4x32xf32>
    %c0_92 = arith.constant 0 : index
    %c0_93 = arith.constant 0 : index
    %174 = vector.load %arg9[%c0_92, %c0_93] : memref<1x32xf32, #tpu.memory_space<vmem>>, vector<1x32xf32>
    %175 = vector.broadcast %174 : vector<1x32xf32> to vector<4x32xf32>
    %176 = arith.addf %173, %175 : vector<4x32xf32>
    %c0_94 = arith.constant 0 : index
    %c0_95 = arith.constant 0 : index
    %177 = vector.load %arg7[%c0_94, %c0_95] : memref<32x32xf32, #tpu.memory_space<vmem>>, vector<32x32xf32>
    %cst_96 = arith.constant dense<0.000000e+00> : vector<4x32xf32>
    %178 = tpu.matmul %165, %177, %cst_96 {dimension_numbers = #tpu.dot_dimension_numbers<[1], [0], [0], [1], [0, 0, 1, 1], [], []>} : vector<4x32xf32>, vector<32x32xf32>, vector<4x32xf32> -> vector<4x32xf32>
    %c0_97 = arith.constant 0 : index
    %c0_98 = arith.constant 0 : index
    %179 = vector.load %arg10[%c0_97, %c0_98] : memref<1x32xf32, #tpu.memory_space<vmem>>, vector<1x32xf32>
    %180 = vector.broadcast %179 : vector<1x32xf32> to vector<4x32xf32>
    %181 = arith.addf %178, %180 : vector<4x32xf32>
    %182 = vector.extract_strided_slice %6 {offsets = [16, 0], sizes = [4, 32], strides = [1, 1]} : vector<32x32xf32> to vector<4x32xf32>
    %183 = arith.addf %182, %171 : vector<4x32xf32>
    %184 = arith.negf %183 : vector<4x32xf32>
    %185 = math.exp %184 : vector<4x32xf32>
    %cst_99 = arith.constant 1.000000e+00 : f32
    %186 = vector.broadcast %cst_99 : f32 to vector<4x32xf32>
    %187 = arith.addf %186, %185 : vector<4x32xf32>
    %188 = arith.divf %186, %187 : vector<4x32xf32>
    %189 = vector.extract_strided_slice %7 {offsets = [16, 0], sizes = [4, 32], strides = [1, 1]} : vector<32x32xf32> to vector<4x32xf32>
    %190 = arith.addf %189, %176 : vector<4x32xf32>
    %191 = arith.negf %190 : vector<4x32xf32>
    %192 = math.exp %191 : vector<4x32xf32>
    %cst_100 = arith.constant 1.000000e+00 : f32
    %193 = vector.broadcast %cst_100 : f32 to vector<4x32xf32>
    %194 = arith.addf %193, %192 : vector<4x32xf32>
    %195 = arith.divf %193, %194 : vector<4x32xf32>
    %196 = vector.extract_strided_slice %8 {offsets = [16, 0], sizes = [4, 32], strides = [1, 1]} : vector<32x32xf32> to vector<4x32xf32>
    %197 = arith.mulf %188, %181 : vector<4x32xf32>
    %198 = arith.addf %196, %197 : vector<4x32xf32>
    %199 = math.tanh %198 : vector<4x32xf32>
    %cst_101 = arith.constant 1.000000e+00 : f32
    %200 = vector.broadcast %cst_101 : f32 to vector<4x32xf32>
    %201 = arith.subf %200, %195 : vector<4x32xf32>
    %202 = arith.mulf %201, %199 : vector<4x32xf32>
    %203 = arith.mulf %195, %165 : vector<4x32xf32>
    %204 = arith.addf %202, %203 : vector<4x32xf32>
    %c20 = arith.constant 20 : index
    %c0_102 = arith.constant 0 : index
    %205 = vector.load %arg20[%c20, %c0_102] : memref<32x32xf32, #tpu.memory_space<vmem>>, vector<4x32xf32>
    tpu.vector_store %arg20[%c20, %c0_102], %204 {strides = array<i32>} : memref<32x32xf32, #tpu.memory_space<vmem>>, vector<4x32xf32>,
    %c0_103 = arith.constant 0 : index
    %c0_104 = arith.constant 0 : index
    %206 = vector.load %arg5[%c0_103, %c0_104] : memref<32x32xf32, #tpu.memory_space<vmem>>, vector<32x32xf32>
    %cst_105 = arith.constant dense<0.000000e+00> : vector<4x32xf32>
    %207 = tpu.matmul %204, %206, %cst_105 {dimension_numbers = #tpu.dot_dimension_numbers<[1], [0], [0], [1], [0, 0, 1, 1], [], []>} : vector<4x32xf32>, vector<32x32xf32>, vector<4x32xf32> -> vector<4x32xf32>
    %c0_106 = arith.constant 0 : index
    %c0_107 = arith.constant 0 : index
    %208 = vector.load %arg8[%c0_106, %c0_107] : memref<1x32xf32, #tpu.memory_space<vmem>>, vector<1x32xf32>
    %209 = vector.broadcast %208 : vector<1x32xf32> to vector<4x32xf32>
    %210 = arith.addf %207, %209 : vector<4x32xf32>
    %c0_108 = arith.constant 0 : index
    %c0_109 = arith.constant 0 : index
    %211 = vector.load %arg6[%c0_108, %c0_109] : memref<32x32xf32, #tpu.memory_space<vmem>>, vector<32x32xf32>
    %cst_110 = arith.constant dense<0.000000e+00> : vector<4x32xf32>
    %212 = tpu.matmul %204, %211, %cst_110 {dimension_numbers = #tpu.dot_dimension_numbers<[1], [0], [0], [1], [0, 0, 1, 1], [], []>} : vector<4x32xf32>, vector<32x32xf32>, vector<4x32xf32> -> vector<4x32xf32>
    %c0_111 = arith.constant 0 : index
    %c0_112 = arith.constant 0 : index
    %213 = vector.load %arg9[%c0_111, %c0_112] : memref<1x32xf32, #tpu.memory_space<vmem>>, vector<1x32xf32>
    %214 = vector.broadcast %213 : vector<1x32xf32> to vector<4x32xf32>
    %215 = arith.addf %212, %214 : vector<4x32xf32>
    %c0_113 = arith.constant 0 : index
    %c0_114 = arith.constant 0 : index
    %216 = vector.load %arg7[%c0_113, %c0_114] : memref<32x32xf32, #tpu.memory_space<vmem>>, vector<32x32xf32>
    %cst_115 = arith.constant dense<0.000000e+00> : vector<4x32xf32>
    %217 = tpu.matmul %204, %216, %cst_115 {dimension_numbers = #tpu.dot_dimension_numbers<[1], [0], [0], [1], [0, 0, 1, 1], [], []>} : vector<4x32xf32>, vector<32x32xf32>, vector<4x32xf32> -> vector<4x32xf32>
    %c0_116 = arith.constant 0 : index
    %c0_117 = arith.constant 0 : index
    %218 = vector.load %arg10[%c0_116, %c0_117] : memref<1x32xf32, #tpu.memory_space<vmem>>, vector<1x32xf32>
    %219 = vector.broadcast %218 : vector<1x32xf32> to vector<4x32xf32>
    %220 = arith.addf %217, %219 : vector<4x32xf32>
    %221 = vector.extract_strided_slice %6 {offsets = [20, 0], sizes = [4, 32], strides = [1, 1]} : vector<32x32xf32> to vector<4x32xf32>
    %222 = arith.addf %221, %210 : vector<4x32xf32>
    %223 = arith.negf %222 : vector<4x32xf32>
    %224 = math.exp %223 : vector<4x32xf32>
    %cst_118 = arith.constant 1.000000e+00 : f32
    %225 = vector.broadcast %cst_118 : f32 to vector<4x32xf32>
    %226 = arith.addf %225, %224 : vector<4x32xf32>
    %227 = arith.divf %225, %226 : vector<4x32xf32>
    %228 = vector.extract_strided_slice %7 {offsets = [20, 0], sizes = [4, 32], strides = [1, 1]} : vector<32x32xf32> to vector<4x32xf32>
    %229 = arith.addf %228, %215 : vector<4x32xf32>
    %230 = arith.negf %229 : vector<4x32xf32>
    %231 = math.exp %230 : vector<4x32xf32>
    %cst_119 = arith.constant 1.000000e+00 : f32
    %232 = vector.broadcast %cst_119 : f32 to vector<4x32xf32>
    %233 = arith.addf %232, %231 : vector<4x32xf32>
    %234 = arith.divf %232, %233 : vector<4x32xf32>
    %235 = vector.extract_strided_slice %8 {offsets = [20, 0], sizes = [4, 32], strides = [1, 1]} : vector<32x32xf32> to vector<4x32xf32>
    %236 = arith.mulf %227, %220 : vector<4x32xf32>
    %237 = arith.addf %235, %236 : vector<4x32xf32>
    %238 = math.tanh %237 : vector<4x32xf32>
    %cst_120 = arith.constant 1.000000e+00 : f32
    %239 = vector.broadcast %cst_120 : f32 to vector<4x32xf32>
    %240 = arith.subf %239, %234 : vector<4x32xf32>
    %241 = arith.mulf %240, %238 : vector<4x32xf32>
    %242 = arith.mulf %234, %204 : vector<4x32xf32>
    %243 = arith.addf %241, %242 : vector<4x32xf32>
    %c24 = arith.constant 24 : index
    %c0_121 = arith.constant 0 : index
    %244 = vector.load %arg20[%c24, %c0_121] : memref<32x32xf32, #tpu.memory_space<vmem>>, vector<4x32xf32>
    tpu.vector_store %arg20[%c24, %c0_121], %243 {strides = array<i32>} : memref<32x32xf32, #tpu.memory_space<vmem>>, vector<4x32xf32>,
    %c0_122 = arith.constant 0 : index
    %c0_123 = arith.constant 0 : index
    %245 = vector.load %arg5[%c0_122, %c0_123] : memref<32x32xf32, #tpu.memory_space<vmem>>, vector<32x32xf32>
    %cst_124 = arith.constant dense<0.000000e+00> : vector<4x32xf32>
    %246 = tpu.matmul %243, %245, %cst_124 {dimension_numbers = #tpu.dot_dimension_numbers<[1], [0], [0], [1], [0, 0, 1, 1], [], []>} : vector<4x32xf32>, vector<32x32xf32>, vector<4x32xf32> -> vector<4x32xf32>
    %c0_125 = arith.constant 0 : index
    %c0_126 = arith.constant 0 : index
    %247 = vector.load %arg8[%c0_125, %c0_126] : memref<1x32xf32, #tpu.memory_space<vmem>>, vector<1x32xf32>
    %248 = vector.broadcast %247 : vector<1x32xf32> to vector<4x32xf32>
    %249 = arith.addf %246, %248 : vector<4x32xf32>
    %c0_127 = arith.constant 0 : index
    %c0_128 = arith.constant 0 : index
    %250 = vector.load %arg6[%c0_127, %c0_128] : memref<32x32xf32, #tpu.memory_space<vmem>>, vector<32x32xf32>
    %cst_129 = arith.constant dense<0.000000e+00> : vector<4x32xf32>
    %251 = tpu.matmul %243, %250, %cst_129 {dimension_numbers = #tpu.dot_dimension_numbers<[1], [0], [0], [1], [0, 0, 1, 1], [], []>} : vector<4x32xf32>, vector<32x32xf32>, vector<4x32xf32> -> vector<4x32xf32>
    %c0_130 = arith.constant 0 : index
    %c0_131 = arith.constant 0 : index
    %252 = vector.load %arg9[%c0_130, %c0_131] : memref<1x32xf32, #tpu.memory_space<vmem>>, vector<1x32xf32>
    %253 = vector.broadcast %252 : vector<1x32xf32> to vector<4x32xf32>
    %254 = arith.addf %251, %253 : vector<4x32xf32>
    %c0_132 = arith.constant 0 : index
    %c0_133 = arith.constant 0 : index
    %255 = vector.load %arg7[%c0_132, %c0_133] : memref<32x32xf32, #tpu.memory_space<vmem>>, vector<32x32xf32>
    %cst_134 = arith.constant dense<0.000000e+00> : vector<4x32xf32>
    %256 = tpu.matmul %243, %255, %cst_134 {dimension_numbers = #tpu.dot_dimension_numbers<[1], [0], [0], [1], [0, 0, 1, 1], [], []>} : vector<4x32xf32>, vector<32x32xf32>, vector<4x32xf32> -> vector<4x32xf32>
    %c0_135 = arith.constant 0 : index
    %c0_136 = arith.constant 0 : index
    %257 = vector.load %arg10[%c0_135, %c0_136] : memref<1x32xf32, #tpu.memory_space<vmem>>, vector<1x32xf32>
    %258 = vector.broadcast %257 : vector<1x32xf32> to vector<4x32xf32>
    %259 = arith.addf %256, %258 : vector<4x32xf32>
    %260 = vector.extract_strided_slice %6 {offsets = [24, 0], sizes = [4, 32], strides = [1, 1]} : vector<32x32xf32> to vector<4x32xf32>
    %261 = arith.addf %260, %249 : vector<4x32xf32>
    %262 = arith.negf %261 : vector<4x32xf32>
    %263 = math.exp %262 : vector<4x32xf32>
    %cst_137 = arith.constant 1.000000e+00 : f32
    %264 = vector.broadcast %cst_137 : f32 to vector<4x32xf32>
    %265 = arith.addf %264, %263 : vector<4x32xf32>
    %266 = arith.divf %264, %265 : vector<4x32xf32>
    %267 = vector.extract_strided_slice %7 {offsets = [24, 0], sizes = [4, 32], strides = [1, 1]} : vector<32x32xf32> to vector<4x32xf32>
    %268 = arith.addf %267, %254 : vector<4x32xf32>
    %269 = arith.negf %268 : vector<4x32xf32>
    %270 = math.exp %269 : vector<4x32xf32>
    %cst_138 = arith.constant 1.000000e+00 : f32
    %271 = vector.broadcast %cst_138 : f32 to vector<4x32xf32>
    %272 = arith.addf %271, %270 : vector<4x32xf32>
    %273 = arith.divf %271, %272 : vector<4x32xf32>
    %274 = vector.extract_strided_slice %8 {offsets = [24, 0], sizes = [4, 32], strides = [1, 1]} : vector<32x32xf32> to vector<4x32xf32>
    %275 = arith.mulf %266, %259 : vector<4x32xf32>
    %276 = arith.addf %274, %275 : vector<4x32xf32>
    %277 = math.tanh %276 : vector<4x32xf32>
    %cst_139 = arith.constant 1.000000e+00 : f32
    %278 = vector.broadcast %cst_139 : f32 to vector<4x32xf32>
    %279 = arith.subf %278, %273 : vector<4x32xf32>
    %280 = arith.mulf %279, %277 : vector<4x32xf32>
    %281 = arith.mulf %273, %243 : vector<4x32xf32>
    %282 = arith.addf %280, %281 : vector<4x32xf32>
    %c28 = arith.constant 28 : index
    %c0_140 = arith.constant 0 : index
    %283 = vector.load %arg20[%c28, %c0_140] : memref<32x32xf32, #tpu.memory_space<vmem>>, vector<4x32xf32>
    tpu.vector_store %arg20[%c28, %c0_140], %282 {strides = array<i32>} : memref<32x32xf32, #tpu.memory_space<vmem>>, vector<4x32xf32>,
    %c0_141 = arith.constant 0 : index
    %c0_142 = arith.constant 0 : index
    %284 = vector.load %arg20[%c0_141, %c0_142] : memref<32x32xf32, #tpu.memory_space<vmem>>, vector<32x32xf32>
    %c0_143 = arith.constant 0 : index
    %c0_144 = arith.constant 0 : index
    %285 = vector.load %arg11[%c0_143, %c0_144] : memref<32x64xf32, #tpu.memory_space<vmem>>, vector<32x64xf32>
    %cst_145 = arith.constant dense<0.000000e+00> : vector<32x64xf32>
    %286 = tpu.matmul %284, %285, %cst_145 {dimension_numbers = #tpu.dot_dimension_numbers<[1], [0], [0], [1], [0, 0, 1, 1], [], []>} : vector<32x32xf32>, vector<32x64xf32>, vector<32x64xf32> -> vector<32x64xf32>
    %287 = vector.extract_strided_slice %0 {offsets = [0, 0], sizes = [32, 22], strides = [1, 1]} : vector<32x24xf32> to vector<32x22xf32>
    %c0_146 = arith.constant 0 : index
    %c0_147 = arith.constant 0 : index
    %288 = vector.load %arg12[%c0_146, %c0_147] : memref<22x64xf32, #tpu.memory_space<vmem>>, vector<22x64xf32>
    %cst_148 = arith.constant dense<0.000000e+00> : vector<32x64xf32>
    %289 = tpu.matmul %287, %288, %cst_148 {dimension_numbers = #tpu.dot_dimension_numbers<[1], [0], [0], [1], [0, 0, 1, 1], [], []>} : vector<32x22xf32>, vector<22x64xf32>, vector<32x64xf32> -> vector<32x64xf32>
    %290 = arith.addf %286, %289 : vector<32x64xf32>
    %c0_149 = arith.constant 0 : index
    %c0_150 = arith.constant 0 : index
    %291 = vector.load %arg13[%c0_149, %c0_150] : memref<1x64xf32, #tpu.memory_space<vmem>>, vector<1x64xf32>
    %292 = vector.broadcast %291 : vector<1x64xf32> to vector<32x64xf32>
    %293 = arith.addf %290, %292 : vector<32x64xf32>
    %cst_151 = arith.constant 0.000000e+00 : f32
    %294 = vector.broadcast %cst_151 : f32 to vector<32x64xf32>
    %295 = arith.maximumf %293, %294 : vector<32x64xf32>
    %c0_152 = arith.constant 0 : index
    %c0_153 = arith.constant 0 : index
    %296 = vector.load %arg14[%c0_152, %c0_153] : memref<64x128xf32, #tpu.memory_space<vmem>>, vector<64x128xf32>
    %cst_154 = arith.constant dense<0.000000e+00> : vector<32x128xf32>
    %297 = tpu.matmul %295, %296, %cst_154 {dimension_numbers = #tpu.dot_dimension_numbers<[1], [0], [0], [1], [0, 0, 1, 1], [], []>} : vector<32x64xf32>, vector<64x128xf32>, vector<32x128xf32> -> vector<32x128xf32>
    %c0_155 = arith.constant 0 : index
    %c0_156 = arith.constant 0 : index
    %298 = vector.load %arg15[%c0_155, %c0_156] : memref<1x128xf32, #tpu.memory_space<vmem>>, vector<1x128xf32>
    %299 = vector.broadcast %298 : vector<1x128xf32> to vector<32x128xf32>
    %300 = arith.addf %297, %299 : vector<32x128xf32>
    %cst_157 = arith.constant 0.000000e+00 : f32
    %301 = vector.broadcast %cst_157 : f32 to vector<32x128xf32>
    %302 = arith.maximumf %300, %301 : vector<32x128xf32>
    %c0_158 = arith.constant 0 : index
    %c0_159 = arith.constant 0 : index
    %303 = vector.load %arg16[%c0_158, %c0_159] : memref<1x128xf32, #tpu.memory_space<vmem>>, vector<1x128xf32>
    "tpu.trace_start"() <{level = 10 : i32, message = "od,nd->on"}> : () -> ()
    %cst_160 = arith.constant dense<0.000000e+00> : vector<1x32xf32>
    %304 = tpu.matmul %303, %302, %cst_160 {dimension_numbers = #tpu.dot_dimension_numbers<[1], [1], [0], [0], [0, 0, 1, 0], [], []>} : vector<1x128xf32>, vector<32x128xf32>, vector<1x32xf32> -> vector<1x32xf32>
    "tpu.trace_stop"() : () -> ()
    %c0_161 = arith.constant 0 : index
    %c0_162 = arith.constant 0 : index
    %305 = vector.load %arg17[%c0_161, %c0_162] : memref<1x1xf32, #tpu.memory_space<vmem>>, vector<1x1xf32>
    %306 = vector.broadcast %305 : vector<1x1xf32> to vector<1x32xf32>
    %307 = arith.addf %304, %306 : vector<1x32xf32>
    %c0_163 = arith.constant 0 : index
    %c0_164 = arith.constant 0 : index
    %308 = vector.load %arg2[%c0_163, %c0_164] : memref<1x32xf32, #tpu.memory_space<vmem>>, vector<1x32xf32>
    %cst_165 = arith.constant 0.000000e+00 : f32
    %309 = vector.broadcast %cst_165 : f32 to vector<1x32xf32>
    %310 = arith.maximumf %307, %309 : vector<1x32xf32>
    %311 = arith.mulf %307, %308 : vector<1x32xf32>
    %312 = arith.subf %310, %311 : vector<1x32xf32>
    %313 = math.absf %307 : vector<1x32xf32>
    %cst_166 = arith.constant 0.000000e+00 : f32
    %314 = vector.broadcast %cst_166 : f32 to vector<1x32xf32>
    %315 = arith.subf %314, %313 : vector<1x32xf32>
    %316 = math.exp %315 : vector<1x32xf32>
    %317 = math.log1p %316 : vector<1x32xf32>
    %318 = arith.addf %312, %317 : vector<1x32xf32>
    %c0_167 = arith.constant 0 : index
    %c0_168 = arith.constant 0 : index
    %319 = vector.load %arg18[%c0_167, %c0_168] : memref<1x32xf32, #tpu.memory_space<vmem>>, vector<1x32xf32>
    tpu.vector_store %arg18[%c0_167, %c0_168], %318 {strides = array<i32>} : memref<1x32xf32, #tpu.memory_space<vmem>>, vector<1x32xf32>,
    %320 = arith.negf %307 : vector<1x32xf32>
    %321 = math.exp %320 : vector<1x32xf32>
    %cst_169 = arith.constant 1.000000e+00 : f32
    %322 = vector.broadcast %cst_169 : f32 to vector<1x32xf32>
    %323 = arith.addf %322, %321 : vector<1x32xf32>
    %324 = arith.divf %322, %323 : vector<1x32xf32>
    %c0_170 = arith.constant 0 : index
    %c0_171 = arith.constant 0 : index
    %325 = vector.load %arg19[%c0_170, %c0_171] : memref<1x32xf32, #tpu.memory_space<vmem>>, vector<1x32xf32>
    tpu.vector_store %arg19[%c0_170, %c0_171], %324 {strides = array<i32>} : memref<1x32xf32, #tpu.memory_space<vmem>>, vector<1x32xf32>,
    return
  }
  func.func @transform_0(%arg0: i32) -> (i32, i32) {
    %c0_i32 = arith.constant 0 : i32
    %c0_i32_0 = arith.constant 0 : i32
    %c0_i32_1 = arith.constant 0 : i32
    return %c0_i32, %c0_i32_0 : i32, i32
  }
  func.func @transform_1(%arg0: i32) -> (i32, i32) {
    %c0_i32 = arith.constant 0 : i32
    %c0_i32_0 = arith.constant 0 : i32
    %c0_i32_1 = arith.constant 0 : i32
    return %c0_i32, %c0_i32_0 : i32, i32
  }
  func.func @transform_2(%arg0: i32) -> (i32, i32) {
    %c0_i32 = arith.constant 0 : i32
    %c0_i32_0 = arith.constant 0 : i32
    %c0_i32_1 = arith.constant 0 : i32
    return %c0_i32, %c0_i32_0 : i32, i32
  }
  func.func @transform_3(%arg0: i32) -> (i32, i32) {
    %c0_i32 = arith.constant 0 : i32
    %c0_i32_0 = arith.constant 0 : i32
    %c0_i32_1 = arith.constant 0 : i32
    return %c0_i32, %c0_i32_0 : i32, i32
  }
  func.func @transform_4(%arg0: i32) -> (i32, i32) {
    %c0_i32 = arith.constant 0 : i32
    %c0_i32_0 = arith.constant 0 : i32
    %c0_i32_1 = arith.constant 0 : i32
    return %c0_i32, %c0_i32_0 : i32, i32
  }
  func.func @transform_5(%arg0: i32) -> (i32, i32) {
    %c0_i32 = arith.constant 0 : i32
    %c0_i32_0 = arith.constant 0 : i32
    %c0_i32_1 = arith.constant 0 : i32
    return %c0_i32, %c0_i32_0 : i32, i32
  }
  func.func @transform_6(%arg0: i32) -> (i32, i32) {
    %c0_i32 = arith.constant 0 : i32
    %c0_i32_0 = arith.constant 0 : i32
    %c0_i32_1 = arith.constant 0 : i32
    return %c0_i32, %c0_i32_0 : i32, i32
  }
  func.func @transform_7(%arg0: i32) -> (i32, i32) {
    %c0_i32 = arith.constant 0 : i32
    %c0_i32_0 = arith.constant 0 : i32
    %c0_i32_1 = arith.constant 0 : i32
    return %c0_i32, %c0_i32_0 : i32, i32
  }
  func.func @transform_8(%arg0: i32) -> (i32, i32) {
    %c0_i32 = arith.constant 0 : i32
    %c0_i32_0 = arith.constant 0 : i32
    %c0_i32_1 = arith.constant 0 : i32
    return %c0_i32, %c0_i32_0 : i32, i32
  }
  func.func @transform_9(%arg0: i32) -> (i32, i32) {
    %c0_i32 = arith.constant 0 : i32
    %c0_i32_0 = arith.constant 0 : i32
    %c0_i32_1 = arith.constant 0 : i32
    return %c0_i32, %c0_i32_0 : i32, i32
  }
  func.func @transform_10(%arg0: i32) -> (i32, i32) {
    %c0_i32 = arith.constant 0 : i32
    %c0_i32_0 = arith.constant 0 : i32
    %c0_i32_1 = arith.constant 0 : i32
    return %c0_i32, %c0_i32_0 : i32, i32
  }
  func.func @transform_11(%arg0: i32) -> (i32, i32) {
    %c0_i32 = arith.constant 0 : i32
    %c0_i32_0 = arith.constant 0 : i32
    %c0_i32_1 = arith.constant 0 : i32
    return %c0_i32, %c0_i32_0 : i32, i32
  }
  func.func @transform_12(%arg0: i32) -> (i32, i32) {
    %c0_i32 = arith.constant 0 : i32
    %c0_i32_0 = arith.constant 0 : i32
    %c0_i32_1 = arith.constant 0 : i32
    return %c0_i32, %c0_i32_0 : i32, i32
  }
  func.func @transform_13(%arg0: i32) -> (i32, i32) {
    %c0_i32 = arith.constant 0 : i32
    %c0_i32_0 = arith.constant 0 : i32
    %c0_i32_1 = arith.constant 0 : i32
    return %c0_i32, %c0_i32_0 : i32, i32
  }
  func.func @transform_14(%arg0: i32) -> (i32, i32) {
    %c0_i32 = arith.constant 0 : i32
    %c0_i32_0 = arith.constant 0 : i32
    %c0_i32_1 = arith.constant 0 : i32
    return %c0_i32, %c0_i32_0 : i32, i32
  }
  func.func @transform_15(%arg0: i32) -> (i32, i32) {
    %c0_i32 = arith.constant 0 : i32
    %c0_i32_0 = arith.constant 0 : i32
    %c0_i32_1 = arith.constant 0 : i32
    return %c0_i32, %c0_i32_0 : i32, i32
  }
  func.func @transform_16(%arg0: i32) -> (i32, i32) {
    %c0_i32 = arith.constant 0 : i32
    %c0_i32_0 = arith.constant 0 : i32
    %c0_i32_1 = arith.constant 0 : i32
    return %c0_i32, %c0_i32_0 : i32, i32
  }
  func.func @transform_17(%arg0: i32) -> (i32, i32) {
    %c0_i32 = arith.constant 0 : i32
    %c0_i32_0 = arith.constant 0 : i32
    %c0_i32_1 = arith.constant 0 : i32
    return %c0_i32, %c0_i32_0 : i32, i32
  }
  func.func @transform_18(%arg0: i32) -> (i32, i32) {
    %c0_i32 = arith.constant 0 : i32
    %c0_i32_0 = arith.constant 0 : i32
    %c0_i32_1 = arith.constant 0 : i32
    return %c0_i32, %c0_i32_0 : i32, i32
  }
}

</mosaic_0001>

<llo_original>
// kernel: tpu_custom_call.1
$region0: #{tpu_custom_call.1}
  #allocation0 [shape = 'u32[]', space=smem, size = 0x4, offset = 0x4, fixed_abs, tag = 'smem constant byte address 0x4 - core index']
  #allocation1 [shape = 'u32[144,128]{1,0:T(1,128)}', space=vmem, size = 0x12000, scoped, tag = 'internal scratch']
  #allocation2 [shape = 'f32[32,32]{1,0:T(8,128)}', space=vmem, size = 0x4000, scoped, tag = 'scratch operand']
  #allocation3 [shape = 'f32[1,1]{1,0:T(1,128)S(1)}', space=vmem, size = 0x200, scoped, tag = 'scoped memory for tpu_custom_call.1']
  %s0 = inlined_call_operand.vmem [shape: f32[32,24], index: 0, kind: input, shape index: {}]
  %s1 = inlined_call_operand.vmem [shape: f32[1,32], index: 1, kind: input, shape index: {}]
  %s2 = inlined_call_operand.hbm [shape: f32[24,96], index: 2, kind: input, shape index: {}]
  %s3 = inlined_call_operand.vmem [shape: f32[1,96], index: 3, kind: input, shape index: {}]
  %s4 = inlined_call_operand.hbm [shape: f32[32,32], index: 4, kind: input, shape index: {}]
  %s5 = inlined_call_operand.hbm [shape: f32[32,32], index: 5, kind: input, shape index: {}]
  %s6 = inlined_call_operand.hbm [shape: f32[32,32], index: 6, kind: input, shape index: {}]
  %s7 = inlined_call_operand.vmem [shape: f32[1,32], index: 7, kind: input, shape index: {}]
  %s8 = inlined_call_operand.vmem [shape: f32[1,32], index: 8, kind: input, shape index: {}]
  %s9 = inlined_call_operand.vmem [shape: f32[1,32], index: 9, kind: input, shape index: {}]
  %s10 = inlined_call_operand.hbm [shape: f32[32,64], index: 10, kind: input, shape index: {}]
  %s11 = inlined_call_operand.hbm [shape: f32[22,64], index: 11, kind: input, shape index: {}]
  %s12 = inlined_call_operand.vmem [shape: f32[1,64], index: 12, kind: input, shape index: {}]
  %s13 = inlined_call_operand.vmem [shape: f32[64,128], index: 13, kind: input, shape index: {}]
  %s14 = inlined_call_operand.vmem [shape: f32[1,128], index: 14, kind: input, shape index: {}]
  %s15 = inlined_call_operand.vmem [shape: f32[1,128], index: 15, kind: input, shape index: {}]
  %s16 = inlined_call_operand.<no memory space> [shape: f32[1,1], index: 16, kind: input, shape index: {}]
  %s17 = inlined_call_operand.hbm [shape: f32[1,32], index: 17, kind: output, shape index: {0}]
  %s18 = inlined_call_operand.hbm [shape: f32[1,32], index: 18, kind: output, shape index: {1}]
  %19 = xla_tuple %s17, %s18
  %s20 = sld [smem:[#allocation0]]
  $region110: #{tpu_custom_call.1} parent=0
    _
  %s22 = ssub.s32 1, %s20
  %s23 = scalar_select 0, %s22, %s20
  %v24 = vstv %s16
  %25 = vst [vmem:[#allocation3] sm:$0x1] %v24
  $region1: #{tpu_custom_call.1} parent=0
    #allocation4 [shape = 'u8[12288]{0}', space=vmem, size = 0x3000, scoped, tag = 'input window, operand 2, single buffered']
    #allocation5 [shape = 's32[1]{0}', space=sflag, size = 0x4, scoped, tag = 'scoped memory for tpu_custom_call.1']
    #allocation6 [shape = 's32[1]{0}', space=sflag, size = 0x4, scoped, tag = 'scoped memory for tpu_custom_call.1']
    #allocation7 [shape = 'u8[16384]{0}', space=vmem, size = 0x4000, scoped, tag = 'input window, operand 4, single buffered']
    #allocation8 [shape = 's32[1]{0}', space=sflag, size = 0x4, scoped, tag = 'scoped memory for tpu_custom_call.1']
    #allocation9 [shape = 'u8[16384]{0}', space=vmem, size = 0x4000, scoped, tag = 'input window, operand 5, single buffered']
    #allocation10 [shape = 'u8[16384]{0}', space=vmem, size = 0x4000, scoped, tag = 'input window, operand 6, single buffered']
    #allocation11 [shape = 's32[1]{0}', space=sflag, size = 0x4, scoped, tag = 'scoped memory for tpu_custom_call.1']
    #allocation12 [shape = 'u8[16384]{0}', space=vmem, size = 0x4000, scoped, tag = 'input window, operand 10, single buffered']
    #allocation13 [shape = 'u8[12288]{0}', space=vmem, size = 0x3000, scoped, tag = 'input window, operand 11, single buffered']
    #allocation14 [shape = 's32[1]{0}', space=sflag, size = 0x4, scoped, tag = 'scoped memory for tpu_custom_call.1']
    #allocation15 [shape = 'u8[512]{0}', space=vmem, size = 0x400, scoped, tag = 'output window, operand 0, single buffered']
    #allocation16 [shape = 'u8[512]{0}', space=vmem, size = 0x400, scoped, tag = 'output window, operand 1, single buffered']
    #allocation17 [shape = 's32[1]{0}', space=sflag, size = 0x4, scoped, tag = 'scoped memory for tpu_custom_call.1']
    %26 = vsyncpa [#allocation5], 0
    %27 = vsyncpa [#allocation8], 0
    %28 = vsyncpa [#allocation11], 0
    %29 = vsyncpa [#allocation14], 0
    %30 = vsyncpa [#allocation6], 0
    %31 = vsyncpa [#allocation17], 0
    // Predicated region
    $region2: #{tpu_custom_call.1} parent=1 // pred_check
      _
    $region3: #{tpu_custom_call.1} parent=1 // pred_check_branch
      %33 = sbr.rel (0) target = $region5
    $region4: #{tpu_custom_call.1} parent=1 // pred_region
      _
    $region5: #{tpu_custom_call.1} parent=1 // pred_fallthru
      _
    // Predicated region
    $region6: #{tpu_custom_call.1} parent=1 // pred_check
      _
    $region7: #{tpu_custom_call.1} parent=1 // pred_check_branch
      %35 = sbr.rel (0) target = $region9
    $region8: #{tpu_custom_call.1} parent=1 // pred_region
      _
    $region9: #{tpu_custom_call.1} parent=1 // pred_fallthru
      _
    // Predicated region
    $region10: #{tpu_custom_call.1} parent=1 // pred_check
      _
    $region11: #{tpu_custom_call.1} parent=1 // pred_check_branch
      %37 = sbr.rel (0) target = $region13
    $region12: #{tpu_custom_call.1} parent=1 // pred_region
      %s39 = ssub.s32 384, 384
      %40 = vsyncadd [#allocation5], %s39
      %s41 = sshll.u32 [#allocation4], 4
      %s42 = int_to_ptr.vmem [resolvable:$true] %s41
      %47 = dma.hbm_to_vmem [thread:$0]  %s2, 384, %s42, [#allocation5], 128, 128, 8
    $region13: #{tpu_custom_call.1} parent=1 // pred_fallthru
      _
    // Predicated region
    $region14: #{tpu_custom_call.1} parent=1 // pred_check
      _
    $region15: #{tpu_custom_call.1} parent=1 // pred_check_branch
      %49 = sbr.rel (0) target = $region17
    $region16: #{tpu_custom_call.1} parent=1 // pred_region
      _
    $region17: #{tpu_custom_call.1} parent=1 // pred_fallthru
      _
    // Predicated region
    $region18: #{tpu_custom_call.1} parent=1 // pred_check
      _
    $region19: #{tpu_custom_call.1} parent=1 // pred_check_branch
      %51 = sbr.rel (0) target = $region21
    $region20: #{tpu_custom_call.1} parent=1 // pred_region
      %s53 = ssub.s32 512, 512
      %54 = vsyncadd [#allocation8], %s53
      %s55 = sshll.u32 [#allocation7], 4
      %s56 = int_to_ptr.vmem [resolvable:$true] %s55
      %61 = dma.hbm_to_vmem [thread:$0]  %s4, 512, %s56, [#allocation8], 128, 128, 8
    $region21: #{tpu_custom_call.1} parent=1 // pred_fallthru
      _
    // Predicated region
    $region22: #{tpu_custom_call.1} parent=1 // pred_check
      _
    $region23: #{tpu_custom_call.1} parent=1 // pred_check_branch
      %63 = sbr.rel (0) target = $region25
    $region24: #{tpu_custom_call.1} parent=1 // pred_region
      %s65 = ssub.s32 512, 512
      %66 = vsyncadd [#allocation8], %s65
      %s67 = sshll.u32 [#allocation9], 4
      %s68 = int_to_ptr.vmem [resolvable:$true] %s67
      %73 = dma.hbm_to_vmem [thread:$0]  %s5, 512, %s68, [#allocation8], 128, 128, 8
    $region25: #{tpu_custom_call.1} parent=1 // pred_fallthru
      _
    // Predicated region
    $region26: #{tpu_custom_call.1} parent=1 // pred_check
      _
    $region27: #{tpu_custom_call.1} parent=1 // pred_check_branch
      %75 = sbr.rel (0) target = $region29
    $region28: #{tpu_custom_call.1} parent=1 // pred_region
      %s77 = ssub.s32 512, 512
      %78 = vsyncadd [#allocation11], %s77
      %s79 = sshll.u32 [#allocation10], 4
      %s80 = int_to_ptr.vmem [resolvable:$true] %s79
      %85 = dma.hbm_to_vmem [thread:$0]  %s6, 512, %s80, [#allocation11], 128, 128, 8
    $region29: #{tpu_custom_call.1} parent=1 // pred_fallthru
      _
    // Predicated region
    $region30: #{tpu_custom_call.1} parent=1 // pred_check
      _
    $region31: #{tpu_custom_call.1} parent=1 // pred_check_branch
      %87 = sbr.rel (0) target = $region33
    $region32: #{tpu_custom_call.1} parent=1 // pred_region
      _
    $region33: #{tpu_custom_call.1} parent=1 // pred_fallthru
      _
    // Predicated region
    $region34: #{tpu_custom_call.1} parent=1 // pred_check
      _
    $region35: #{tpu_custom_call.1} parent=1 // pred_check_branch
      %89 = sbr.rel (0) target = $region37
    $region36: #{tpu_custom_call.1} parent=1 // pred_region
      _
    $region37: #{tpu_custom_call.1} parent=1 // pred_fallthru
      _
    // Predicated region
    $region38: #{tpu_custom_call.1} parent=1 // pred_check
      _
    $region39: #{tpu_custom_call.1} parent=1 // pred_check_branch
      %91 = sbr.rel (0) target = $region41
    $region40: #{tpu_custom_call.1} parent=1 // pred_region
      _
    $region41: #{tpu_custom_call.1} parent=1 // pred_fallthru
      _
    // Predicated region
    $region42: #{tpu_custom_call.1} parent=1 // pred_check
      _
    $region43: #{tpu_custom_call.1} parent=1 // pred_check_branch
      %93 = sbr.rel (0) target = $region45
    $region44: #{tpu_custom_call.1} parent=1 // pred_region
      %s95 = ssub.s32 512, 512
      %96 = vsyncadd [#allocation11], %s95
      %s97 = sshll.u32 [#allocation12], 4
      %s98 = int_to_ptr.vmem [resolvable:$true] %s97
      %103 = dma.hbm_to_vmem [thread:$0]  %s10, 512, %s98, [#allocation11], 128, 128, 8
    $region45: #{tpu_custom_call.1} parent=1 // pred_fallthru
      _
    // Predicated region
    $region46: #{tpu_custom_call.1} parent=1 // pred_check
      _
    $region47: #{tpu_custom_call.1} parent=1 // pred_check_branch
      %105 = sbr.rel (0) target = $region49
    $region48: #{tpu_custom_call.1} parent=1 // pred_region
      %s107 = ssub.s32 384, 384
      %108 = vsyncadd [#allocation14], %s107
      %s109 = sshll.u32 [#allocation13], 4
      %s110 = int_to_ptr.vmem [resolvable:$true] %s109
      %115 = dma.hbm_to_vmem [thread:$0]  %s11, 384, %s110, [#allocation14], 128, 128, 8
    $region49: #{tpu_custom_call.1} parent=1 // pred_fallthru
      _
    // Predicated region
    $region50: #{tpu_custom_call.1} parent=1 // pred_check
      _
    $region51: #{tpu_custom_call.1} parent=1 // pred_check_branch
      %117 = sbr.rel (0) target = $region53
    $region52: #{tpu_custom_call.1} parent=1 // pred_region
      _
    $region53: #{tpu_custom_call.1} parent=1 // pred_fallthru
      _
    // Predicated region
    $region54: #{tpu_custom_call.1} parent=1 // pred_check
      _
    $region55: #{tpu_custom_call.1} parent=1 // pred_check_branch
      %119 = sbr.rel (0) target = $region57
    $region56: #{tpu_custom_call.1} parent=1 // pred_region
      _
    $region57: #{tpu_custom_call.1} parent=1 // pred_fallthru
      _
    // Predicated region
    $region58: #{tpu_custom_call.1} parent=1 // pred_check
      _
    $region59: #{tpu_custom_call.1} parent=1 // pred_check_branch
      %121 = sbr.rel (0) target = $region61
    $region60: #{tpu_custom_call.1} parent=1 // pred_region
      _
    $region61: #{tpu_custom_call.1} parent=1 // pred_fallthru
      _
    // Predicated region
    $region62: #{tpu_custom_call.1} parent=1 // pred_check
      _
    $region63: #{tpu_custom_call.1} parent=1 // pred_check_branch
      %123 = sbr.rel (0) target = $region65
    $region64: #{tpu_custom_call.1} parent=1 // pred_region
      _
    $region65: #{tpu_custom_call.1} parent=1 // pred_fallthru
      _
    // Predicated region
    $region66: #{tpu_custom_call.1} parent=1 // pred_check
      _
    $region67: #{tpu_custom_call.1} parent=1 // pred_check_branch
      %125 = sbr.rel (0) target = $region69
    $region68: #{tpu_custom_call.1} parent=1 // pred_region
      _
    $region69: #{tpu_custom_call.1} parent=1 // pred_fallthru
      _
    // Predicated region
    $region70: #{tpu_custom_call.1} parent=1 // pred_check
      _
    $region71: #{tpu_custom_call.1} parent=1 // pred_check_branch
      %127 = sbr.rel (0) target = $region73
    $region72: #{tpu_custom_call.1} parent=1 // pred_region
      %128 = dma.done [#allocation5], 384
    $region73: #{tpu_custom_call.1} parent=1 // pred_fallthru
      _
    // Predicated region
    $region74: #{tpu_custom_call.1} parent=1 // pred_check
      _
    $region75: #{tpu_custom_call.1} parent=1 // pred_check_branch
      %130 = sbr.rel (0) target = $region77
    $region76: #{tpu_custom_call.1} parent=1 // pred_region
      %131 = dma.done [#allocation8], 512
    $region77: #{tpu_custom_call.1} parent=1 // pred_fallthru
      _
    // Predicated region
    $region78: #{tpu_custom_call.1} parent=1 // pred_check
      _
    $region79: #{tpu_custom_call.1} parent=1 // pred_check_branch
      %133 = sbr.rel (0) target = $region81
    $region80: #{tpu_custom_call.1} parent=1 // pred_region
      %134 = dma.done [#allocation8], 512
    $region81: #{tpu_custom_call.1} parent=1 // pred_fallthru
      _
    // Predicated region
    $region82: #{tpu_custom_call.1} parent=1 // pred_check
      _
    $region83: #{tpu_custom_call.1} parent=1 // pred_check_branch
      %136 = sbr.rel (0) target = $region85
    $region84: #{tpu_custom_call.1} parent=1 // pred_region
      %137 = dma.done [#allocation11], 512
    $region85: #{tpu_custom_call.1} parent=1 // pred_fallthru
      _
    // Predicated region
    $region86: #{tpu_custom_call.1} parent=1 // pred_check
      _
    $region87: #{tpu_custom_call.1} parent=1 // pred_check_branch
      %139 = sbr.rel (0) target = $region89
    $region88: #{tpu_custom_call.1} parent=1 // pred_region
      %140 = dma.done [#allocation11], 512
    $region89: #{tpu_custom_call.1} parent=1 // pred_fallthru
      _
    // Predicated region
    $region90: #{tpu_custom_call.1} parent=1 // pred_check
      _
    $region91: #{tpu_custom_call.1} parent=1 // pred_check_branch
      %142 = sbr.rel (0) target = $region93
    $region92: #{tpu_custom_call.1} parent=1 // pred_region
      %143 = dma.done [#allocation14], 384
    $region93: #{tpu_custom_call.1} parent=1 // pred_fallthru
      _
    %v144 = vld [vmem:[%s0] sm:$0xff]
    %v145 = vld [vmem:[%s0 + $0x8] sm:$0xff]
    %v146 = vld [vmem:[%s0 + $0x10] sm:$0xff]
    %v147 = vld [vmem:[%s0 + $0x18] sm:$0xff]
    %v148 = vld [vmem:[#allocation4] sm:$0xff]
    %v149 = vld [vmem:[#allocation4 + $0x8] sm:$0xff]
    %v150 = vld [vmem:[#allocation4 + $0x10] sm:$0xff]
    %v151 = vld [vmem:[%s3] sm:$0x1]
    %v153 = vlaneseq
    %v154 = vshrl.u32 %v153, 7
    %v155 = vsub.s32 0, %v154
    %v156 = vrot.slane %v151, %v155
    %vm158 = vcmask 195584
    %v160 = vsel %vm158, %v144, 0
    %v163 = vsel %vm158, %v145, 0
    %v166 = vsel %vm158, %v146, 0
    %v169 = vsel %vm158, %v147, 0
    %171 = vmatprep.subr.mxu0 0.0
    %172 = vmatpush1.msra.mxu0 0.0
    %173 = vmatprep.subr.mxu0 0.0
    %174 = vmatpush1.msra.mxu0 0.0
    %175 = vmatprep.subr.mxu0 0.0
    %176 = vmatpush1.msra.mxu0 0.0
    %177 = vmatprep.subr.mxu0 0.0
    %178 = vmatpush1.msra.mxu0 0.0
    %179 = vmatprep.subr.mxu0 0.0
    %180 = vmatpush1.msra.mxu0 0.0
    %181 = vmatprep.subr.mxu0 0.0
    %182 = vmatpush1.msra.mxu0 0.0
    %183 = vmatprep.subr.mxu0 0.0
    %184 = vmatpush1.msra.mxu0 0.0
    %185 = vmatprep.subr.mxu0 0.0
    %186 = vmatpush1.msra.mxu0 0.0
    %187 = vmatprep.subr.mxu0 0.0
    %188 = vmatpush1.msra.mxu0 0.0
    %189 = vmatprep.subr.mxu0 0.0
    %190 = vmatpush1.msra.mxu0 0.0
    %191 = vmatprep.subr.mxu0 0.0
    %192 = vmatpush1.msra.mxu0 0.0
    %193 = vmatprep.subr.mxu0 0.0
    %194 = vmatpush1.msra.mxu0 0.0
    %195 = vmatprep.subr.mxu0 0.0
    %196 = vmatpush1.msra.mxu0 0.0
    %197 = vmatprep.subr.mxu0 0.0
    %198 = vmatpush1.msra.mxu0 %v150
    %199 = vmatprep.subr.mxu0 0.0
    %200 = vmatpush1.msra.mxu0 %v149
    %201 = vmatprep.subr.mxu0 0.0
    %202 = vmatpush1.msra.mxu0 %v148
    %203 = vmatprep.subr.mxu0 0.0
    %204 = vmatpush2.msra.mxu0 0.0
    %205 = vmatprep.subr.mxu0 0.0
    %206 = vmatpush2.msra.mxu0 0.0
    %207 = vmatprep.subr.mxu0 0.0
    %208 = vmatpush2.msra.mxu0 0.0
    %209 = vmatprep.subr.mxu0 0.0
    %210 = vmatpush2.msra.mxu0 0.0
    %211 = vmatprep.subr.mxu0 0.0
    %212 = vmatpush2.msra.mxu0 0.0
    %213 = vmatprep.subr.mxu0 0.0
    %214 = vmatpush2.msra.mxu0 0.0
    %215 = vmatprep.subr.mxu0 0.0
    %216 = vmatpush2.msra.mxu0 0.0
    %217 = vmatprep.subr.mxu0 0.0
    %218 = vmatpush2.msra.mxu0 0.0
    %219 = vmatprep.subr.mxu0 0.0
    %220 = vmatpush2.msra.mxu0 0.0
    %221 = vmatprep.subr.mxu0 0.0
    %222 = vmatpush2.msra.mxu0 0.0
    %223 = vmatprep.subr.mxu0 0.0
    %224 = vmatpush2.msra.mxu0 0.0
    %225 = vmatprep.subr.mxu0 0.0
    %226 = vmatpush2.msra.mxu0 0.0
    %227 = vmatprep.subr.mxu0 0.0
    %228 = vmatpush2.msra.mxu0 0.0
    %229 = vmatprep.subr.mxu0 0.0
    %230 = vmatpush2.msra.mxu0 0.0
    %231 = vmatprep.subr.mxu0 0.0
    %232 = vmatpush2.msra.mxu0 0.0
    %233 = vmatprep.subr.mxu0 0.0
    %234 = vmatpush2.msra.mxu0 0.0
    %235 = vmatprep.mubr.f32.mxu0 0.0
    %236 = vmatmul.mubr.f32.gmra.mxu0 %v160
    %v237 = vpop.f32.mrf.mxu0
    %v238 = vadd.f32 %v156, %v237
    %v239 = vpop.f32.mrf.mxu0
    %240 = vmatprep.mubr.f32.mxu0 0.0
    %241 = vmatmul.mubr.f32.gmra.mxu0 %v163
    %v242 = vpop.f32.mrf.mxu0
    %v243 = vadd.f32 %v156, %v242
    %v244 = vpop.f32.mrf.mxu0
    %245 = vmatprep.mubr.f32.mxu0 0.0
    %246 = vmatmul.mubr.f32.gmra.mxu0 %v166
    %v247 = vpop.f32.mrf.mxu0
    %v248 = vadd.f32 %v156, %v247
    %v249 = vpop.f32.mrf.mxu0
    %250 = vmatprep.mubr.f32.mxu0 0.0
    %251 = vmatmul.mubr.f32.gmra.mxu0 %v169
    %v252 = vpop.f32.mrf.mxu0
    %v253 = vadd.f32 %v156, %v252
    %v254 = vpop.f32.mrf.mxu0
    %255 = vdwg.mxu0
    %vm256 = vcmask 257024
    %257 = vst.msk [vmem:[#allocation2] sm:$0xf] %vm256, 0.0
    %v258 = vld [vmem:[#allocation7] sm:$0xff]
    %v259 = vld [vmem:[#allocation7 + $0x8] sm:$0xff]
    %v260 = vld [vmem:[#allocation7 + $0x10] sm:$0xff]
    %v261 = vld [vmem:[#allocation7 + $0x18] sm:$0xff]
    %v262 = vld [vmem:[%s7] sm:$0x1]
    %v264 = vlaneseq
    %v265 = vshrl.u32 %v264, 7
    %v266 = vsub.s32 0, %v265
    %v267 = vrot.slane %v262, %v266
    %vm269 = vcmask 261120
    %v271 = vsel %vm269, 0.0, 0
    %273 = vmatprep.subr.mxu0 0.0
    %274 = vmatpush1.msra.mxu0 0.0
    %275 = vmatprep.subr.mxu0 0.0
    %276 = vmatpush1.msra.mxu0 0.0
    %277 = vmatprep.subr.mxu0 0.0
    %278 = vmatpush1.msra.mxu0 0.0
    %279 = vmatprep.subr.mxu0 0.0
    %280 = vmatpush1.msra.mxu0 0.0
    %281 = vmatprep.subr.mxu0 0.0
    %282 = vmatpush1.msra.mxu0 0.0
    %283 = vmatprep.subr.mxu0 0.0
    %284 = vmatpush1.msra.mxu0 0.0
    %285 = vmatprep.subr.mxu0 0.0
    %286 = vmatpush1.msra.mxu0 0.0
    %287 = vmatprep.subr.mxu0 0.0
    %288 = vmatpush1.msra.mxu0 0.0
    %289 = vmatprep.subr.mxu0 0.0
    %290 = vmatpush1.msra.mxu0 0.0
    %291 = vmatprep.subr.mxu0 0.0
    %292 = vmatpush1.msra.mxu0 0.0
    %293 = vmatprep.subr.mxu0 0.0
    %294 = vmatpush1.msra.mxu0 0.0
    %295 = vmatprep.subr.mxu0 0.0
    %296 = vmatpush1.msra.mxu0 0.0
    %297 = vmatprep.subr.mxu0 0.0
    %298 = vmatpush1.msra.mxu0 %v261
    %299 = vmatprep.subr.mxu0 0.0
    %300 = vmatpush1.msra.mxu0 %v260
    %301 = vmatprep.subr.mxu0 0.0
    %302 = vmatpush1.msra.mxu0 %v259
    %303 = vmatprep.subr.mxu0 0.0
    %304 = vmatpush1.msra.mxu0 %v258
    %305 = vmatprep.subr.mxu0 0.0
    %306 = vmatpush2.msra.mxu0 0.0
    %307 = vmatprep.subr.mxu0 0.0
    %308 = vmatpush2.msra.mxu0 0.0
    %309 = vmatprep.subr.mxu0 0.0
    %310 = vmatpush2.msra.mxu0 0.0
    %311 = vmatprep.subr.mxu0 0.0
    %312 = vmatpush2.msra.mxu0 0.0
    %313 = vmatprep.subr.mxu0 0.0
    %314 = vmatpush2.msra.mxu0 0.0
    %315 = vmatprep.subr.mxu0 0.0
    %316 = vmatpush2.msra.mxu0 0.0
    %317 = vmatprep.subr.mxu0 0.0
    %318 = vmatpush2.msra.mxu0 0.0
    %319 = vmatprep.subr.mxu0 0.0
    %320 = vmatpush2.msra.mxu0 0.0
    %321 = vmatprep.subr.mxu0 0.0
    %322 = vmatpush2.msra.mxu0 0.0
    %323 = vmatprep.subr.mxu0 0.0
    %324 = vmatpush2.msra.mxu0 0.0
    %325 = vmatprep.subr.mxu0 0.0
    %326 = vmatpush2.msra.mxu0 0.0
    %327 = vmatprep.subr.mxu0 0.0
    %328 = vmatpush2.msra.mxu0 0.0
    %329 = vmatprep.subr.mxu0 0.0
    %330 = vmatpush2.msra.mxu0 0.0
    %331 = vmatprep.subr.mxu0 0.0
    %332 = vmatpush2.msra.mxu0 0.0
    %333 = vmatprep.subr.mxu0 0.0
    %334 = vmatpush2.msra.mxu0 0.0
    %335 = vmatprep.subr.mxu0 0.0
    %336 = vmatpush2.msra.mxu0 0.0
    %337 = vmatprep.mubr.f32.mxu0 0.0
    %338 = vmatmul.mubr.f32.gmra.mxu0 %v271
    %v339 = vpop.f32.mrf.mxu0
    %v340 = vadd.f32 %v267, %v339
    %v341 = vpop.f32.mrf.mxu0
    %342 = vdwg.mxu0
    %v343 = vld [vmem:[#allocation9] sm:$0xff]
    %v344 = vld [vmem:[#allocation9 + $0x8] sm:$0xff]
    %v345 = vld [vmem:[#allocation9 + $0x10] sm:$0xff]
    %v346 = vld [vmem:[#allocation9 + $0x18] sm:$0xff]
    %v347 = vld [vmem:[%s8] sm:$0x1]
    %v349 = vlaneseq
    %v350 = vshrl.u32 %v349, 7
    %v351 = vsub.s32 0, %v350
    %v352 = vrot.slane %v347, %v351
    %354 = vmatprep.subr.mxu0 0.0
    %355 = vmatpush1.msra.mxu0 0.0
    %356 = vmatprep.subr.mxu0 0.0
    %357 = vmatpush1.msra.mxu0 0.0
    %358 = vmatprep.subr.mxu0 0.0
    %359 = vmatpush1.msra.mxu0 0.0
    %360 = vmatprep.subr.mxu0 0.0
    %361 = vmatpush1.msra.mxu0 0.0
    %362 = vmatprep.subr.mxu0 0.0
    %363 = vmatpush1.msra.mxu0 0.0
    %364 = vmatprep.subr.mxu0 0.0
    %365 = vmatpush1.msra.mxu0 0.0
    %366 = vmatprep.subr.mxu0 0.0
    %367 = vmatpush1.msra.mxu0 0.0
    %368 = vmatprep.subr.mxu0 0.0
    %369 = vmatpush1.msra.mxu0 0.0
    %370 = vmatprep.subr.mxu0 0.0
    %371 = vmatpush1.msra.mxu0 0.0
    %372 = vmatprep.subr.mxu0 0.0
    %373 = vmatpush1.msra.mxu0 0.0
    %374 = vmatprep.subr.mxu0 0.0
    %375 = vmatpush1.msra.mxu0 0.0
    %376 = vmatprep.subr.mxu0 0.0
    %377 = vmatpush1.msra.mxu0 0.0
    %378 = vmatprep.subr.mxu0 0.0
    %379 = vmatpush1.msra.mxu0 %v346
    %380 = vmatprep.subr.mxu0 0.0
    %381 = vmatpush1.msra.mxu0 %v345
    %382 = vmatprep.subr.mxu0 0.0
    %383 = vmatpush1.msra.mxu0 %v344
    %384 = vmatprep.subr.mxu0 0.0
    %385 = vmatpush1.msra.mxu0 %v343
    %386 = vmatprep.subr.mxu0 0.0
    %387 = vmatpush2.msra.mxu0 0.0
    %388 = vmatprep.subr.mxu0 0.0
    %389 = vmatpush2.msra.mxu0 0.0
    %390 = vmatprep.subr.mxu0 0.0
    %391 = vmatpush2.msra.mxu0 0.0
    %392 = vmatprep.subr.mxu0 0.0
    %393 = vmatpush2.msra.mxu0 0.0
    %394 = vmatprep.subr.mxu0 0.0
    %395 = vmatpush2.msra.mxu0 0.0
    %396 = vmatprep.subr.mxu0 0.0
    %397 = vmatpush2.msra.mxu0 0.0
    %398 = vmatprep.subr.mxu0 0.0
    %399 = vmatpush2.msra.mxu0 0.0
    %400 = vmatprep.subr.mxu0 0.0
    %401 = vmatpush2.msra.mxu0 0.0
    %402 = vmatprep.subr.mxu0 0.0
    %403 = vmatpush2.msra.mxu0 0.0
    %404 = vmatprep.subr.mxu0 0.0
    %405 = vmatpush2.msra.mxu0 0.0
    %406 = vmatprep.subr.mxu0 0.0
    %407 = vmatpush2.msra.mxu0 0.0
    %408 = vmatprep.subr.mxu0 0.0
    %409 = vmatpush2.msra.mxu0 0.0
    %410 = vmatprep.subr.mxu0 0.0
    %411 = vmatpush2.msra.mxu0 0.0
    %412 = vmatprep.subr.mxu0 0.0
    %413 = vmatpush2.msra.mxu0 0.0
    %414 = vmatprep.subr.mxu0 0.0
    %415 = vmatpush2.msra.mxu0 0.0
    %416 = vmatprep.subr.mxu0 0.0
    %417 = vmatpush2.msra.mxu0 0.0
    %418 = vmatprep.mubr.f32.mxu0 0.0
    %419 = vmatmul.mubr.f32.gmra.mxu0 %v271
    %v420 = vpop.f32.mrf.mxu0
    %v421 = vadd.f32 %v352, %v420
    %v422 = vpop.f32.mrf.mxu0
    %423 = vdwg.mxu0
    %v424 = vld [vmem:[#allocation10] sm:$0xff]
    %v425 = vld [vmem:[#allocation10 + $0x8] sm:$0xff]
    %v426 = vld [vmem:[#allocation10 + $0x10] sm:$0xff]
    %v427 = vld [vmem:[#allocation10 + $0x18] sm:$0xff]
    %v428 = vld [vmem:[%s9] sm:$0x1]
    %v430 = vlaneseq
    %v431 = vshrl.u32 %v430, 7
    %v432 = vsub.s32 0, %v431
    %v433 = vrot.slane %v428, %v432
    %435 = vmatprep.subr.mxu0 0.0
    %436 = vmatpush1.msra.mxu0 0.0
    %437 = vmatprep.subr.mxu0 0.0
    %438 = vmatpush1.msra.mxu0 0.0
    %439 = vmatprep.subr.mxu0 0.0
    %440 = vmatpush1.msra.mxu0 0.0
    %441 = vmatprep.subr.mxu0 0.0
    %442 = vmatpush1.msra.mxu0 0.0
    %443 = vmatprep.subr.mxu0 0.0
    %444 = vmatpush1.msra.mxu0 0.0
    %445 = vmatprep.subr.mxu0 0.0
    %446 = vmatpush1.msra.mxu0 0.0
    %447 = vmatprep.subr.mxu0 0.0
    %448 = vmatpush1.msra.mxu0 0.0
    %449 = vmatprep.subr.mxu0 0.0
    %450 = vmatpush1.msra.mxu0 0.0
    %451 = vmatprep.subr.mxu0 0.0
    %452 = vmatpush1.msra.mxu0 0.0
    %453 = vmatprep.subr.mxu0 0.0
    %454 = vmatpush1.msra.mxu0 0.0
    %455 = vmatprep.subr.mxu0 0.0
    %456 = vmatpush1.msra.mxu0 0.0
    %457 = vmatprep.subr.mxu0 0.0
    %458 = vmatpush1.msra.mxu0 0.0
    %459 = vmatprep.subr.mxu0 0.0
    %460 = vmatpush1.msra.mxu0 %v427
    %461 = vmatprep.subr.mxu0 0.0
    %462 = vmatpush1.msra.mxu0 %v426
    %463 = vmatprep.subr.mxu0 0.0
    %464 = vmatpush1.msra.mxu0 %v425
    %465 = vmatprep.subr.mxu0 0.0
    %466 = vmatpush1.msra.mxu0 %v424
    %467 = vmatprep.subr.mxu0 0.0
    %468 = vmatpush2.msra.mxu0 0.0
    %469 = vmatprep.subr.mxu0 0.0
    %470 = vmatpush2.msra.mxu0 0.0
    %471 = vmatprep.subr.mxu0 0.0
    %472 = vmatpush2.msra.mxu0 0.0
    %473 = vmatprep.subr.mxu0 0.0
    %474 = vmatpush2.msra.mxu0 0.0
    %475 = vmatprep.subr.mxu0 0.0
    %476 = vmatpush2.msra.mxu0 0.0
    %477 = vmatprep.subr.mxu0 0.0
    %478 = vmatpush2.msra.mxu0 0.0
    %479 = vmatprep.subr.mxu0 0.0
    %480 = vmatpush2.msra.mxu0 0.0
    %481 = vmatprep.subr.mxu0 0.0
    %482 = vmatpush2.msra.mxu0 0.0
    %483 = vmatprep.subr.mxu0 0.0
    %484 = vmatpush2.msra.mxu0 0.0
    %485 = vmatprep.subr.mxu0 0.0
    %486 = vmatpush2.msra.mxu0 0.0
    %487 = vmatprep.subr.mxu0 0.0
    %488 = vmatpush2.msra.mxu0 0.0
    %489 = vmatprep.subr.mxu0 0.0
    %490 = vmatpush2.msra.mxu0 0.0
    %491 = vmatprep.subr.mxu0 0.0
    %492 = vmatpush2.msra.mxu0 0.0
    %493 = vmatprep.subr.mxu0 0.0
    %494 = vmatpush2.msra.mxu0 0.0
    %495 = vmatprep.subr.mxu0 0.0
    %496 = vmatpush2.msra.mxu0 0.0
    %497 = vmatprep.subr.mxu0 0.0
    %498 = vmatpush2.msra.mxu0 0.0
    %499 = vmatprep.mubr.f32.mxu0 0.0
    %500 = vmatmul.mubr.f32.gmra.mxu0 %v271
    %v501 = vpop.f32.mrf.mxu0
    %v502 = vadd.f32 %v433, %v501
    %v503 = vpop.f32.mrf.mxu0
    %504 = vdwg.mxu0
    %v505 = vadd.f32 %v238, %v340
    %v506 = vxor.u32 %v505, 2147483648
    %v507 = vmul.f32 %v506, 1.442695
    %v508 = vpow.pop %v507
    %v509 = vadd.f32 %v508, 1.0
    %v510 = vrcp.pop %v509
    %v511 = vmul.f32 1.0, %v510
    %513 = vrot.lane.b32.xlu0 %v421, 32
    %v514 = vpop.permute.xlu0 %513
    %v516 = vadd.f32 %v238, %v514
    %v517 = vxor.u32 %v516, 2147483648
    %v518 = vmul.f32 %v517, 1.442695
    %v519 = vpow.pop %v518
    %v520 = vadd.f32 %v519, 1.0
    %v521 = vrcp.pop %v520
    %v522 = vmul.f32 1.0, %v521
    %v523 = vmul.f32 %v511, %v502
    %525 = vrot.lane.b32.xlu0 %v523, 64
    %v526 = vpop.permute.xlu0 %525
    %v528 = vadd.f32 %v238, %v526
    %v529 = vtanh.pop %v528
    %v530 = vsub.f32 1.0, %v522
    %532 = vrot.lane.b32.xlu0 %v529, 96
    %v533 = vpop.permute.xlu0 %532
    %v535 = vmul.f32 %v530, %v533
    %v536 = vmul.f32 %v522, 0.0
    %v537 = vadd.f32 %v535, %v536
    %539 = vrot.lane.b32.xlu0 %v537, 96
    %v540 = vpop.permute.xlu0 %539
    %542 = vst.msk [vmem:[#allocation2 + $0x4] sm:$0xf] %vm256, %v540
    %v543 = vld [vmem:[#allocation7] sm:$0xff]
    %v544 = vld [vmem:[#allocation7 + $0x8] sm:$0xff]
    %v545 = vld [vmem:[#allocation7 + $0x10] sm:$0xff]
    %v546 = vld [vmem:[#allocation7 + $0x18] sm:$0xff]
    %v547 = vld [vmem:[%s7] sm:$0x1]
    %v549 = vlaneseq
    %v550 = vshrl.u32 %v549, 7
    %v551 = vsub.s32 0, %v550
    %v552 = vrot.slane %v547, %v551
    %v554 = vsel %vm269, %v540, 0
    %556 = vmatprep.subr.mxu0 0.0
    %557 = vmatpush1.msra.mxu0 0.0
    %558 = vmatprep.subr.mxu0 0.0
    %559 = vmatpush1.msra.mxu0 0.0
    %560 = vmatprep.subr.mxu0 0.0
    %561 = vmatpush1.msra.mxu0 0.0
    %562 = vmatprep.subr.mxu0 0.0
    %563 = vmatpush1.msra.mxu0 0.0
    %564 = vmatprep.subr.mxu0 0.0
    %565 = vmatpush1.msra.mxu0 0.0
    %566 = vmatprep.subr.mxu0 0.0
    %567 = vmatpush1.msra.mxu0 0.0
    %568 = vmatprep.subr.mxu0 0.0
    %569 = vmatpush1.msra.mxu0 0.0
    %570 = vmatprep.subr.mxu0 0.0
    %571 = vmatpush1.msra.mxu0 0.0
    %572 = vmatprep.subr.mxu0 0.0
    %573 = vmatpush1.msra.mxu0 0.0
    %574 = vmatprep.subr.mxu0 0.0
    %575 = vmatpush1.msra.mxu0 0.0
    %576 = vmatprep.subr.mxu0 0.0
    %577 = vmatpush1.msra.mxu0 0.0
    %578 = vmatprep.subr.mxu0 0.0
    %579 = vmatpush1.msra.mxu0 0.0
    %580 = vmatprep.subr.mxu0 0.0
    %581 = vmatpush1.msra.mxu0 %v546
    %582 = vmatprep.subr.mxu0 0.0
    %583 = vmatpush1.msra.mxu0 %v545
    %584 = vmatprep.subr.mxu0 0.0
    %585 = vmatpush1.msra.mxu0 %v544
    %586 = vmatprep.subr.mxu0 0.0
    %587 = vmatpush1.msra.mxu0 %v543
    %588 = vmatprep.subr.mxu0 0.0
    %589 = vmatpush2.msra.mxu0 0.0
    %590 = vmatprep.subr.mxu0 0.0
    %591 = vmatpush2.msra.mxu0 0.0
    %592 = vmatprep.subr.mxu0 0.0
    %593 = vmatpush2.msra.mxu0 0.0
    %594 = vmatprep.subr.mxu0 0.0
    %595 = vmatpush2.msra.mxu0 0.0
    %596 = vmatprep.subr.mxu0 0.0
    %597 = vmatpush2.msra.mxu0 0.0
    %598 = vmatprep.subr.mxu0 0.0
    %599 = vmatpush2.msra.mxu0 0.0
    %600 = vmatprep.subr.mxu0 0.0
    %601 = vmatpush2.msra.mxu0 0.0
    %602 = vmatprep.subr.mxu0 0.0
    %603 = vmatpush2.msra.mxu0 0.0
    %604 = vmatprep.subr.mxu0 0.0
    %605 = vmatpush2.msra.mxu0 0.0
    %606 = vmatprep.subr.mxu0 0.0
    %607 = vmatpush2.msra.mxu0 0.0
    %608 = vmatprep.subr.mxu0 0.0
    %609 = vmatpush2.msra.mxu0 0.0
    %610 = vmatprep.subr.mxu0 0.0
    %611 = vmatpush2.msra.mxu0 0.0
    %612 = vmatprep.subr.mxu0 0.0
    %613 = vmatpush2.msra.mxu0 0.0
    %614 = vmatprep.subr.mxu0 0.0
    %615 = vmatpush2.msra.mxu0 0.0
    %616 = vmatprep.subr.mxu0 0.0
    %617 = vmatpush2.msra.mxu0 0.0
    %618 = vmatprep.subr.mxu0 0.0
    %619 = vmatpush2.msra.mxu0 0.0
    %620 = vmatprep.mubr.f32.mxu0 0.0
    %621 = vmatmul.mubr.f32.gmra.mxu0 %v554
    %v622 = vpop.f32.mrf.mxu0
    %v623 = vadd.f32 %v552, %v622
    %v624 = vpop.f32.mrf.mxu0
    %625 = vdwg.mxu0
    %v626 = vld [vmem:[#allocation9] sm:$0xff]
    %v627 = vld [vmem:[#allocation9 + $0x8] sm:$0xff]
    %v628 = vld [vmem:[#allocation9 + $0x10] sm:$0xff]
    %v629 = vld [vmem:[#allocation9 + $0x18] sm:$0xff]
    %v630 = vld [vmem:[%s8] sm:$0x1]
    %v632 = vlaneseq
    %v633 = vshrl.u32 %v632, 7
    %v634 = vsub.s32 0, %v633
    %v635 = vrot.slane %v630, %v634
    %637 = vmatprep.subr.mxu0 0.0
    %638 = vmatpush1.msra.mxu0 0.0
    %639 = vmatprep.subr.mxu0 0.0
    %640 = vmatpush1.msra.mxu0 0.0
    %641 = vmatprep.subr.mxu0 0.0
    %642 = vmatpush1.msra.mxu0 0.0
    %643 = vmatprep.subr.mxu0 0.0
    %644 = vmatpush1.msra.mxu0 0.0
    %645 = vmatprep.subr.mxu0 0.0
    %646 = vmatpush1.msra.mxu0 0.0
    %647 = vmatprep.subr.mxu0 0.0
    %648 = vmatpush1.msra.mxu0 0.0
    %649 = vmatprep.subr.mxu0 0.0
    %650 = vmatpush1.msra.mxu0 0.0
    %651 = vmatprep.subr.mxu0 0.0
    %652 = vmatpush1.msra.mxu0 0.0
    %653 = vmatprep.subr.mxu0 0.0
    %654 = vmatpush1.msra.mxu0 0.0
    %655 = vmatprep.subr.mxu0 0.0
    %656 = vmatpush1.msra.mxu0 0.0
    %657 = vmatprep.subr.mxu0 0.0
    %658 = vmatpush1.msra.mxu0 0.0
    %659 = vmatprep.subr.mxu0 0.0
    %660 = vmatpush1.msra.mxu0 0.0
    %661 = vmatprep.subr.mxu0 0.0
    %662 = vmatpush1.msra.mxu0 %v629
    %663 = vmatprep.subr.mxu0 0.0
    %664 = vmatpush1.msra.mxu0 %v628
    %665 = vmatprep.subr.mxu0 0.0
    %666 = vmatpush1.msra.mxu0 %v627
    %667 = vmatprep.subr.mxu0 0.0
    %668 = vmatpush1.msra.mxu0 %v626
    %669 = vmatprep.subr.mxu0 0.0
    %670 = vmatpush2.msra.mxu0 0.0
    %671 = vmatprep.subr.mxu0 0.0
    %672 = vmatpush2.msra.mxu0 0.0
    %673 = vmatprep.subr.mxu0 0.0
    %674 = vmatpush2.msra.mxu0 0.0
    %675 = vmatprep.subr.mxu0 0.0
    %676 = vmatpush2.msra.mxu0 0.0
    %677 = vmatprep.subr.mxu0 0.0
    %678 = vmatpush2.msra.mxu0 0.0
    %679 = vmatprep.subr.mxu0 0.0
    %680 = vmatpush2.msra.mxu0 0.0
    %681 = vmatprep.subr.mxu0 0.0
    %682 = vmatpush2.msra.mxu0 0.0
    %683 = vmatprep.subr.mxu0 0.0
    %684 = vmatpush2.msra.mxu0 0.0
    %685 = vmatprep.subr.mxu0 0.0
    %686 = vmatpush2.msra.mxu0 0.0
    %687 = vmatprep.subr.mxu0 0.0
    %688 = vmatpush2.msra.mxu0 0.0
    %689 = vmatprep.subr.mxu0 0.0
    %690 = vmatpush2.msra.mxu0 0.0
    %691 = vmatprep.subr.mxu0 0.0
    %692 = vmatpush2.msra.mxu0 0.0
    %693 = vmatprep.subr.mxu0 0.0
    %694 = vmatpush2.msra.mxu0 0.0
    %695 = vmatprep.subr.mxu0 0.0
    %696 = vmatpush2.msra.mxu0 0.0
    %697 = vmatprep.subr.mxu0 0.0
    %698 = vmatpush2.msra.mxu0 0.0
    %699 = vmatprep.subr.mxu0 0.0
    %700 = vmatpush2.msra.mxu0 0.0
    %701 = vmatprep.mubr.f32.mxu0 0.0
    %702 = vmatmul.mubr.f32.gmra.mxu0 %v554
    %v703 = vpop.f32.mrf.mxu0
    %v704 = vadd.f32 %v635, %v703
    %v705 = vpop.f32.mrf.mxu0
    %706 = vdwg.mxu0
    %v707 = vld [vmem:[#allocation10] sm:$0xff]
    %v708 = vld [vmem:[#allocation10 + $0x8] sm:$0xff]
    %v709 = vld [vmem:[#allocation10 + $0x10] sm:$0xff]
    %v710 = vld [vmem:[#allocation10 + $0x18] sm:$0xff]
    %v711 = vld [vmem:[%s9] sm:$0x1]
    %v713 = vlaneseq
    %v714 = vshrl.u32 %v713, 7
    %v715 = vsub.s32 0, %v714
    %v716 = vrot.slane %v711, %v715
    %718 = vmatprep.subr.mxu0 0.0
    %719 = vmatpush1.msra.mxu0 0.0
    %720 = vmatprep.subr.mxu0 0.0
    %721 = vmatpush1.msra.mxu0 0.0
    %722 = vmatprep.subr.mxu0 0.0
    %723 = vmatpush1.msra.mxu0 0.0
    %724 = vmatprep.subr.mxu0 0.0
    %725 = vmatpush1.msra.mxu0 0.0
    %726 = vmatprep.subr.mxu0 0.0
    %727 = vmatpush1.msra.mxu0 0.0
    %728 = vmatprep.subr.mxu0 0.0
    %729 = vmatpush1.msra.mxu0 0.0
    %730 = vmatprep.subr.mxu0 0.0
    %731 = vmatpush1.msra.mxu0 0.0
    %732 = vmatprep.subr.mxu0 0.0
    %733 = vmatpush1.msra.mxu0 0.0
    %734 = vmatprep.subr.mxu0 0.0
    %735 = vmatpush1.msra.mxu0 0.0
    %736 = vmatprep.subr.mxu0 0.0
    %737 = vmatpush1.msra.mxu0 0.0
    %738 = vmatprep.subr.mxu0 0.0
    %739 = vmatpush1.msra.mxu0 0.0
    %740 = vmatprep.subr.mxu0 0.0
    %741 = vmatpush1.msra.mxu0 0.0
    %742 = vmatprep.subr.mxu0 0.0
    %743 = vmatpush1.msra.mxu0 %v710
    %744 = vmatprep.subr.mxu0 0.0
    %745 = vmatpush1.msra.mxu0 %v709
    %746 = vmatprep.subr.mxu0 0.0
    %747 = vmatpush1.msra.mxu0 %v708
    %748 = vmatprep.subr.mxu0 0.0
    %749 = vmatpush1.msra.mxu0 %v707
    %750 = vmatprep.subr.mxu0 0.0
    %751 = vmatpush2.msra.mxu0 0.0
    %752 = vmatprep.subr.mxu0 0.0
    %753 = vmatpush2.msra.mxu0 0.0
    %754 = vmatprep.subr.mxu0 0.0
    %755 = vmatpush2.msra.mxu0 0.0
    %756 = vmatprep.subr.mxu0 0.0
    %757 = vmatpush2.msra.mxu0 0.0
    %758 = vmatprep.subr.mxu0 0.0
    %759 = vmatpush2.msra.mxu0 0.0
    %760 = vmatprep.subr.mxu0 0.0
    %761 = vmatpush2.msra.mxu0 0.0
    %762 = vmatprep.subr.mxu0 0.0
    %763 = vmatpush2.msra.mxu0 0.0
    %764 = vmatprep.subr.mxu0 0.0
    %765 = vmatpush2.msra.mxu0 0.0
    %766 = vmatprep.subr.mxu0 0.0
    %767 = vmatpush2.msra.mxu0 0.0
    %768 = vmatprep.subr.mxu0 0.0
    %769 = vmatpush2.msra.mxu0 0.0
    %770 = vmatprep.subr.mxu0 0.0
    %771 = vmatpush2.msra.mxu0 0.0
    %772 = vmatprep.subr.mxu0 0.0
    %773 = vmatpush2.msra.mxu0 0.0
    %774 = vmatprep.subr.mxu0 0.0
    %775 = vmatpush2.msra.mxu0 0.0
    %776 = vmatprep.subr.mxu0 0.0
    %777 = vmatpush2.msra.mxu0 0.0
    %778 = vmatprep.subr.mxu0 0.0
    %779 = vmatpush2.msra.mxu0 0.0
    %780 = vmatprep.subr.mxu0 0.0
    %781 = vmatpush2.msra.mxu0 0.0
    %782 = vmatprep.mubr.f32.mxu0 0.0
    %783 = vmatmul.mubr.f32.gmra.mxu0 %v554
    %v784 = vpop.f32.mrf.mxu0
    %v785 = vadd.f32 %v716, %v784
    %v786 = vpop.f32.mrf.mxu0
    %787 = vdwg.mxu0
    %v789 = vrot.slane %v623, 4
    %v791 = vadd.f32 %v238, %v789
    %v792 = vxor.u32 %v791, 2147483648
    %v793 = vmul.f32 %v792, 1.442695
    %v794 = vpow.pop %v793
    %v795 = vadd.f32 %v794, 1.0
    %v796 = vrcp.pop %v795
    %v797 = vmul.f32 1.0, %v796
    %v799 = vrot.slane %v704, 4
    %800 = vrot.lane.b32.xlu0 %v799, 32
    %v801 = vpop.permute.xlu0 %800
    %v803 = vadd.f32 %v238, %v801
    %v804 = vxor.u32 %v803, 2147483648
    %v805 = vmul.f32 %v804, 1.442695
    %v806 = vpow.pop %v805
    %v807 = vadd.f32 %v806, 1.0
    %v808 = vrcp.pop %v807
    %v809 = vmul.f32 1.0, %v808
    %v811 = vrot.slane %v785, 4
    %v813 = vmul.f32 %v797, %v811
    %815 = vrot.lane.b32.xlu0 %v813, 64
    %v816 = vpop.permute.xlu0 %815
    %v818 = vadd.f32 %v238, %v816
    %v819 = vtanh.pop %v818
    %v820 = vsub.f32 1.0, %v809
    %822 = vrot.lane.b32.xlu0 %v819, 96
    %v823 = vpop.permute.xlu0 %822
    %v825 = vmul.f32 %v820, %v823
    %v826 = vrot.slane %v537, 4
    %v828 = vmul.f32 %v809, %v826
    %v829 = vadd.f32 %v825, %v828
    %831 = vrot.lane.b32.xlu0 %v829, 96
    %v832 = vpop.permute.xlu0 %831
    %vm834 = vcmask 261124
    %835 = vst.msk [vmem:[#allocation2 + $0x4] sm:$0xf0] %vm834, %v832
    %v836 = vld [vmem:[#allocation7] sm:$0xff]
    %v837 = vld [vmem:[#allocation7 + $0x8] sm:$0xff]
    %v838 = vld [vmem:[#allocation7 + $0x10] sm:$0xff]
    %v839 = vld [vmem:[#allocation7 + $0x18] sm:$0xff]
    %v840 = vld [vmem:[%s7] sm:$0x1]
    %v842 = vlaneseq
    %v843 = vshrl.u32 %v842, 7
    %v844 = vsub.s32 0, %v843
    %v845 = vrot.slane %v840, %v844
    %v847 = vrot.slane %v829, 4
    %848 = vrot.lane.b32.xlu0 %v847, 96
    %v849 = vpop.permute.xlu0 %848
    %v850 = vsel %vm269, %v849, 0
    %852 = vmatprep.subr.mxu0 0.0
    %853 = vmatpush1.msra.mxu0 0.0
    %854 = vmatprep.subr.mxu0 0.0
    %855 = vmatpush1.msra.mxu0 0.0
    %856 = vmatprep.subr.mxu0 0.0
    %857 = vmatpush1.msra.mxu0 0.0
    %858 = vmatprep.subr.mxu0 0.0
    %859 = vmatpush1.msra.mxu0 0.0
    %860 = vmatprep.subr.mxu0 0.0
    %861 = vmatpush1.msra.mxu0 0.0
    %862 = vmatprep.subr.mxu0 0.0
    %863 = vmatpush1.msra.mxu0 0.0
    %864 = vmatprep.subr.mxu0 0.0
    %865 = vmatpush1.msra.mxu0 0.0
    %866 = vmatprep.subr.mxu0 0.0
    %867 = vmatpush1.msra.mxu0 0.0
    %868 = vmatprep.subr.mxu0 0.0
    %869 = vmatpush1.msra.mxu0 0.0
    %870 = vmatprep.subr.mxu0 0.0
    %871 = vmatpush1.msra.mxu0 0.0
    %872 = vmatprep.subr.mxu0 0.0
    %873 = vmatpush1.msra.mxu0 0.0
    %874 = vmatprep.subr.mxu0 0.0
    %875 = vmatpush1.msra.mxu0 0.0
    %876 = vmatprep.subr.mxu0 0.0
    %877 = vmatpush1.msra.mxu0 %v839
    %878 = vmatprep.subr.mxu0 0.0
    %879 = vmatpush1.msra.mxu0 %v838
    %880 = vmatprep.subr.mxu0 0.0
    %881 = vmatpush1.msra.mxu0 %v837
    %882 = vmatprep.subr.mxu0 0.0
    %883 = vmatpush1.msra.mxu0 %v836
    %884 = vmatprep.subr.mxu0 0.0
    %885 = vmatpush2.msra.mxu0 0.0
    %886 = vmatprep.subr.mxu0 0.0
    %887 = vmatpush2.msra.mxu0 0.0
    %888 = vmatprep.subr.mxu0 0.0
    %889 = vmatpush2.msra.mxu0 0.0
    %890 = vmatprep.subr.mxu0 0.0
    %891 = vmatpush2.msra.mxu0 0.0
    %892 = vmatprep.subr.mxu0 0.0
    %893 = vmatpush2.msra.mxu0 0.0
    %894 = vmatprep.subr.mxu0 0.0
    %895 = vmatpush2.msra.mxu0 0.0
    %896 = vmatprep.subr.mxu0 0.0
    %897 = vmatpush2.msra.mxu0 0.0
    %898 = vmatprep.subr.mxu0 0.0
    %899 = vmatpush2.msra.mxu0 0.0
    %900 = vmatprep.subr.mxu0 0.0
    %901 = vmatpush2.msra.mxu0 0.0
    %902 = vmatprep.subr.mxu0 0.0
    %903 = vmatpush2.msra.mxu0 0.0
    %904 = vmatprep.subr.mxu0 0.0
    %905 = vmatpush2.msra.mxu0 0.0
    %906 = vmatprep.subr.mxu0 0.0
    %907 = vmatpush2.msra.mxu0 0.0
    %908 = vmatprep.subr.mxu0 0.0
    %909 = vmatpush2.msra.mxu0 0.0
    %910 = vmatprep.subr.mxu0 0.0
    %911 = vmatpush2.msra.mxu0 0.0
    %912 = vmatprep.subr.mxu0 0.0
    %913 = vmatpush2.msra.mxu0 0.0
    %914 = vmatprep.subr.mxu0 0.0
    %915 = vmatpush2.msra.mxu0 0.0
    %916 = vmatprep.mubr.f32.mxu0 0.0
    %917 = vmatmul.mubr.f32.gmra.mxu0 %v850
    %v918 = vpop.f32.mrf.mxu0
    %v919 = vadd.f32 %v845, %v918
    %v920 = vpop.f32.mrf.mxu0
    %921 = vdwg.mxu0
    %v922 = vld [vmem:[#allocation9] sm:$0xff]
    %v923 = vld [vmem:[#allocation9 + $0x8] sm:$0xff]
    %v924 = vld [vmem:[#allocation9 + $0x10] sm:$0xff]
    %v925 = vld [vmem:[#allocation9 + $0x18] sm:$0xff]
    %v926 = vld [vmem:[%s8] sm:$0x1]
    %v928 = vlaneseq
    %v929 = vshrl.u32 %v928, 7
    %v930 = vsub.s32 0, %v929
    %v931 = vrot.slane %v926, %v930
    %933 = vmatprep.subr.mxu0 0.0
    %934 = vmatpush1.msra.mxu0 0.0
    %935 = vmatprep.subr.mxu0 0.0
    %936 = vmatpush1.msra.mxu0 0.0
    %937 = vmatprep.subr.mxu0 0.0
    %938 = vmatpush1.msra.mxu0 0.0
    %939 = vmatprep.subr.mxu0 0.0
    %940 = vmatpush1.msra.mxu0 0.0
    %941 = vmatprep.subr.mxu0 0.0
    %942 = vmatpush1.msra.mxu0 0.0
    %943 = vmatprep.subr.mxu0 0.0
    %944 = vmatpush1.msra.mxu0 0.0
    %945 = vmatprep.subr.mxu0 0.0
    %946 = vmatpush1.msra.mxu0 0.0
    %947 = vmatprep.subr.mxu0 0.0
    %948 = vmatpush1.msra.mxu0 0.0
    %949 = vmatprep.subr.mxu0 0.0
    %950 = vmatpush1.msra.mxu0 0.0
    %951 = vmatprep.subr.mxu0 0.0
    %952 = vmatpush1.msra.mxu0 0.0
    %953 = vmatprep.subr.mxu0 0.0
    %954 = vmatpush1.msra.mxu0 0.0
    %955 = vmatprep.subr.mxu0 0.0
    %956 = vmatpush1.msra.mxu0 0.0
    %957 = vmatprep.subr.mxu0 0.0
    %958 = vmatpush1.msra.mxu0 %v925
    %959 = vmatprep.subr.mxu0 0.0
    %960 = vmatpush1.msra.mxu0 %v924
    %961 = vmatprep.subr.mxu0 0.0
    %962 = vmatpush1.msra.mxu0 %v923
    %963 = vmatprep.subr.mxu0 0.0
    %964 = vmatpush1.msra.mxu0 %v922
    %965 = vmatprep.subr.mxu0 0.0
    %966 = vmatpush2.msra.mxu0 0.0
    %967 = vmatprep.subr.mxu0 0.0
    %968 = vmatpush2.msra.mxu0 0.0
    %969 = vmatprep.subr.mxu0 0.0
    %970 = vmatpush2.msra.mxu0 0.0
    %971 = vmatprep.subr.mxu0 0.0
    %972 = vmatpush2.msra.mxu0 0.0
    %973 = vmatprep.subr.mxu0 0.0
    %974 = vmatpush2.msra.mxu0 0.0
    %975 = vmatprep.subr.mxu0 0.0
    %976 = vmatpush2.msra.mxu0 0.0
    %977 = vmatprep.subr.mxu0 0.0
    %978 = vmatpush2.msra.mxu0 0.0
    %979 = vmatprep.subr.mxu0 0.0
    %980 = vmatpush2.msra.mxu0 0.0
    %981 = vmatprep.subr.mxu0 0.0
    %982 = vmatpush2.msra.mxu0 0.0
    %983 = vmatprep.subr.mxu0 0.0
    %984 = vmatpush2.msra.mxu0 0.0
    %985 = vmatprep.subr.mxu0 0.0
    %986 = vmatpush2.msra.mxu0 0.0
    %987 = vmatprep.subr.mxu0 0.0
    %988 = vmatpush2.msra.mxu0 0.0
    %989 = vmatprep.subr.mxu0 0.0
    %990 = vmatpush2.msra.mxu0 0.0
    %991 = vmatprep.subr.mxu0 0.0
    %992 = vmatpush2.msra.mxu0 0.0
    %993 = vmatprep.subr.mxu0 0.0
    %994 = vmatpush2.msra.mxu0 0.0
    %995 = vmatprep.subr.mxu0 0.0
    %996 = vmatpush2.msra.mxu0 0.0
    %997 = vmatprep.mubr.f32.mxu0 0.0
    %998 = vmatmul.mubr.f32.gmra.mxu0 %v850
    %v999 = vpop.f32.mrf.mxu0
    %v1000 = vadd.f32 %v931, %v999
    %v1001 = vpop.f32.mrf.mxu0
    %1002 = vdwg.mxu0
    %v1003 = vld [vmem:[#allocation10] sm:$0xff]
    %v1004 = vld [vmem:[#allocation10 + $0x8] sm:$0xff]
    %v1005 = vld [vmem:[#allocation10 + $0x10] sm:$0xff]
    %v1006 = vld [vmem:[#allocation10 + $0x18] sm:$0xff]
    %v1007 = vld [vmem:[%s9] sm:$0x1]
    %v1009 = vlaneseq
    %v1010 = vshrl.u32 %v1009, 7
    %v1011 = vsub.s32 0, %v1010
    %v1012 = vrot.slane %v1007, %v1011
    %1014 = vmatprep.subr.mxu0 0.0
    %1015 = vmatpush1.msra.mxu0 0.0
    %1016 = vmatprep.subr.mxu0 0.0
    %1017 = vmatpush1.msra.mxu0 0.0
    %1018 = vmatprep.subr.mxu0 0.0
    %1019 = vmatpush1.msra.mxu0 0.0
    %1020 = vmatprep.subr.mxu0 0.0
    %1021 = vmatpush1.msra.mxu0 0.0
    %1022 = vmatprep.subr.mxu0 0.0
    %1023 = vmatpush1.msra.mxu0 0.0
    %1024 = vmatprep.subr.mxu0 0.0
    %1025 = vmatpush1.msra.mxu0 0.0
    %1026 = vmatprep.subr.mxu0 0.0
    %1027 = vmatpush1.msra.mxu0 0.0
    %1028 = vmatprep.subr.mxu0 0.0
    %1029 = vmatpush1.msra.mxu0 0.0
    %1030 = vmatprep.subr.mxu0 0.0
    %1031 = vmatpush1.msra.mxu0 0.0
    %1032 = vmatprep.subr.mxu0 0.0
    %1033 = vmatpush1.msra.mxu0 0.0
    %1034 = vmatprep.subr.mxu0 0.0
    %1035 = vmatpush1.msra.mxu0 0.0
    %1036 = vmatprep.subr.mxu0 0.0
    %1037 = vmatpush1.msra.mxu0 0.0
    %1038 = vmatprep.subr.mxu0 0.0
    %1039 = vmatpush1.msra.mxu0 %v1006
    %1040 = vmatprep.subr.mxu0 0.0
    %1041 = vmatpush1.msra.mxu0 %v1005
    %1042 = vmatprep.subr.mxu0 0.0
    %1043 = vmatpush1.msra.mxu0 %v1004
    %1044 = vmatprep.subr.mxu0 0.0
    %1045 = vmatpush1.msra.mxu0 %v1003
    %1046 = vmatprep.subr.mxu0 0.0
    %1047 = vmatpush2.msra.mxu0 0.0
    %1048 = vmatprep.subr.mxu0 0.0
    %1049 = vmatpush2.msra.mxu0 0.0
    %1050 = vmatprep.subr.mxu0 0.0
    %1051 = vmatpush2.msra.mxu0 0.0
    %1052 = vmatprep.subr.mxu0 0.0
    %1053 = vmatpush2.msra.mxu0 0.0
    %1054 = vmatprep.subr.mxu0 0.0
    %1055 = vmatpush2.msra.mxu0 0.0
    %1056 = vmatprep.subr.mxu0 0.0
    %1057 = vmatpush2.msra.mxu0 0.0
    %1058 = vmatprep.subr.mxu0 0.0
    %1059 = vmatpush2.msra.mxu0 0.0
    %1060 = vmatprep.subr.mxu0 0.0
    %1061 = vmatpush2.msra.mxu0 0.0
    %1062 = vmatprep.subr.mxu0 0.0
    %1063 = vmatpush2.msra.mxu0 0.0
    %1064 = vmatprep.subr.mxu0 0.0
    %1065 = vmatpush2.msra.mxu0 0.0
    %1066 = vmatprep.subr.mxu0 0.0
    %1067 = vmatpush2.msra.mxu0 0.0
    %1068 = vmatprep.subr.mxu0 0.0
    %1069 = vmatpush2.msra.mxu0 0.0
    %1070 = vmatprep.subr.mxu0 0.0
    %1071 = vmatpush2.msra.mxu0 0.0
    %1072 = vmatprep.subr.mxu0 0.0
    %1073 = vmatpush2.msra.mxu0 0.0
    %1074 = vmatprep.subr.mxu0 0.0
    %1075 = vmatpush2.msra.mxu0 0.0
    %1076 = vmatprep.subr.mxu0 0.0
    %1077 = vmatpush2.msra.mxu0 0.0
    %1078 = vmatprep.mubr.f32.mxu0 0.0
    %1079 = vmatmul.mubr.f32.gmra.mxu0 %v850
    %v1080 = vpop.f32.mrf.mxu0
    %v1081 = vadd.f32 %v1012, %v1080
    %v1082 = vpop.f32.mrf.mxu0
    %1083 = vdwg.mxu0
    %v1084 = vadd.f32 %v243, %v919
    %v1085 = vxor.u32 %v1084, 2147483648
    %v1086 = vmul.f32 %v1085, 1.442695
    %v1087 = vpow.pop %v1086
    %v1088 = vadd.f32 %v1087, 1.0
    %v1089 = vrcp.pop %v1088
    %v1090 = vmul.f32 1.0, %v1089
    %1092 = vrot.lane.b32.xlu0 %v1000, 32
    %v1093 = vpop.permute.xlu0 %1092
    %v1095 = vadd.f32 %v243, %v1093
    %v1096 = vxor.u32 %v1095, 2147483648
    %v1097 = vmul.f32 %v1096, 1.442695
    %v1098 = vpow.pop %v1097
    %v1099 = vadd.f32 %v1098, 1.0
    %v1100 = vrcp.pop %v1099
    %v1101 = vmul.f32 1.0, %v1100
    %v1102 = vmul.f32 %v1090, %v1081
    %1104 = vrot.lane.b32.xlu0 %v1102, 64
    %v1105 = vpop.permute.xlu0 %1104
    %v1107 = vadd.f32 %v243, %v1105
    %v1108 = vtanh.pop %v1107
    %v1109 = vsub.f32 1.0, %v1101
    %1111 = vrot.lane.b32.xlu0 %v1108, 96
    %v1112 = vpop.permute.xlu0 %1111
    %v1114 = vmul.f32 %v1109, %v1112
    %v1116 = vmul.f32 %v1101, %v847
    %v1117 = vadd.f32 %v1114, %v1116
    %1119 = vrot.lane.b32.xlu0 %v1117, 96
    %v1120 = vpop.permute.xlu0 %1119
    %1122 = vst.msk [vmem:[#allocation2 + $0xc] sm:$0xf] %vm256, %v1120
    %v1123 = vld [vmem:[#allocation7] sm:$0xff]
    %v1124 = vld [vmem:[#allocation7 + $0x8] sm:$0xff]
    %v1125 = vld [vmem:[#allocation7 + $0x10] sm:$0xff]
    %v1126 = vld [vmem:[#allocation7 + $0x18] sm:$0xff]
    %v1127 = vld [vmem:[%s7] sm:$0x1]
    %v1129 = vlaneseq
    %v1130 = vshrl.u32 %v1129, 7
    %v1131 = vsub.s32 0, %v1130
    %v1132 = vrot.slane %v1127, %v1131
    %v1134 = vsel %vm269, %v1120, 0
    %1136 = vmatprep.subr.mxu0 0.0
    %1137 = vmatpush1.msra.mxu0 0.0
    %1138 = vmatprep.subr.mxu0 0.0
    %1139 = vmatpush1.msra.mxu0 0.0
    %1140 = vmatprep.subr.mxu0 0.0
    %1141 = vmatpush1.msra.mxu0 0.0
    %1142 = vmatprep.subr.mxu0 0.0
    %1143 = vmatpush1.msra.mxu0 0.0
    %1144 = vmatprep.subr.mxu0 0.0
    %1145 = vmatpush1.msra.mxu0 0.0
    %1146 = vmatprep.subr.mxu0 0.0
    %1147 = vmatpush1.msra.mxu0 0.0
    %1148 = vmatprep.subr.mxu0 0.0
    %1149 = vmatpush1.msra.mxu0 0.0
    %1150 = vmatprep.subr.mxu0 0.0
    %1151 = vmatpush1.msra.mxu0 0.0
    %1152 = vmatprep.subr.mxu0 0.0
    %1153 = vmatpush1.msra.mxu0 0.0
    %1154 = vmatprep.subr.mxu0 0.0
    %1155 = vmatpush1.msra.mxu0 0.0
    %1156 = vmatprep.subr.mxu0 0.0
    %1157 = vmatpush1.msra.mxu0 0.0
    %1158 = vmatprep.subr.mxu0 0.0
    %1159 = vmatpush1.msra.mxu0 0.0
    %1160 = vmatprep.subr.mxu0 0.0
    %1161 = vmatpush1.msra.mxu0 %v1126
    %1162 = vmatprep.subr.mxu0 0.0
    %1163 = vmatpush1.msra.mxu0 %v1125
    %1164 = vmatprep.subr.mxu0 0.0
    %1165 = vmatpush1.msra.mxu0 %v1124
    %1166 = vmatprep.subr.mxu0 0.0
    %1167 = vmatpush1.msra.mxu0 %v1123
    %1168 = vmatprep.subr.mxu0 0.0
    %1169 = vmatpush2.msra.mxu0 0.0
    %1170 = vmatprep.subr.mxu0 0.0
    %1171 = vmatpush2.msra.mxu0 0.0
    %1172 = vmatprep.subr.mxu0 0.0
    %1173 = vmatpush2.msra.mxu0 0.0
    %1174 = vmatprep.subr.mxu0 0.0
    %1175 = vmatpush2.msra.mxu0 0.0
    %1176 = vmatprep.subr.mxu0 0.0
    %1177 = vmatpush2.msra.mxu0 0.0
    %1178 = vmatprep.subr.mxu0 0.0
    %1179 = vmatpush2.msra.mxu0 0.0
    %1180 = vmatprep.subr.mxu0 0.0
    %1181 = vmatpush2.msra.mxu0 0.0
    %1182 = vmatprep.subr.mxu0 0.0
    %1183 = vmatpush2.msra.mxu0 0.0
    %1184 = vmatprep.subr.mxu0 0.0
    %1185 = vmatpush2.msra.mxu0 0.0
    %1186 = vmatprep.subr.mxu0 0.0
    %1187 = vmatpush2.msra.mxu0 0.0
    %1188 = vmatprep.subr.mxu0 0.0
    %1189 = vmatpush2.msra.mxu0 0.0
    %1190 = vmatprep.subr.mxu0 0.0
    %1191 = vmatpush2.msra.mxu0 0.0
    %1192 = vmatprep.subr.mxu0 0.0
    %1193 = vmatpush2.msra.mxu0 0.0
    %1194 = vmatprep.subr.mxu0 0.0
    %1195 = vmatpush2.msra.mxu0 0.0
    %1196 = vmatprep.subr.mxu0 0.0
    %1197 = vmatpush2.msra.mxu0 0.0
    %1198 = vmatprep.subr.mxu0 0.0
    %1199 = vmatpush2.msra.mxu0 0.0
    %1200 = vmatprep.mubr.f32.mxu0 0.0
    %1201 = vmatmul.mubr.f32.gmra.mxu0 %v1134
    %v1202 = vpop.f32.mrf.mxu0
    %v1203 = vadd.f32 %v1132, %v1202
    %v1204 = vpop.f32.mrf.mxu0
    %1205 = vdwg.mxu0
    %v1206 = vld [vmem:[#allocation9] sm:$0xff]
    %v1207 = vld [vmem:[#allocation9 + $0x8] sm:$0xff]
    %v1208 = vld [vmem:[#allocation9 + $0x10] sm:$0xff]
    %v1209 = vld [vmem:[#allocation9 + $0x18] sm:$0xff]
    %v1210 = vld [vmem:[%s8] sm:$0x1]
    %v1212 = vlaneseq
    %v1213 = vshrl.u32 %v1212, 7
    %v1214 = vsub.s32 0, %v1213
    %v1215 = vrot.slane %v1210, %v1214
    %1217 = vmatprep.subr.mxu0 0.0
    %1218 = vmatpush1.msra.mxu0 0.0
    %1219 = vmatprep.subr.mxu0 0.0
    %1220 = vmatpush1.msra.mxu0 0.0
    %1221 = vmatprep.subr.mxu0 0.0
    %1222 = vmatpush1.msra.mxu0 0.0
    %1223 = vmatprep.subr.mxu0 0.0
    %1224 = vmatpush1.msra.mxu0 0.0
    %1225 = vmatprep.subr.mxu0 0.0
    %1226 = vmatpush1.msra.mxu0 0.0
    %1227 = vmatprep.subr.mxu0 0.0
    %1228 = vmatpush1.msra.mxu0 0.0
    %1229 = vmatprep.subr.mxu0 0.0
    %1230 = vmatpush1.msra.mxu0 0.0
    %1231 = vmatprep.subr.mxu0 0.0
    %1232 = vmatpush1.msra.mxu0 0.0
    %1233 = vmatprep.subr.mxu0 0.0
    %1234 = vmatpush1.msra.mxu0 0.0
    %1235 = vmatprep.subr.mxu0 0.0
    %1236 = vmatpush1.msra.mxu0 0.0
    %1237 = vmatprep.subr.mxu0 0.0
    %1238 = vmatpush1.msra.mxu0 0.0
    %1239 = vmatprep.subr.mxu0 0.0
    %1240 = vmatpush1.msra.mxu0 0.0
    %1241 = vmatprep.subr.mxu0 0.0
    %1242 = vmatpush1.msra.mxu0 %v1209
    %1243 = vmatprep.subr.mxu0 0.0
    %1244 = vmatpush1.msra.mxu0 %v1208
    %1245 = vmatprep.subr.mxu0 0.0
    %1246 = vmatpush1.msra.mxu0 %v1207
    %1247 = vmatprep.subr.mxu0 0.0
    %1248 = vmatpush1.msra.mxu0 %v1206
    %1249 = vmatprep.subr.mxu0 0.0
    %1250 = vmatpush2.msra.mxu0 0.0
    %1251 = vmatprep.subr.mxu0 0.0
    %1252 = vmatpush2.msra.mxu0 0.0
    %1253 = vmatprep.subr.mxu0 0.0
    %1254 = vmatpush2.msra.mxu0 0.0
    %1255 = vmatprep.subr.mxu0 0.0
    %1256 = vmatpush2.msra.mxu0 0.0
    %1257 = vmatprep.subr.mxu0 0.0
    %1258 = vmatpush2.msra.mxu0 0.0
    %1259 = vmatprep.subr.mxu0 0.0
    %1260 = vmatpush2.msra.mxu0 0.0
    %1261 = vmatprep.subr.mxu0 0.0
    %1262 = vmatpush2.msra.mxu0 0.0
    %1263 = vmatprep.subr.mxu0 0.0
    %1264 = vmatpush2.msra.mxu0 0.0
    %1265 = vmatprep.subr.mxu0 0.0
    %1266 = vmatpush2.msra.mxu0 0.0
    %1267 = vmatprep.subr.mxu0 0.0
    %1268 = vmatpush2.msra.mxu0 0.0
    %1269 = vmatprep.subr.mxu0 0.0
    %1270 = vmatpush2.msra.mxu0 0.0
    %1271 = vmatprep.subr.mxu0 0.0
    %1272 = vmatpush2.msra.mxu0 0.0
    %1273 = vmatprep.subr.mxu0 0.0
    %1274 = vmatpush2.msra.mxu0 0.0
    %1275 = vmatprep.subr.mxu0 0.0
    %1276 = vmatpush2.msra.mxu0 0.0
    %1277 = vmatprep.subr.mxu0 0.0
    %1278 = vmatpush2.msra.mxu0 0.0
    %1279 = vmatprep.subr.mxu0 0.0
    %1280 = vmatpush2.msra.mxu0 0.0
    %1281 = vmatprep.mubr.f32.mxu0 0.0
    %1282 = vmatmul.mubr.f32.gmra.mxu0 %v1134
    %v1283 = vpop.f32.mrf.mxu0
    %v1284 = vadd.f32 %v1215, %v1283
    %v1285 = vpop.f32.mrf.mxu0
    %1286 = vdwg.mxu0
    %v1287 = vld [vmem:[#allocation10] sm:$0xff]
    %v1288 = vld [vmem:[#allocation10 + $0x8] sm:$0xff]
    %v1289 = vld [vmem:[#allocation10 + $0x10] sm:$0xff]
    %v1290 = vld [vmem:[#allocation10 + $0x18] sm:$0xff]
    %v1291 = vld [vmem:[%s9] sm:$0x1]
    %v1293 = vlaneseq
    %v1294 = vshrl.u32 %v1293, 7
    %v1295 = vsub.s32 0, %v1294
    %v1296 = vrot.slane %v1291, %v1295
    %1298 = vmatprep.subr.mxu0 0.0
    %1299 = vmatpush1.msra.mxu0 0.0
    %1300 = vmatprep.subr.mxu0 0.0
    %1301 = vmatpush1.msra.mxu0 0.0
    %1302 = vmatprep.subr.mxu0 0.0
    %1303 = vmatpush1.msra.mxu0 0.0
    %1304 = vmatprep.subr.mxu0 0.0
    %1305 = vmatpush1.msra.mxu0 0.0
    %1306 = vmatprep.subr.mxu0 0.0
    %1307 = vmatpush1.msra.mxu0 0.0
    %1308 = vmatprep.subr.mxu0 0.0
    %1309 = vmatpush1.msra.mxu0 0.0
    %1310 = vmatprep.subr.mxu0 0.0
    %1311 = vmatpush1.msra.mxu0 0.0
    %1312 = vmatprep.subr.mxu0 0.0
    %1313 = vmatpush1.msra.mxu0 0.0
    %1314 = vmatprep.subr.mxu0 0.0
    %1315 = vmatpush1.msra.mxu0 0.0
    %1316 = vmatprep.subr.mxu0 0.0
    %1317 = vmatpush1.msra.mxu0 0.0
    %1318 = vmatprep.subr.mxu0 0.0
    %1319 = vmatpush1.msra.mxu0 0.0
    %1320 = vmatprep.subr.mxu0 0.0
    %1321 = vmatpush1.msra.mxu0 0.0
    %1322 = vmatprep.subr.mxu0 0.0
    %1323 = vmatpush1.msra.mxu0 %v1290
    %1324 = vmatprep.subr.mxu0 0.0
    %1325 = vmatpush1.msra.mxu0 %v1289
    %1326 = vmatprep.subr.mxu0 0.0
    %1327 = vmatpush1.msra.mxu0 %v1288
    %1328 = vmatprep.subr.mxu0 0.0
    %1329 = vmatpush1.msra.mxu0 %v1287
    %1330 = vmatprep.subr.mxu0 0.0
    %1331 = vmatpush2.msra.mxu0 0.0
    %1332 = vmatprep.subr.mxu0 0.0
    %1333 = vmatpush2.msra.mxu0 0.0
    %1334 = vmatprep.subr.mxu0 0.0
    %1335 = vmatpush2.msra.mxu0 0.0
    %1336 = vmatprep.subr.mxu0 0.0
    %1337 = vmatpush2.msra.mxu0 0.0
    %1338 = vmatprep.subr.mxu0 0.0
    %1339 = vmatpush2.msra.mxu0 0.0
    %1340 = vmatprep.subr.mxu0 0.0
    %1341 = vmatpush2.msra.mxu0 0.0
    %1342 = vmatprep.subr.mxu0 0.0
    %1343 = vmatpush2.msra.mxu0 0.0
    %1344 = vmatprep.subr.mxu0 0.0
    %1345 = vmatpush2.msra.mxu0 0.0
    %1346 = vmatprep.subr.mxu0 0.0
    %1347 = vmatpush2.msra.mxu0 0.0
    %1348 = vmatprep.subr.mxu0 0.0
    %1349 = vmatpush2.msra.mxu0 0.0
    %1350 = vmatprep.subr.mxu0 0.0
    %1351 = vmatpush2.msra.mxu0 0.0
    %1352 = vmatprep.subr.mxu0 0.0
    %1353 = vmatpush2.msra.mxu0 0.0
    %1354 = vmatprep.subr.mxu0 0.0
    %1355 = vmatpush2.msra.mxu0 0.0
    %1356 = vmatprep.subr.mxu0 0.0
    %1357 = vmatpush2.msra.mxu0 0.0
    %1358 = vmatprep.subr.mxu0 0.0
    %1359 = vmatpush2.msra.mxu0 0.0
    %1360 = vmatprep.subr.mxu0 0.0
    %1361 = vmatpush2.msra.mxu0 0.0
    %1362 = vmatprep.mubr.f32.mxu0 0.0
    %1363 = vmatmul.mubr.f32.gmra.mxu0 %v1134
    %v1364 = vpop.f32.mrf.mxu0
    %v1365 = vadd.f32 %v1296, %v1364
    %v1366 = vpop.f32.mrf.mxu0
    %1367 = vdwg.mxu0
    %v1369 = vrot.slane %v1203, 4
    %v1371 = vadd.f32 %v243, %v1369
    %v1372 = vxor.u32 %v1371, 2147483648
    %v1373 = vmul.f32 %v1372, 1.442695
    %v1374 = vpow.pop %v1373
    %v1375 = vadd.f32 %v1374, 1.0
    %v1376 = vrcp.pop %v1375
    %v1377 = vmul.f32 1.0, %v1376
    %v1379 = vrot.slane %v1284, 4
    %1380 = vrot.lane.b32.xlu0 %v1379, 32
    %v1381 = vpop.permute.xlu0 %1380
    %v1383 = vadd.f32 %v243, %v1381
    %v1384 = vxor.u32 %v1383, 2147483648
    %v1385 = vmul.f32 %v1384, 1.442695
    %v1386 = vpow.pop %v1385
    %v1387 = vadd.f32 %v1386, 1.0
    %v1388 = vrcp.pop %v1387
    %v1389 = vmul.f32 1.0, %v1388
    %v1391 = vrot.slane %v1365, 4
    %v1393 = vmul.f32 %v1377, %v1391
    %1395 = vrot.lane.b32.xlu0 %v1393, 64
    %v1396 = vpop.permute.xlu0 %1395
    %v1398 = vadd.f32 %v243, %v1396
    %v1399 = vtanh.pop %v1398
    %v1400 = vsub.f32 1.0, %v1389
    %1402 = vrot.lane.b32.xlu0 %v1399, 96
    %v1403 = vpop.permute.xlu0 %1402
    %v1405 = vmul.f32 %v1400, %v1403
    %v1406 = vrot.slane %v1117, 4
    %v1408 = vmul.f32 %v1389, %v1406
    %v1409 = vadd.f32 %v1405, %v1408
    %1411 = vrot.lane.b32.xlu0 %v1409, 96
    %v1412 = vpop.permute.xlu0 %1411
    %1414 = vst.msk [vmem:[#allocation2 + $0xc] sm:$0xf0] %vm834, %v1412
    %v1415 = vld [vmem:[#allocation7] sm:$0xff]
    %v1416 = vld [vmem:[#allocation7 + $0x8] sm:$0xff]
    %v1417 = vld [vmem:[#allocation7 + $0x10] sm:$0xff]
    %v1418 = vld [vmem:[#allocation7 + $0x18] sm:$0xff]
    %v1419 = vld [vmem:[%s7] sm:$0x1]
    %v1421 = vlaneseq
    %v1422 = vshrl.u32 %v1421, 7
    %v1423 = vsub.s32 0, %v1422
    %v1424 = vrot.slane %v1419, %v1423
    %v1426 = vrot.slane %v1409, 4
    %1427 = vrot.lane.b32.xlu0 %v1426, 96
    %v1428 = vpop.permute.xlu0 %1427
    %v1429 = vsel %vm269, %v1428, 0
    %1431 = vmatprep.subr.mxu0 0.0
    %1432 = vmatpush1.msra.mxu0 0.0
    %1433 = vmatprep.subr.mxu0 0.0
    %1434 = vmatpush1.msra.mxu0 0.0
    %1435 = vmatprep.subr.mxu0 0.0
    %1436 = vmatpush1.msra.mxu0 0.0
    %1437 = vmatprep.subr.mxu0 0.0
    %1438 = vmatpush1.msra.mxu0 0.0
    %1439 = vmatprep.subr.mxu0 0.0
    %1440 = vmatpush1.msra.mxu0 0.0
    %1441 = vmatprep.subr.mxu0 0.0
    %1442 = vmatpush1.msra.mxu0 0.0
    %1443 = vmatprep.subr.mxu0 0.0
    %1444 = vmatpush1.msra.mxu0 0.0
    %1445 = vmatprep.subr.mxu0 0.0
    %1446 = vmatpush1.msra.mxu0 0.0
    %1447 = vmatprep.subr.mxu0 0.0
    %1448 = vmatpush1.msra.mxu0 0.0
    %1449 = vmatprep.subr.mxu0 0.0
    %1450 = vmatpush1.msra.mxu0 0.0
    %1451 = vmatprep.subr.mxu0 0.0
    %1452 = vmatpush1.msra.mxu0 0.0
    %1453 = vmatprep.subr.mxu0 0.0
    %1454 = vmatpush1.msra.mxu0 0.0
    %1455 = vmatprep.subr.mxu0 0.0
    %1456 = vmatpush1.msra.mxu0 %v1418
    %1457 = vmatprep.subr.mxu0 0.0
    %1458 = vmatpush1.msra.mxu0 %v1417
    %1459 = vmatprep.subr.mxu0 0.0
    %1460 = vmatpush1.msra.mxu0 %v1416
    %1461 = vmatprep.subr.mxu0 0.0
    %1462 = vmatpush1.msra.mxu0 %v1415
    %1463 = vmatprep.subr.mxu0 0.0
    %1464 = vmatpush2.msra.mxu0 0.0
    %1465 = vmatprep.subr.mxu0 0.0
    %1466 = vmatpush2.msra.mxu0 0.0
    %1467 = vmatprep.subr.mxu0 0.0
    %1468 = vmatpush2.msra.mxu0 0.0
    %1469 = vmatprep.subr.mxu0 0.0
    %1470 = vmatpush2.msra.mxu0 0.0
    %1471 = vmatprep.subr.mxu0 0.0
    %1472 = vmatpush2.msra.mxu0 0.0
    %1473 = vmatprep.subr.mxu0 0.0
    %1474 = vmatpush2.msra.mxu0 0.0
    %1475 = vmatprep.subr.mxu0 0.0
    %1476 = vmatpush2.msra.mxu0 0.0
    %1477 = vmatprep.subr.mxu0 0.0
    %1478 = vmatpush2.msra.mxu0 0.0
    %1479 = vmatprep.subr.mxu0 0.0
    %1480 = vmatpush2.msra.mxu0 0.0
    %1481 = vmatprep.subr.mxu0 0.0
    %1482 = vmatpush2.msra.mxu0 0.0
    %1483 = vmatprep.subr.mxu0 0.0
    %1484 = vmatpush2.msra.mxu0 0.0
    %1485 = vmatprep.subr.mxu0 0.0
    %1486 = vmatpush2.msra.mxu0 0.0
    %1487 = vmatprep.subr.mxu0 0.0
    %1488 = vmatpush2.msra.mxu0 0.0
    %1489 = vmatprep.subr.mxu0 0.0
    %1490 = vmatpush2.msra.mxu0 0.0
    %1491 = vmatprep.subr.mxu0 0.0
    %1492 = vmatpush2.msra.mxu0 0.0
    %1493 = vmatprep.subr.mxu0 0.0
    %1494 = vmatpush2.msra.mxu0 0.0
    %1495 = vmatprep.mubr.f32.mxu0 0.0
    %1496 = vmatmul.mubr.f32.gmra.mxu0 %v1429
    %v1497 = vpop.f32.mrf.mxu0
    %v1498 = vadd.f32 %v1424, %v1497
    %v1499 = vpop.f32.mrf.mxu0
    %1500 = vdwg.mxu0
    %v1501 = vld [vmem:[#allocation9] sm:$0xff]
    %v1502 = vld [vmem:[#allocation9 + $0x8] sm:$0xff]
    %v1503 = vld [vmem:[#allocation9 + $0x10] sm:$0xff]
    %v1504 = vld [vmem:[#allocation9 + $0x18] sm:$0xff]
    %v1505 = vld [vmem:[%s8] sm:$0x1]
    %v1507 = vlaneseq
    %v1508 = vshrl.u32 %v1507, 7
    %v1509 = vsub.s32 0, %v1508
    %v1510 = vrot.slane %v1505, %v1509
    %1512 = vmatprep.subr.mxu0 0.0
    %1513 = vmatpush1.msra.mxu0 0.0
    %1514 = vmatprep.subr.mxu0 0.0
    %1515 = vmatpush1.msra.mxu0 0.0
    %1516 = vmatprep.subr.mxu0 0.0
    %1517 = vmatpush1.msra.mxu0 0.0
    %1518 = vmatprep.subr.mxu0 0.0
    %1519 = vmatpush1.msra.mxu0 0.0
    %1520 = vmatprep.subr.mxu0 0.0
    %1521 = vmatpush1.msra.mxu0 0.0
    %1522 = vmatprep.subr.mxu0 0.0
    %1523 = vmatpush1.msra.mxu0 0.0
    %1524 = vmatprep.subr.mxu0 0.0
    %1525 = vmatpush1.msra.mxu0 0.0
    %1526 = vmatprep.subr.mxu0 0.0
    %1527 = vmatpush1.msra.mxu0 0.0
    %1528 = vmatprep.subr.mxu0 0.0
    %1529 = vmatpush1.msra.mxu0 0.0
    %1530 = vmatprep.subr.mxu0 0.0
    %1531 = vmatpush1.msra.mxu0 0.0
    %1532 = vmatprep.subr.mxu0 0.0
    %1533 = vmatpush1.msra.mxu0 0.0
    %1534 = vmatprep.subr.mxu0 0.0
    %1535 = vmatpush1.msra.mxu0 0.0
    %1536 = vmatprep.subr.mxu0 0.0
    %1537 = vmatpush1.msra.mxu0 %v1504
    %1538 = vmatprep.subr.mxu0 0.0
    %1539 = vmatpush1.msra.mxu0 %v1503
    %1540 = vmatprep.subr.mxu0 0.0
    %1541 = vmatpush1.msra.mxu0 %v1502
    %1542 = vmatprep.subr.mxu0 0.0
    %1543 = vmatpush1.msra.mxu0 %v1501
    %1544 = vmatprep.subr.mxu0 0.0
    %1545 = vmatpush2.msra.mxu0 0.0
    %1546 = vmatprep.subr.mxu0 0.0
    %1547 = vmatpush2.msra.mxu0 0.0
    %1548 = vmatprep.subr.mxu0 0.0
    %1549 = vmatpush2.msra.mxu0 0.0
    %1550 = vmatprep.subr.mxu0 0.0
    %1551 = vmatpush2.msra.mxu0 0.0
    %1552 = vmatprep.subr.mxu0 0.0
    %1553 = vmatpush2.msra.mxu0 0.0
    %1554 = vmatprep.subr.mxu0 0.0
    %1555 = vmatpush2.msra.mxu0 0.0
    %1556 = vmatprep.subr.mxu0 0.0
    %1557 = vmatpush2.msra.mxu0 0.0
    %1558 = vmatprep.subr.mxu0 0.0
    %1559 = vmatpush2.msra.mxu0 0.0
    %1560 = vmatprep.subr.mxu0 0.0
    %1561 = vmatpush2.msra.mxu0 0.0
    %1562 = vmatprep.subr.mxu0 0.0
    %1563 = vmatpush2.msra.mxu0 0.0
    %1564 = vmatprep.subr.mxu0 0.0
    %1565 = vmatpush2.msra.mxu0 0.0
    %1566 = vmatprep.subr.mxu0 0.0
    %1567 = vmatpush2.msra.mxu0 0.0
    %1568 = vmatprep.subr.mxu0 0.0
    %1569 = vmatpush2.msra.mxu0 0.0
    %1570 = vmatprep.subr.mxu0 0.0
    %1571 = vmatpush2.msra.mxu0 0.0
    %1572 = vmatprep.subr.mxu0 0.0
    %1573 = vmatpush2.msra.mxu0 0.0
    %1574 = vmatprep.subr.mxu0 0.0
    %1575 = vmatpush2.msra.mxu0 0.0
    %1576 = vmatprep.mubr.f32.mxu0 0.0
    %1577 = vmatmul.mubr.f32.gmra.mxu0 %v1429
    %v1578 = vpop.f32.mrf.mxu0
    %v1579 = vadd.f32 %v1510, %v1578
    %v1580 = vpop.f32.mrf.mxu0
    %1581 = vdwg.mxu0
    %v1582 = vld [vmem:[#allocation10] sm:$0xff]
    %v1583 = vld [vmem:[#allocation10 + $0x8] sm:$0xff]
    %v1584 = vld [vmem:[#allocation10 + $0x10] sm:$0xff]
    %v1585 = vld [vmem:[#allocation10 + $0x18] sm:$0xff]
    %v1586 = vld [vmem:[%s9] sm:$0x1]
    %v1588 = vlaneseq
    %v1589 = vshrl.u32 %v1588, 7
    %v1590 = vsub.s32 0, %v1589
    %v1591 = vrot.slane %v1586, %v1590
    %1593 = vmatprep.subr.mxu0 0.0
    %1594 = vmatpush1.msra.mxu0 0.0
    %1595 = vmatprep.subr.mxu0 0.0
    %1596 = vmatpush1.msra.mxu0 0.0
    %1597 = vmatprep.subr.mxu0 0.0
    %1598 = vmatpush1.msra.mxu0 0.0
    %1599 = vmatprep.subr.mxu0 0.0
    %1600 = vmatpush1.msra.mxu0 0.0
    %1601 = vmatprep.subr.mxu0 0.0
    %1602 = vmatpush1.msra.mxu0 0.0
    %1603 = vmatprep.subr.mxu0 0.0
    %1604 = vmatpush1.msra.mxu0 0.0
    %1605 = vmatprep.subr.mxu0 0.0
    %1606 = vmatpush1.msra.mxu0 0.0
    %1607 = vmatprep.subr.mxu0 0.0
    %1608 = vmatpush1.msra.mxu0 0.0
    %1609 = vmatprep.subr.mxu0 0.0
    %1610 = vmatpush1.msra.mxu0 0.0
    %1611 = vmatprep.subr.mxu0 0.0
    %1612 = vmatpush1.msra.mxu0 0.0
    %1613 = vmatprep.subr.mxu0 0.0
    %1614 = vmatpush1.msra.mxu0 0.0
    %1615 = vmatprep.subr.mxu0 0.0
    %1616 = vmatpush1.msra.mxu0 0.0
    %1617 = vmatprep.subr.mxu0 0.0
    %1618 = vmatpush1.msra.mxu0 %v1585
    %1619 = vmatprep.subr.mxu0 0.0
    %1620 = vmatpush1.msra.mxu0 %v1584
    %1621 = vmatprep.subr.mxu0 0.0
    %1622 = vmatpush1.msra.mxu0 %v1583
    %1623 = vmatprep.subr.mxu0 0.0
    %1624 = vmatpush1.msra.mxu0 %v1582
    %1625 = vmatprep.subr.mxu0 0.0
    %1626 = vmatpush2.msra.mxu0 0.0
    %1627 = vmatprep.subr.mxu0 0.0
    %1628 = vmatpush2.msra.mxu0 0.0
    %1629 = vmatprep.subr.mxu0 0.0
    %1630 = vmatpush2.msra.mxu0 0.0
    %1631 = vmatprep.subr.mxu0 0.0
    %1632 = vmatpush2.msra.mxu0 0.0
    %1633 = vmatprep.subr.mxu0 0.0
    %1634 = vmatpush2.msra.mxu0 0.0
    %1635 = vmatprep.subr.mxu0 0.0
    %1636 = vmatpush2.msra.mxu0 0.0
    %1637 = vmatprep.subr.mxu0 0.0
    %1638 = vmatpush2.msra.mxu0 0.0
    %1639 = vmatprep.subr.mxu0 0.0
    %1640 = vmatpush2.msra.mxu0 0.0
    %1641 = vmatprep.subr.mxu0 0.0
    %1642 = vmatpush2.msra.mxu0 0.0
    %1643 = vmatprep.subr.mxu0 0.0
    %1644 = vmatpush2.msra.mxu0 0.0
    %1645 = vmatprep.subr.mxu0 0.0
    %1646 = vmatpush2.msra.mxu0 0.0
    %1647 = vmatprep.subr.mxu0 0.0
    %1648 = vmatpush2.msra.mxu0 0.0
    %1649 = vmatprep.subr.mxu0 0.0
    %1650 = vmatpush2.msra.mxu0 0.0
    %1651 = vmatprep.subr.mxu0 0.0
    %1652 = vmatpush2.msra.mxu0 0.0
    %1653 = vmatprep.subr.mxu0 0.0
    %1654 = vmatpush2.msra.mxu0 0.0
    %1655 = vmatprep.subr.mxu0 0.0
    %1656 = vmatpush2.msra.mxu0 0.0
    %1657 = vmatprep.mubr.f32.mxu0 0.0
    %1658 = vmatmul.mubr.f32.gmra.mxu0 %v1429
    %v1659 = vpop.f32.mrf.mxu0
    %v1660 = vadd.f32 %v1591, %v1659
    %v1661 = vpop.f32.mrf.mxu0
    %1662 = vdwg.mxu0
    %v1663 = vadd.f32 %v248, %v1498
    %v1664 = vxor.u32 %v1663, 2147483648
    %v1665 = vmul.f32 %v1664, 1.442695
    %v1666 = vpow.pop %v1665
    %v1667 = vadd.f32 %v1666, 1.0
    %v1668 = vrcp.pop %v1667
    %v1669 = vmul.f32 1.0, %v1668
    %1671 = vrot.lane.b32.xlu0 %v1579, 32
    %v1672 = vpop.permute.xlu0 %1671
    %v1674 = vadd.f32 %v248, %v1672
    %v1675 = vxor.u32 %v1674, 2147483648
    %v1676 = vmul.f32 %v1675, 1.442695
    %v1677 = vpow.pop %v1676
    %v1678 = vadd.f32 %v1677, 1.0
    %v1679 = vrcp.pop %v1678
    %v1680 = vmul.f32 1.0, %v1679
    %v1681 = vmul.f32 %v1669, %v1660
    %1683 = vrot.lane.b32.xlu0 %v1681, 64
    %v1684 = vpop.permute.xlu0 %1683
    %v1686 = vadd.f32 %v248, %v1684
    %v1687 = vtanh.pop %v1686
    %v1688 = vsub.f32 1.0, %v1680
    %1690 = vrot.lane.b32.xlu0 %v1687, 96
    %v1691 = vpop.permute.xlu0 %1690
    %v1693 = vmul.f32 %v1688, %v1691
    %v1695 = vmul.f32 %v1680, %v1426
    %v1696 = vadd.f32 %v1693, %v1695
    %1698 = vrot.lane.b32.xlu0 %v1696, 96
    %v1699 = vpop.permute.xlu0 %1698
    %1701 = vst.msk [vmem:[#allocation2 + $0x14] sm:$0xf] %vm256, %v1699
    %v1702 = vld [vmem:[#allocation7] sm:$0xff]
    %v1703 = vld [vmem:[#allocation7 + $0x8] sm:$0xff]
    %v1704 = vld [vmem:[#allocation7 + $0x10] sm:$0xff]
    %v1705 = vld [vmem:[#allocation7 + $0x18] sm:$0xff]
    %v1706 = vld [vmem:[%s7] sm:$0x1]
    %v1708 = vlaneseq
    %v1709 = vshrl.u32 %v1708, 7
    %v1710 = vsub.s32 0, %v1709
    %v1711 = vrot.slane %v1706, %v1710
    %v1713 = vsel %vm269, %v1699, 0
    %1715 = vmatprep.subr.mxu0 0.0
    %1716 = vmatpush1.msra.mxu0 0.0
    %1717 = vmatprep.subr.mxu0 0.0
    %1718 = vmatpush1.msra.mxu0 0.0
    %1719 = vmatprep.subr.mxu0 0.0
    %1720 = vmatpush1.msra.mxu0 0.0
    %1721 = vmatprep.subr.mxu0 0.0
    %1722 = vmatpush1.msra.mxu0 0.0
    %1723 = vmatprep.subr.mxu0 0.0
    %1724 = vmatpush1.msra.mxu0 0.0
    %1725 = vmatprep.subr.mxu0 0.0
    %1726 = vmatpush1.msra.mxu0 0.0
    %1727 = vmatprep.subr.mxu0 0.0
    %1728 = vmatpush1.msra.mxu0 0.0
    %1729 = vmatprep.subr.mxu0 0.0
    %1730 = vmatpush1.msra.mxu0 0.0
    %1731 = vmatprep.subr.mxu0 0.0
    %1732 = vmatpush1.msra.mxu0 0.0
    %1733 = vmatprep.subr.mxu0 0.0
    %1734 = vmatpush1.msra.mxu0 0.0
    %1735 = vmatprep.subr.mxu0 0.0
    %1736 = vmatpush1.msra.mxu0 0.0
    %1737 = vmatprep.subr.mxu0 0.0
    %1738 = vmatpush1.msra.mxu0 0.0
    %1739 = vmatprep.subr.mxu0 0.0
    %1740 = vmatpush1.msra.mxu0 %v1705
    %1741 = vmatprep.subr.mxu0 0.0
    %1742 = vmatpush1.msra.mxu0 %v1704
    %1743 = vmatprep.subr.mxu0 0.0
    %1744 = vmatpush1.msra.mxu0 %v1703
    %1745 = vmatprep.subr.mxu0 0.0
    %1746 = vmatpush1.msra.mxu0 %v1702
    %1747 = vmatprep.subr.mxu0 0.0
    %1748 = vmatpush2.msra.mxu0 0.0
    %1749 = vmatprep.subr.mxu0 0.0
    %1750 = vmatpush2.msra.mxu0 0.0
    %1751 = vmatprep.subr.mxu0 0.0
    %1752 = vmatpush2.msra.mxu0 0.0
    %1753 = vmatprep.subr.mxu0 0.0
    %1754 = vmatpush2.msra.mxu0 0.0
    %1755 = vmatprep.subr.mxu0 0.0
    %1756 = vmatpush2.msra.mxu0 0.0
    %1757 = vmatprep.subr.mxu0 0.0
    %1758 = vmatpush2.msra.mxu0 0.0
    %1759 = vmatprep.subr.mxu0 0.0
    %1760 = vmatpush2.msra.mxu0 0.0
    %1761 = vmatprep.subr.mxu0 0.0
    %1762 = vmatpush2.msra.mxu0 0.0
    %1763 = vmatprep.subr.mxu0 0.0
    %1764 = vmatpush2.msra.mxu0 0.0
    %1765 = vmatprep.subr.mxu0 0.0
    %1766 = vmatpush2.msra.mxu0 0.0
    %1767 = vmatprep.subr.mxu0 0.0
    %1768 = vmatpush2.msra.mxu0 0.0
    %1769 = vmatprep.subr.mxu0 0.0
    %1770 = vmatpush2.msra.mxu0 0.0
    %1771 = vmatprep.subr.mxu0 0.0
    %1772 = vmatpush2.msra.mxu0 0.0
    %1773 = vmatprep.subr.mxu0 0.0
    %1774 = vmatpush2.msra.mxu0 0.0
    %1775 = vmatprep.subr.mxu0 0.0
    %1776 = vmatpush2.msra.mxu0 0.0
    %1777 = vmatprep.subr.mxu0 0.0
    %1778 = vmatpush2.msra.mxu0 0.0
    %1779 = vmatprep.mubr.f32.mxu0 0.0
    %1780 = vmatmul.mubr.f32.gmra.mxu0 %v1713
    %v1781 = vpop.f32.mrf.mxu0
    %v1782 = vadd.f32 %v1711, %v1781
    %v1783 = vpop.f32.mrf.mxu0
    %1784 = vdwg.mxu0
    %v1785 = vld [vmem:[#allocation9] sm:$0xff]
    %v1786 = vld [vmem:[#allocation9 + $0x8] sm:$0xff]
    %v1787 = vld [vmem:[#allocation9 + $0x10] sm:$0xff]
    %v1788 = vld [vmem:[#allocation9 + $0x18] sm:$0xff]
    %v1789 = vld [vmem:[%s8] sm:$0x1]
    %v1791 = vlaneseq
    %v1792 = vshrl.u32 %v1791, 7
    %v1793 = vsub.s32 0, %v1792
    %v1794 = vrot.slane %v1789, %v1793
    %1796 = vmatprep.subr.mxu0 0.0
    %1797 = vmatpush1.msra.mxu0 0.0
    %1798 = vmatprep.subr.mxu0 0.0
    %1799 = vmatpush1.msra.mxu0 0.0
    %1800 = vmatprep.subr.mxu0 0.0
    %1801 = vmatpush1.msra.mxu0 0.0
    %1802 = vmatprep.subr.mxu0 0.0
    %1803 = vmatpush1.msra.mxu0 0.0
    %1804 = vmatprep.subr.mxu0 0.0
    %1805 = vmatpush1.msra.mxu0 0.0
    %1806 = vmatprep.subr.mxu0 0.0
    %1807 = vmatpush1.msra.mxu0 0.0
    %1808 = vmatprep.subr.mxu0 0.0
    %1809 = vmatpush1.msra.mxu0 0.0
    %1810 = vmatprep.subr.mxu0 0.0
    %1811 = vmatpush1.msra.mxu0 0.0
    %1812 = vmatprep.subr.mxu0 0.0
    %1813 = vmatpush1.msra.mxu0 0.0
    %1814 = vmatprep.subr.mxu0 0.0
    %1815 = vmatpush1.msra.mxu0 0.0
    %1816 = vmatprep.subr.mxu0 0.0
    %1817 = vmatpush1.msra.mxu0 0.0
    %1818 = vmatprep.subr.mxu0 0.0
    %1819 = vmatpush1.msra.mxu0 0.0
    %1820 = vmatprep.subr.mxu0 0.0
    %1821 = vmatpush1.msra.mxu0 %v1788
    %1822 = vmatprep.subr.mxu0 0.0
    %1823 = vmatpush1.msra.mxu0 %v1787
    %1824 = vmatprep.subr.mxu0 0.0
    %1825 = vmatpush1.msra.mxu0 %v1786
    %1826 = vmatprep.subr.mxu0 0.0
    %1827 = vmatpush1.msra.mxu0 %v1785
    %1828 = vmatprep.subr.mxu0 0.0
    %1829 = vmatpush2.msra.mxu0 0.0
    %1830 = vmatprep.subr.mxu0 0.0
    %1831 = vmatpush2.msra.mxu0 0.0
    %1832 = vmatprep.subr.mxu0 0.0
    %1833 = vmatpush2.msra.mxu0 0.0
    %1834 = vmatprep.subr.mxu0 0.0
    %1835 = vmatpush2.msra.mxu0 0.0
    %1836 = vmatprep.subr.mxu0 0.0
    %1837 = vmatpush2.msra.mxu0 0.0
    %1838 = vmatprep.subr.mxu0 0.0
    %1839 = vmatpush2.msra.mxu0 0.0
    %1840 = vmatprep.subr.mxu0 0.0
    %1841 = vmatpush2.msra.mxu0 0.0
    %1842 = vmatprep.subr.mxu0 0.0
    %1843 = vmatpush2.msra.mxu0 0.0
    %1844 = vmatprep.subr.mxu0 0.0
    %1845 = vmatpush2.msra.mxu0 0.0
    %1846 = vmatprep.subr.mxu0 0.0
    %1847 = vmatpush2.msra.mxu0 0.0
    %1848 = vmatprep.subr.mxu0 0.0
    %1849 = vmatpush2.msra.mxu0 0.0
    %1850 = vmatprep.subr.mxu0 0.0
    %1851 = vmatpush2.msra.mxu0 0.0
    %1852 = vmatprep.subr.mxu0 0.0
    %1853 = vmatpush2.msra.mxu0 0.0
    %1854 = vmatprep.subr.mxu0 0.0
    %1855 = vmatpush2.msra.mxu0 0.0
    %1856 = vmatprep.subr.mxu0 0.0
    %1857 = vmatpush2.msra.mxu0 0.0
    %1858 = vmatprep.subr.mxu0 0.0
    %1859 = vmatpush2.msra.mxu0 0.0
    %1860 = vmatprep.mubr.f32.mxu0 0.0
    %1861 = vmatmul.mubr.f32.gmra.mxu0 %v1713
    %v1862 = vpop.f32.mrf.mxu0
    %v1863 = vadd.f32 %v1794, %v1862
    %v1864 = vpop.f32.mrf.mxu0
    %1865 = vdwg.mxu0
    %v1866 = vld [vmem:[#allocation10] sm:$0xff]
    %v1867 = vld [vmem:[#allocation10 + $0x8] sm:$0xff]
    %v1868 = vld [vmem:[#allocation10 + $0x10] sm:$0xff]
    %v1869 = vld [vmem:[#allocation10 + $0x18] sm:$0xff]
    %v1870 = vld [vmem:[%s9] sm:$0x1]
    %v1872 = vlaneseq
    %v1873 = vshrl.u32 %v1872, 7
    %v1874 = vsub.s32 0, %v1873
    %v1875 = vrot.slane %v1870, %v1874
    %1877 = vmatprep.subr.mxu0 0.0
    %1878 = vmatpush1.msra.mxu0 0.0
    %1879 = vmatprep.subr.mxu0 0.0
    %1880 = vmatpush1.msra.mxu0 0.0
    %1881 = vmatprep.subr.mxu0 0.0
    %1882 = vmatpush1.msra.mxu0 0.0
    %1883 = vmatprep.subr.mxu0 0.0
    %1884 = vmatpush1.msra.mxu0 0.0
    %1885 = vmatprep.subr.mxu0 0.0
    %1886 = vmatpush1.msra.mxu0 0.0
    %1887 = vmatprep.subr.mxu0 0.0
    %1888 = vmatpush1.msra.mxu0 0.0
    %1889 = vmatprep.subr.mxu0 0.0
    %1890 = vmatpush1.msra.mxu0 0.0
    %1891 = vmatprep.subr.mxu0 0.0
    %1892 = vmatpush1.msra.mxu0 0.0
    %1893 = vmatprep.subr.mxu0 0.0
    %1894 = vmatpush1.msra.mxu0 0.0
    %1895 = vmatprep.subr.mxu0 0.0
    %1896 = vmatpush1.msra.mxu0 0.0
    %1897 = vmatprep.subr.mxu0 0.0
    %1898 = vmatpush1.msra.mxu0 0.0
    %1899 = vmatprep.subr.mxu0 0.0
    %1900 = vmatpush1.msra.mxu0 0.0
    %1901 = vmatprep.subr.mxu0 0.0
    %1902 = vmatpush1.msra.mxu0 %v1869
    %1903 = vmatprep.subr.mxu0 0.0
    %1904 = vmatpush1.msra.mxu0 %v1868
    %1905 = vmatprep.subr.mxu0 0.0
    %1906 = vmatpush1.msra.mxu0 %v1867
    %1907 = vmatprep.subr.mxu0 0.0
    %1908 = vmatpush1.msra.mxu0 %v1866
    %1909 = vmatprep.subr.mxu0 0.0
    %1910 = vmatpush2.msra.mxu0 0.0
    %1911 = vmatprep.subr.mxu0 0.0
    %1912 = vmatpush2.msra.mxu0 0.0
    %1913 = vmatprep.subr.mxu0 0.0
    %1914 = vmatpush2.msra.mxu0 0.0
    %1915 = vmatprep.subr.mxu0 0.0
    %1916 = vmatpush2.msra.mxu0 0.0
    %1917 = vmatprep.subr.mxu0 0.0
    %1918 = vmatpush2.msra.mxu0 0.0
    %1919 = vmatprep.subr.mxu0 0.0
    %1920 = vmatpush2.msra.mxu0 0.0
    %1921 = vmatprep.subr.mxu0 0.0
    %1922 = vmatpush2.msra.mxu0 0.0
    %1923 = vmatprep.subr.mxu0 0.0
    %1924 = vmatpush2.msra.mxu0 0.0
    %1925 = vmatprep.subr.mxu0 0.0
    %1926 = vmatpush2.msra.mxu0 0.0
    %1927 = vmatprep.subr.mxu0 0.0
    %1928 = vmatpush2.msra.mxu0 0.0
    %1929 = vmatprep.subr.mxu0 0.0
    %1930 = vmatpush2.msra.mxu0 0.0
    %1931 = vmatprep.subr.mxu0 0.0
    %1932 = vmatpush2.msra.mxu0 0.0
    %1933 = vmatprep.subr.mxu0 0.0
    %1934 = vmatpush2.msra.mxu0 0.0
    %1935 = vmatprep.subr.mxu0 0.0
    %1936 = vmatpush2.msra.mxu0 0.0
    %1937 = vmatprep.subr.mxu0 0.0
    %1938 = vmatpush2.msra.mxu0 0.0
    %1939 = vmatprep.subr.mxu0 0.0
    %1940 = vmatpush2.msra.mxu0 0.0
    %1941 = vmatprep.mubr.f32.mxu0 0.0
    %1942 = vmatmul.mubr.f32.gmra.mxu0 %v1713
    %v1943 = vpop.f32.mrf.mxu0
    %v1944 = vadd.f32 %v1875, %v1943
    %v1945 = vpop.f32.mrf.mxu0
    %1946 = vdwg.mxu0
    %v1948 = vrot.slane %v1782, 4
    %v1950 = vadd.f32 %v248, %v1948
    %v1951 = vxor.u32 %v1950, 2147483648
    %v1952 = vmul.f32 %v1951, 1.442695
    %v1953 = vpow.pop %v1952
    %v1954 = vadd.f32 %v1953, 1.0
    %v1955 = vrcp.pop %v1954
    %v1956 = vmul.f32 1.0, %v1955
    %v1958 = vrot.slane %v1863, 4
    %1959 = vrot.lane.b32.xlu0 %v1958, 32
    %v1960 = vpop.permute.xlu0 %1959
    %v1962 = vadd.f32 %v248, %v1960
    %v1963 = vxor.u32 %v1962, 2147483648
    %v1964 = vmul.f32 %v1963, 1.442695
    %v1965 = vpow.pop %v1964
    %v1966 = vadd.f32 %v1965, 1.0
    %v1967 = vrcp.pop %v1966
    %v1968 = vmul.f32 1.0, %v1967
    %v1970 = vrot.slane %v1944, 4
    %v1972 = vmul.f32 %v1956, %v1970
    %1974 = vrot.lane.b32.xlu0 %v1972, 64
    %v1975 = vpop.permute.xlu0 %1974
    %v1977 = vadd.f32 %v248, %v1975
    %v1978 = vtanh.pop %v1977
    %v1979 = vsub.f32 1.0, %v1968
    %1981 = vrot.lane.b32.xlu0 %v1978, 96
    %v1982 = vpop.permute.xlu0 %1981
    %v1984 = vmul.f32 %v1979, %v1982
    %v1985 = vrot.slane %v1696, 4
    %v1987 = vmul.f32 %v1968, %v1985
    %v1988 = vadd.f32 %v1984, %v1987
    %1990 = vrot.lane.b32.xlu0 %v1988, 96
    %v1991 = vpop.permute.xlu0 %1990
    %1993 = vst.msk [vmem:[#allocation2 + $0x14] sm:$0xf0] %vm834, %v1991
    %v1994 = vld [vmem:[#allocation7] sm:$0xff]
    %v1995 = vld [vmem:[#allocation7 + $0x8] sm:$0xff]
    %v1996 = vld [vmem:[#allocation7 + $0x10] sm:$0xff]
    %v1997 = vld [vmem:[#allocation7 + $0x18] sm:$0xff]
    %v1998 = vld [vmem:[%s7] sm:$0x1]
    %v2000 = vlaneseq
    %v2001 = vshrl.u32 %v2000, 7
    %v2002 = vsub.s32 0, %v2001
    %v2003 = vrot.slane %v1998, %v2002
    %v2005 = vrot.slane %v1988, 4
    %2006 = vrot.lane.b32.xlu0 %v2005, 96
    %v2007 = vpop.permute.xlu0 %2006
    %v2008 = vsel %vm269, %v2007, 0
    %2010 = vmatprep.subr.mxu0 0.0
    %2011 = vmatpush1.msra.mxu0 0.0
    %2012 = vmatprep.subr.mxu0 0.0
    %2013 = vmatpush1.msra.mxu0 0.0
    %2014 = vmatprep.subr.mxu0 0.0
    %2015 = vmatpush1.msra.mxu0 0.0
    %2016 = vmatprep.subr.mxu0 0.0
    %2017 = vmatpush1.msra.mxu0 0.0
    %2018 = vmatprep.subr.mxu0 0.0
    %2019 = vmatpush1.msra.mxu0 0.0
    %2020 = vmatprep.subr.mxu0 0.0
    %2021 = vmatpush1.msra.mxu0 0.0
    %2022 = vmatprep.subr.mxu0 0.0
    %2023 = vmatpush1.msra.mxu0 0.0
    %2024 = vmatprep.subr.mxu0 0.0
    %2025 = vmatpush1.msra.mxu0 0.0
    %2026 = vmatprep.subr.mxu0 0.0
    %2027 = vmatpush1.msra.mxu0 0.0
    %2028 = vmatprep.subr.mxu0 0.0
    %2029 = vmatpush1.msra.mxu0 0.0
    %2030 = vmatprep.subr.mxu0 0.0
    %2031 = vmatpush1.msra.mxu0 0.0
    %2032 = vmatprep.subr.mxu0 0.0
    %2033 = vmatpush1.msra.mxu0 0.0
    %2034 = vmatprep.subr.mxu0 0.0
    %2035 = vmatpush1.msra.mxu0 %v1997
    %2036 = vmatprep.subr.mxu0 0.0
    %2037 = vmatpush1.msra.mxu0 %v1996
    %2038 = vmatprep.subr.mxu0 0.0
    %2039 = vmatpush1.msra.mxu0 %v1995
    %2040 = vmatprep.subr.mxu0 0.0
    %2041 = vmatpush1.msra.mxu0 %v1994
    %2042 = vmatprep.subr.mxu0 0.0
    %2043 = vmatpush2.msra.mxu0 0.0
    %2044 = vmatprep.subr.mxu0 0.0
    %2045 = vmatpush2.msra.mxu0 0.0
    %2046 = vmatprep.subr.mxu0 0.0
    %2047 = vmatpush2.msra.mxu0 0.0
    %2048 = vmatprep.subr.mxu0 0.0
    %2049 = vmatpush2.msra.mxu0 0.0
    %2050 = vmatprep.subr.mxu0 0.0
    %2051 = vmatpush2.msra.mxu0 0.0
    %2052 = vmatprep.subr.mxu0 0.0
    %2053 = vmatpush2.msra.mxu0 0.0
    %2054 = vmatprep.subr.mxu0 0.0
    %2055 = vmatpush2.msra.mxu0 0.0
    %2056 = vmatprep.subr.mxu0 0.0
    %2057 = vmatpush2.msra.mxu0 0.0
    %2058 = vmatprep.subr.mxu0 0.0
    %2059 = vmatpush2.msra.mxu0 0.0
    %2060 = vmatprep.subr.mxu0 0.0
    %2061 = vmatpush2.msra.mxu0 0.0
    %2062 = vmatprep.subr.mxu0 0.0
    %2063 = vmatpush2.msra.mxu0 0.0
    %2064 = vmatprep.subr.mxu0 0.0
    %2065 = vmatpush2.msra.mxu0 0.0
    %2066 = vmatprep.subr.mxu0 0.0
    %2067 = vmatpush2.msra.mxu0 0.0
    %2068 = vmatprep.subr.mxu0 0.0
    %2069 = vmatpush2.msra.mxu0 0.0
    %2070 = vmatprep.subr.mxu0 0.0
    %2071 = vmatpush2.msra.mxu0 0.0
    %2072 = vmatprep.subr.mxu0 0.0
    %2073 = vmatpush2.msra.mxu0 0.0
    %2074 = vmatprep.mubr.f32.mxu0 0.0
    %2075 = vmatmul.mubr.f32.gmra.mxu0 %v2008
    %v2076 = vpop.f32.mrf.mxu0
    %v2077 = vadd.f32 %v2003, %v2076
    %v2078 = vpop.f32.mrf.mxu0
    %2079 = vdwg.mxu0
    %v2080 = vld [vmem:[#allocation9] sm:$0xff]
    %v2081 = vld [vmem:[#allocation9 + $0x8] sm:$0xff]
    %v2082 = vld [vmem:[#allocation9 + $0x10] sm:$0xff]
    %v2083 = vld [vmem:[#allocation9 + $0x18] sm:$0xff]
    %v2084 = vld [vmem:[%s8] sm:$0x1]
    %v2086 = vlaneseq
    %v2087 = vshrl.u32 %v2086, 7
    %v2088 = vsub.s32 0, %v2087
    %v2089 = vrot.slane %v2084, %v2088
    %2091 = vmatprep.subr.mxu0 0.0
    %2092 = vmatpush1.msra.mxu0 0.0
    %2093 = vmatprep.subr.mxu0 0.0
    %2094 = vmatpush1.msra.mxu0 0.0
    %2095 = vmatprep.subr.mxu0 0.0
    %2096 = vmatpush1.msra.mxu0 0.0
    %2097 = vmatprep.subr.mxu0 0.0
    %2098 = vmatpush1.msra.mxu0 0.0
    %2099 = vmatprep.subr.mxu0 0.0
    %2100 = vmatpush1.msra.mxu0 0.0
    %2101 = vmatprep.subr.mxu0 0.0
    %2102 = vmatpush1.msra.mxu0 0.0
    %2103 = vmatprep.subr.mxu0 0.0
    %2104 = vmatpush1.msra.mxu0 0.0
    %2105 = vmatprep.subr.mxu0 0.0
    %2106 = vmatpush1.msra.mxu0 0.0
    %2107 = vmatprep.subr.mxu0 0.0
    %2108 = vmatpush1.msra.mxu0 0.0
    %2109 = vmatprep.subr.mxu0 0.0
    %2110 = vmatpush1.msra.mxu0 0.0
    %2111 = vmatprep.subr.mxu0 0.0
    %2112 = vmatpush1.msra.mxu0 0.0
    %2113 = vmatprep.subr.mxu0 0.0
    %2114 = vmatpush1.msra.mxu0 0.0
    %2115 = vmatprep.subr.mxu0 0.0
    %2116 = vmatpush1.msra.mxu0 %v2083
    %2117 = vmatprep.subr.mxu0 0.0
    %2118 = vmatpush1.msra.mxu0 %v2082
    %2119 = vmatprep.subr.mxu0 0.0
    %2120 = vmatpush1.msra.mxu0 %v2081
    %2121 = vmatprep.subr.mxu0 0.0
    %2122 = vmatpush1.msra.mxu0 %v2080
    %2123 = vmatprep.subr.mxu0 0.0
    %2124 = vmatpush2.msra.mxu0 0.0
    %2125 = vmatprep.subr.mxu0 0.0
    %2126 = vmatpush2.msra.mxu0 0.0
    %2127 = vmatprep.subr.mxu0 0.0
    %2128 = vmatpush2.msra.mxu0 0.0
    %2129 = vmatprep.subr.mxu0 0.0
    %2130 = vmatpush2.msra.mxu0 0.0
    %2131 = vmatprep.subr.mxu0 0.0
    %2132 = vmatpush2.msra.mxu0 0.0
    %2133 = vmatprep.subr.mxu0 0.0
    %2134 = vmatpush2.msra.mxu0 0.0
    %2135 = vmatprep.subr.mxu0 0.0
    %2136 = vmatpush2.msra.mxu0 0.0
    %2137 = vmatprep.subr.mxu0 0.0
    %2138 = vmatpush2.msra.mxu0 0.0
    %2139 = vmatprep.subr.mxu0 0.0
    %2140 = vmatpush2.msra.mxu0 0.0
    %2141 = vmatprep.subr.mxu0 0.0
    %2142 = vmatpush2.msra.mxu0 0.0
    %2143 = vmatprep.subr.mxu0 0.0
    %2144 = vmatpush2.msra.mxu0 0.0
    %2145 = vmatprep.subr.mxu0 0.0
    %2146 = vmatpush2.msra.mxu0 0.0
    %2147 = vmatprep.subr.mxu0 0.0
    %2148 = vmatpush2.msra.mxu0 0.0
    %2149 = vmatprep.subr.mxu0 0.0
    %2150 = vmatpush2.msra.mxu0 0.0
    %2151 = vmatprep.subr.mxu0 0.0
    %2152 = vmatpush2.msra.mxu0 0.0
    %2153 = vmatprep.subr.mxu0 0.0
    %2154 = vmatpush2.msra.mxu0 0.0
    %2155 = vmatprep.mubr.f32.mxu0 0.0
    %2156 = vmatmul.mubr.f32.gmra.mxu0 %v2008
    %v2157 = vpop.f32.mrf.mxu0
    %v2158 = vadd.f32 %v2089, %v2157
    %v2159 = vpop.f32.mrf.mxu0
    %2160 = vdwg.mxu0
    %v2161 = vld [vmem:[#allocation10] sm:$0xff]
    %v2162 = vld [vmem:[#allocation10 + $0x8] sm:$0xff]
    %v2163 = vld [vmem:[#allocation10 + $0x10] sm:$0xff]
    %v2164 = vld [vmem:[#allocation10 + $0x18] sm:$0xff]
    %v2165 = vld [vmem:[%s9] sm:$0x1]
    %v2167 = vlaneseq
    %v2168 = vshrl.u32 %v2167, 7
    %v2169 = vsub.s32 0, %v2168
    %v2170 = vrot.slane %v2165, %v2169
    %2172 = vmatprep.subr.mxu0 0.0
    %2173 = vmatpush1.msra.mxu0 0.0
    %2174 = vmatprep.subr.mxu0 0.0
    %2175 = vmatpush1.msra.mxu0 0.0
    %2176 = vmatprep.subr.mxu0 0.0
    %2177 = vmatpush1.msra.mxu0 0.0
    %2178 = vmatprep.subr.mxu0 0.0
    %2179 = vmatpush1.msra.mxu0 0.0
    %2180 = vmatprep.subr.mxu0 0.0
    %2181 = vmatpush1.msra.mxu0 0.0
    %2182 = vmatprep.subr.mxu0 0.0
    %2183 = vmatpush1.msra.mxu0 0.0
    %2184 = vmatprep.subr.mxu0 0.0
    %2185 = vmatpush1.msra.mxu0 0.0
    %2186 = vmatprep.subr.mxu0 0.0
    %2187 = vmatpush1.msra.mxu0 0.0
    %2188 = vmatprep.subr.mxu0 0.0
    %2189 = vmatpush1.msra.mxu0 0.0
    %2190 = vmatprep.subr.mxu0 0.0
    %2191 = vmatpush1.msra.mxu0 0.0
    %2192 = vmatprep.subr.mxu0 0.0
    %2193 = vmatpush1.msra.mxu0 0.0
    %2194 = vmatprep.subr.mxu0 0.0
    %2195 = vmatpush1.msra.mxu0 0.0
    %2196 = vmatprep.subr.mxu0 0.0
    %2197 = vmatpush1.msra.mxu0 %v2164
    %2198 = vmatprep.subr.mxu0 0.0
    %2199 = vmatpush1.msra.mxu0 %v2163
    %2200 = vmatprep.subr.mxu0 0.0
    %2201 = vmatpush1.msra.mxu0 %v2162
    %2202 = vmatprep.subr.mxu0 0.0
    %2203 = vmatpush1.msra.mxu0 %v2161
    %2204 = vmatprep.subr.mxu0 0.0
    %2205 = vmatpush2.msra.mxu0 0.0
    %2206 = vmatprep.subr.mxu0 0.0
    %2207 = vmatpush2.msra.mxu0 0.0
    %2208 = vmatprep.subr.mxu0 0.0
    %2209 = vmatpush2.msra.mxu0 0.0
    %2210 = vmatprep.subr.mxu0 0.0
    %2211 = vmatpush2.msra.mxu0 0.0
    %2212 = vmatprep.subr.mxu0 0.0
    %2213 = vmatpush2.msra.mxu0 0.0
    %2214 = vmatprep.subr.mxu0 0.0
    %2215 = vmatpush2.msra.mxu0 0.0
    %2216 = vmatprep.subr.mxu0 0.0
    %2217 = vmatpush2.msra.mxu0 0.0
    %2218 = vmatprep.subr.mxu0 0.0
    %2219 = vmatpush2.msra.mxu0 0.0
    %2220 = vmatprep.subr.mxu0 0.0
    %2221 = vmatpush2.msra.mxu0 0.0
    %2222 = vmatprep.subr.mxu0 0.0
    %2223 = vmatpush2.msra.mxu0 0.0
    %2224 = vmatprep.subr.mxu0 0.0
    %2225 = vmatpush2.msra.mxu0 0.0
    %2226 = vmatprep.subr.mxu0 0.0
    %2227 = vmatpush2.msra.mxu0 0.0
    %2228 = vmatprep.subr.mxu0 0.0
    %2229 = vmatpush2.msra.mxu0 0.0
    %2230 = vmatprep.subr.mxu0 0.0
    %2231 = vmatpush2.msra.mxu0 0.0
    %2232 = vmatprep.subr.mxu0 0.0
    %2233 = vmatpush2.msra.mxu0 0.0
    %2234 = vmatprep.subr.mxu0 0.0
    %2235 = vmatpush2.msra.mxu0 0.0
    %2236 = vmatprep.mubr.f32.mxu0 0.0
    %2237 = vmatmul.mubr.f32.gmra.mxu0 %v2008
    %v2238 = vpop.f32.mrf.mxu0
    %v2239 = vadd.f32 %v2170, %v2238
    %v2240 = vpop.f32.mrf.mxu0
    %2241 = vdwg.mxu0
    %v2242 = vadd.f32 %v253, %v2077
    %v2243 = vxor.u32 %v2242, 2147483648
    %v2244 = vmul.f32 %v2243, 1.442695
    %v2245 = vpow.pop %v2244
    %v2246 = vadd.f32 %v2245, 1.0
    %v2247 = vrcp.pop %v2246
    %v2248 = vmul.f32 1.0, %v2247
    %2250 = vrot.lane.b32.xlu0 %v2158, 32
    %v2251 = vpop.permute.xlu0 %2250
    %v2253 = vadd.f32 %v253, %v2251
    %v2254 = vxor.u32 %v2253, 2147483648
    %v2255 = vmul.f32 %v2254, 1.442695
    %v2256 = vpow.pop %v2255
    %v2257 = vadd.f32 %v2256, 1.0
    %v2258 = vrcp.pop %v2257
    %v2259 = vmul.f32 1.0, %v2258
    %v2260 = vmul.f32 %v2248, %v2239
    %2262 = vrot.lane.b32.xlu0 %v2260, 64
    %v2263 = vpop.permute.xlu0 %2262
    %v2265 = vadd.f32 %v253, %v2263
    %v2266 = vtanh.pop %v2265
    %v2267 = vsub.f32 1.0, %v2259
    %2269 = vrot.lane.b32.xlu0 %v2266, 96
    %v2270 = vpop.permute.xlu0 %2269
    %v2272 = vmul.f32 %v2267, %v2270
    %v2274 = vmul.f32 %v2259, %v2005
    %v2275 = vadd.f32 %v2272, %v2274
    %2277 = vrot.lane.b32.xlu0 %v2275, 96
    %v2278 = vpop.permute.xlu0 %2277
    %2280 = vst.msk [vmem:[#allocation2 + $0x1c] sm:$0xf] %vm256, %v2278
    %v2281 = vld [vmem:[#allocation2] sm:$0xff]
    %v2282 = vld [vmem:[#allocation2 + $0x8] sm:$0xff]
    %v2283 = vld [vmem:[#allocation2 + $0x10] sm:$0xff]
    %v2284 = vld [vmem:[#allocation2 + $0x18] sm:$0xff]
    %v2285 = vld [vmem:[#allocation12] sm:$0xff]
    %v2286 = vld [vmem:[#allocation12 + $0x8] sm:$0xff]
    %v2287 = vld [vmem:[#allocation12 + $0x10] sm:$0xff]
    %v2288 = vld [vmem:[#allocation12 + $0x18] sm:$0xff]
    %v2289 = vld [vmem:[#allocation13] sm:$0xff]
    %v2290 = vld [vmem:[#allocation13 + $0x8] sm:$0xff]
    %v2291 = vld [vmem:[#allocation13 + $0x10] sm:$0x3f]
    %vm2292 = vcmask 179200
    %v2293 = vsel %vm2292, %v144, 0
    %v2295 = vsel %vm2292, %v145, 0
    %v2297 = vsel %vm2292, %v146, 0
    %v2299 = vsel %vm2292, %v147, 0
    %vm2301 = vcmask 1045504
    %v2303 = vsel %vm2301, %v2291, 0
    %2305 = vmatprep.subr.mxu0 0.0
    %2306 = vmatpush1.msra.mxu0 0.0
    %2307 = vmatprep.subr.mxu0 0.0
    %2308 = vmatpush1.msra.mxu0 0.0
    %2309 = vmatprep.subr.mxu0 0.0
    %2310 = vmatpush1.msra.mxu0 0.0
    %2311 = vmatprep.subr.mxu0 0.0
    %2312 = vmatpush1.msra.mxu0 0.0
    %2313 = vmatprep.subr.mxu0 0.0
    %2314 = vmatpush1.msra.mxu0 0.0
    %2315 = vmatprep.subr.mxu0 0.0
    %2316 = vmatpush1.msra.mxu0 0.0
    %2317 = vmatprep.subr.mxu0 0.0
    %2318 = vmatpush1.msra.mxu0 0.0
    %2319 = vmatprep.subr.mxu0 0.0
    %2320 = vmatpush1.msra.mxu0 0.0
    %2321 = vmatprep.subr.mxu0 0.0
    %2322 = vmatpush1.msra.mxu0 0.0
    %2323 = vmatprep.subr.mxu0 0.0
    %2324 = vmatpush1.msra.mxu0 0.0
    %2325 = vmatprep.subr.mxu0 0.0
    %2326 = vmatpush1.msra.mxu0 0.0
    %2327 = vmatprep.subr.mxu0 0.0
    %2328 = vmatpush1.msra.mxu0 0.0
    %2329 = vmatprep.subr.mxu0 0.0
    %2330 = vmatpush1.msra.mxu0 0.0
    %2331 = vmatprep.subr.mxu0 0.0
    %2332 = vmatpush1.msra.mxu0 %v2303
    %2333 = vmatprep.subr.mxu0 0.0
    %2334 = vmatpush1.msra.mxu0 %v2290
    %2335 = vmatprep.subr.mxu0 0.0
    %2336 = vmatpush1.msra.mxu0 %v2289
    %2337 = vmatprep.subr.mxu0 0.0
    %2338 = vmatpush2.msra.mxu0 0.0
    %2339 = vmatprep.subr.mxu0 0.0
    %2340 = vmatpush2.msra.mxu0 0.0
    %2341 = vmatprep.subr.mxu0 0.0
    %2342 = vmatpush2.msra.mxu0 0.0
    %2343 = vmatprep.subr.mxu0 0.0
    %2344 = vmatpush2.msra.mxu0 0.0
    %2345 = vmatprep.subr.mxu0 0.0
    %2346 = vmatpush2.msra.mxu0 0.0
    %2347 = vmatprep.subr.mxu0 0.0
    %2348 = vmatpush2.msra.mxu0 0.0
    %2349 = vmatprep.subr.mxu0 0.0
    %2350 = vmatpush2.msra.mxu0 0.0
    %2351 = vmatprep.subr.mxu0 0.0
    %2352 = vmatpush2.msra.mxu0 0.0
    %2353 = vmatprep.subr.mxu0 0.0
    %2354 = vmatpush2.msra.mxu0 0.0
    %2355 = vmatprep.subr.mxu0 0.0
    %2356 = vmatpush2.msra.mxu0 0.0
    %2357 = vmatprep.subr.mxu0 0.0
    %2358 = vmatpush2.msra.mxu0 0.0
    %2359 = vmatprep.subr.mxu0 0.0
    %2360 = vmatpush2.msra.mxu0 0.0
    %2361 = vmatprep.subr.mxu0 0.0
    %2362 = vmatpush2.msra.mxu0 0.0
    %2363 = vmatprep.subr.mxu0 0.0
    %2364 = vmatpush2.msra.mxu0 0.0
    %2365 = vmatprep.subr.mxu0 0.0
    %2366 = vmatpush2.msra.mxu0 0.0
    %2367 = vmatprep.subr.mxu0 0.0
    %2368 = vmatpush2.msra.mxu0 0.0
    %2369 = vmatprep.mubr.f32.mxu0 0.0
    %2370 = vmatmul.mubr.f32.gmra.mxu0 %v2293
    %v2371 = vpop.f32.mrf.mxu0
    %v2372 = vadd.f32 0.0, %v2371
    %v2373 = vpop.f32.mrf.mxu0
    %2374 = vmatprep.mubr.f32.mxu0 0.0
    %2375 = vmatmul.mubr.f32.gmra.mxu0 %v2295
    %v2376 = vpop.f32.mrf.mxu0
    %v2377 = vadd.f32 0.0, %v2376
    %v2378 = vpop.f32.mrf.mxu0
    %2379 = vmatprep.mubr.f32.mxu0 0.0
    %2380 = vmatmul.mubr.f32.gmra.mxu0 %v2297
    %v2381 = vpop.f32.mrf.mxu0
    %v2382 = vadd.f32 0.0, %v2381
    %v2383 = vpop.f32.mrf.mxu0
    %2384 = vmatprep.mubr.f32.mxu0 0.0
    %2385 = vmatmul.mubr.f32.gmra.mxu0 %v2299
    %v2386 = vpop.f32.mrf.mxu0
    %v2387 = vadd.f32 0.0, %v2386
    %v2388 = vpop.f32.mrf.mxu0
    %2389 = vdwg.mxu0
    %v2391 = vsel %vm269, %v2281, 0
    %v2394 = vsel %vm269, %v2282, 0
    %v2397 = vsel %vm269, %v2283, 0
    %v2400 = vsel %vm269, %v2284, 0
    %2402 = vmatprep.subr.mxu0 0.0
    %2403 = vmatpush1.msra.mxu0 0.0
    %2404 = vmatprep.subr.mxu0 0.0
    %2405 = vmatpush1.msra.mxu0 0.0
    %2406 = vmatprep.subr.mxu0 0.0
    %2407 = vmatpush1.msra.mxu0 0.0
    %2408 = vmatprep.subr.mxu0 0.0
    %2409 = vmatpush1.msra.mxu0 0.0
    %2410 = vmatprep.subr.mxu0 0.0
    %2411 = vmatpush1.msra.mxu0 0.0
    %2412 = vmatprep.subr.mxu0 0.0
    %2413 = vmatpush1.msra.mxu0 0.0
    %2414 = vmatprep.subr.mxu0 0.0
    %2415 = vmatpush1.msra.mxu0 0.0
    %2416 = vmatprep.subr.mxu0 0.0
    %2417 = vmatpush1.msra.mxu0 0.0
    %2418 = vmatprep.subr.mxu0 0.0
    %2419 = vmatpush1.msra.mxu0 0.0
    %2420 = vmatprep.subr.mxu0 0.0
    %2421 = vmatpush1.msra.mxu0 0.0
    %2422 = vmatprep.subr.mxu0 0.0
    %2423 = vmatpush1.msra.mxu0 0.0
    %2424 = vmatprep.subr.mxu0 0.0
    %2425 = vmatpush1.msra.mxu0 0.0
    %2426 = vmatprep.subr.mxu0 0.0
    %2427 = vmatpush1.msra.mxu0 %v2288
    %2428 = vmatprep.subr.mxu0 0.0
    %2429 = vmatpush1.msra.mxu0 %v2287
    %2430 = vmatprep.subr.mxu0 0.0
    %2431 = vmatpush1.msra.mxu0 %v2286
    %2432 = vmatprep.subr.mxu0 0.0
    %2433 = vmatpush1.msra.mxu0 %v2285
    %2434 = vmatprep.subr.mxu0 0.0
    %2435 = vmatpush2.msra.mxu0 0.0
    %2436 = vmatprep.subr.mxu0 0.0
    %2437 = vmatpush2.msra.mxu0 0.0
    %2438 = vmatprep.subr.mxu0 0.0
    %2439 = vmatpush2.msra.mxu0 0.0
    %2440 = vmatprep.subr.mxu0 0.0
    %2441 = vmatpush2.msra.mxu0 0.0
    %2442 = vmatprep.subr.mxu0 0.0
    %2443 = vmatpush2.msra.mxu0 0.0
    %2444 = vmatprep.subr.mxu0 0.0
    %2445 = vmatpush2.msra.mxu0 0.0
    %2446 = vmatprep.subr.mxu0 0.0
    %2447 = vmatpush2.msra.mxu0 0.0
    %2448 = vmatprep.subr.mxu0 0.0
    %2449 = vmatpush2.msra.mxu0 0.0
    %2450 = vmatprep.subr.mxu0 0.0
    %2451 = vmatpush2.msra.mxu0 0.0
    %2452 = vmatprep.subr.mxu0 0.0
    %2453 = vmatpush2.msra.mxu0 0.0
    %2454 = vmatprep.subr.mxu0 0.0
    %2455 = vmatpush2.msra.mxu0 0.0
    %2456 = vmatprep.subr.mxu0 0.0
    %2457 = vmatpush2.msra.mxu0 0.0
    %2458 = vmatprep.subr.mxu0 0.0
    %2459 = vmatpush2.msra.mxu0 0.0
    %2460 = vmatprep.subr.mxu0 0.0
    %2461 = vmatpush2.msra.mxu0 0.0
    %2462 = vmatprep.subr.mxu0 0.0
    %2463 = vmatpush2.msra.mxu0 0.0
    %2464 = vmatprep.subr.mxu0 0.0
    %2465 = vmatpush2.msra.mxu0 0.0
    %2466 = vmatprep.mubr.f32.mxu0 0.0
    %2467 = vmatmul.mubr.f32.gmra.mxu0 %v2391
    %v2468 = vpop.f32.mrf.mxu0
    %v2469 = vadd.f32 %v2372, %v2468
    %v2470 = vpop.f32.mrf.mxu0
    %2471 = vmatprep.mubr.f32.mxu0 0.0
    %2472 = vmatmul.mubr.f32.gmra.mxu0 %v2394
    %v2473 = vpop.f32.mrf.mxu0
    %v2474 = vadd.f32 %v2377, %v2473
    %v2475 = vpop.f32.mrf.mxu0
    %2476 = vmatprep.mubr.f32.mxu0 0.0
    %2477 = vmatmul.mubr.f32.gmra.mxu0 %v2397
    %v2478 = vpop.f32.mrf.mxu0
    %v2479 = vadd.f32 %v2382, %v2478
    %v2480 = vpop.f32.mrf.mxu0
    %2481 = vmatprep.mubr.f32.mxu0 0.0
    %2482 = vmatmul.mubr.f32.gmra.mxu0 %v2400
    %v2483 = vpop.f32.mrf.mxu0
    %v2484 = vadd.f32 %v2387, %v2483
    %v2485 = vpop.f32.mrf.mxu0
    %2486 = vdwg.mxu0
    %v2487 = vld [vmem:[%s12] sm:$0x1]
    %v2489 = vlaneseq
    %v2490 = vshrl.u32 %v2489, 7
    %v2491 = vsub.s32 0, %v2490
    %v2492 = vrot.slane %v2487, %v2491
    %v2494 = vadd.f32 %v2469, %v2492
    %v2495 = vadd.f32 %v2474, %v2492
    %v2496 = vadd.f32 %v2479, %v2492
    %v2497 = vadd.f32 %v2484, %v2492
    %v2498 = vmax.f32 %v2494, 0.0
    %v2499 = vmax.f32 %v2495, 0.0
    %v2500 = vmax.f32 %v2496, 0.0
    %v2501 = vmax.f32 %v2497, 0.0
    %v2502 = vld [vmem:[%s13] sm:$0xff]
    %v2503 = vld [vmem:[%s13 + $0x8] sm:$0xff]
    %v2504 = vld [vmem:[%s13 + $0x10] sm:$0xff]
    %v2505 = vld [vmem:[%s13 + $0x18] sm:$0xff]
    %v2506 = vld [vmem:[%s13 + $0x20] sm:$0xff]
    %v2507 = vld [vmem:[%s13 + $0x28] sm:$0xff]
    %v2508 = vld [vmem:[%s13 + $0x30] sm:$0xff]
    %v2509 = vld [vmem:[%s13 + $0x38] sm:$0xff]
    %v2510 = vld [vmem:[%s14] sm:$0x1]
    %v2512 = vlaneseq
    %v2513 = vshrl.u32 %v2512, 7
    %v2514 = vsub.s32 0, %v2513
    %v2515 = vrot.slane %v2510, %v2514
    %vm2517 = vcmask 523264
    %v2519 = vsel %vm2517, %v2498, 0
    %v2522 = vsel %vm2517, %v2499, 0
    %v2525 = vsel %vm2517, %v2500, 0
    %v2528 = vsel %vm2517, %v2501, 0
    %2530 = vmatprep.subr.mxu0 0.0
    %2531 = vmatpush1.msra.mxu0 0.0
    %2532 = vmatprep.subr.mxu0 0.0
    %2533 = vmatpush1.msra.mxu0 0.0
    %2534 = vmatprep.subr.mxu0 0.0
    %2535 = vmatpush1.msra.mxu0 0.0
    %2536 = vmatprep.subr.mxu0 0.0
    %2537 = vmatpush1.msra.mxu0 0.0
    %2538 = vmatprep.subr.mxu0 0.0
    %2539 = vmatpush1.msra.mxu0 0.0
    %2540 = vmatprep.subr.mxu0 0.0
    %2541 = vmatpush1.msra.mxu0 0.0
    %2542 = vmatprep.subr.mxu0 0.0
    %2543 = vmatpush1.msra.mxu0 0.0
    %2544 = vmatprep.subr.mxu0 0.0
    %2545 = vmatpush1.msra.mxu0 0.0
    %2546 = vmatprep.subr.mxu0 0.0
    %2547 = vmatpush1.msra.mxu0 %v2509
    %2548 = vmatprep.subr.mxu0 0.0
    %2549 = vmatpush1.msra.mxu0 %v2508
    %2550 = vmatprep.subr.mxu0 0.0
    %2551 = vmatpush1.msra.mxu0 %v2507
    %2552 = vmatprep.subr.mxu0 0.0
    %2553 = vmatpush1.msra.mxu0 %v2506
    %2554 = vmatprep.subr.mxu0 0.0
    %2555 = vmatpush1.msra.mxu0 %v2505
    %2556 = vmatprep.subr.mxu0 0.0
    %2557 = vmatpush1.msra.mxu0 %v2504
    %2558 = vmatprep.subr.mxu0 0.0
    %2559 = vmatpush1.msra.mxu0 %v2503
    %2560 = vmatprep.subr.mxu0 0.0
    %2561 = vmatpush1.msra.mxu0 %v2502
    %2562 = vmatprep.subr.mxu0 0.0
    %2563 = vmatpush2.msra.mxu0 0.0
    %2564 = vmatprep.subr.mxu0 0.0
    %2565 = vmatpush2.msra.mxu0 0.0
    %2566 = vmatprep.subr.mxu0 0.0
    %2567 = vmatpush2.msra.mxu0 0.0
    %2568 = vmatprep.subr.mxu0 0.0
    %2569 = vmatpush2.msra.mxu0 0.0
    %2570 = vmatprep.subr.mxu0 0.0
    %2571 = vmatpush2.msra.mxu0 0.0
    %2572 = vmatprep.subr.mxu0 0.0
    %2573 = vmatpush2.msra.mxu0 0.0
    %2574 = vmatprep.subr.mxu0 0.0
    %2575 = vmatpush2.msra.mxu0 0.0
    %2576 = vmatprep.subr.mxu0 0.0
    %2577 = vmatpush2.msra.mxu0 0.0
    %2578 = vmatprep.subr.mxu0 0.0
    %2579 = vmatpush2.msra.mxu0 0.0
    %2580 = vmatprep.subr.mxu0 0.0
    %2581 = vmatpush2.msra.mxu0 0.0
    %2582 = vmatprep.subr.mxu0 0.0
    %2583 = vmatpush2.msra.mxu0 0.0
    %2584 = vmatprep.subr.mxu0 0.0
    %2585 = vmatpush2.msra.mxu0 0.0
    %2586 = vmatprep.subr.mxu0 0.0
    %2587 = vmatpush2.msra.mxu0 0.0
    %2588 = vmatprep.subr.mxu0 0.0
    %2589 = vmatpush2.msra.mxu0 0.0
    %2590 = vmatprep.subr.mxu0 0.0
    %2591 = vmatpush2.msra.mxu0 0.0
    %2592 = vmatprep.subr.mxu0 0.0
    %2593 = vmatpush2.msra.mxu0 0.0
    %2594 = vmatprep.mubr.f32.mxu0 0.0
    %2595 = vmatmul.mubr.f32.gmra.mxu0 %v2519
    %v2596 = vpop.f32.mrf.mxu0
    %v2597 = vadd.f32 %v2515, %v2596
    %v2598 = vpop.f32.mrf.mxu0
    %2599 = vmatprep.mubr.f32.mxu0 0.0
    %2600 = vmatmul.mubr.f32.gmra.mxu0 %v2522
    %v2601 = vpop.f32.mrf.mxu0
    %v2602 = vadd.f32 %v2515, %v2601
    %v2603 = vpop.f32.mrf.mxu0
    %2604 = vmatprep.mubr.f32.mxu0 0.0
    %2605 = vmatmul.mubr.f32.gmra.mxu0 %v2525
    %v2606 = vpop.f32.mrf.mxu0
    %v2607 = vadd.f32 %v2515, %v2606
    %v2608 = vpop.f32.mrf.mxu0
    %2609 = vmatprep.mubr.f32.mxu0 0.0
    %2610 = vmatmul.mubr.f32.gmra.mxu0 %v2528
    %v2611 = vpop.f32.mrf.mxu0
    %v2612 = vadd.f32 %v2515, %v2611
    %v2613 = vpop.f32.mrf.mxu0
    %2614 = vdwg.mxu0
    %v2615 = vmax.f32 %v2597, 0.0
    %v2616 = vmax.f32 %v2602, 0.0
    %v2617 = vmax.f32 %v2607, 0.0
    %v2618 = vmax.f32 %v2612, 0.0
    %v2619 = vld [vmem:[%s15] sm:$0x1]
    %v2620 = vld [vmem:[#allocation3] sm:$0x1]
    %2622 = vset.pattern.permute.xlu0 0
    %2623 = vperm.xlu0 %2622, %v2620
    %v2624 = vpop.permute.xlu0 %2623
    %v2626 = vlaneseq
    %v2627 = vshrl.u32 %v2626, 7
    %v2628 = vsub.s32 0, %v2627
    %v2629 = vrot.slane %v2624, %v2628
    %2630 = vmatprep.subr.mxu0 0.0
    %2631 = vmatpush1.xpose.msra.mxu0 0.0
    %2632 = vmatprep.subr.mxu0 0.0
    %2633 = vmatpush1.xpose.msra.mxu0 0.0
    %2634 = vmatprep.subr.mxu0 0.0
    %2635 = vmatpush1.xpose.msra.mxu0 0.0
    %2636 = vmatprep.subr.mxu0 0.0
    %2637 = vmatpush1.xpose.msra.mxu0 0.0
    %2638 = vmatprep.subr.mxu0 0.0
    %2639 = vmatpush1.xpose.msra.mxu0 0.0
    %2640 = vmatprep.subr.mxu0 0.0
    %2641 = vmatpush1.xpose.msra.mxu0 0.0
    %2642 = vmatprep.subr.mxu0 0.0
    %2643 = vmatpush1.xpose.msra.mxu0 0.0
    %2644 = vmatprep.subr.mxu0 0.0
    %2645 = vmatpush1.xpose.msra.mxu0 0.0
    %2646 = vmatprep.subr.mxu0 0.0
    %2647 = vmatpush1.xpose.msra.mxu0 0.0
    %2648 = vmatprep.subr.mxu0 0.0
    %2649 = vmatpush1.xpose.msra.mxu0 0.0
    %2650 = vmatprep.subr.mxu0 0.0
    %2651 = vmatpush1.xpose.msra.mxu0 0.0
    %2652 = vmatprep.subr.mxu0 0.0
    %2653 = vmatpush1.xpose.msra.mxu0 0.0
    %2654 = vmatprep.subr.mxu0 0.0
    %2655 = vmatpush1.xpose.msra.mxu0 %v2618
    %2656 = vmatprep.subr.mxu0 0.0
    %2657 = vmatpush1.xpose.msra.mxu0 %v2617
    %2658 = vmatprep.subr.mxu0 0.0
    %2659 = vmatpush1.xpose.msra.mxu0 %v2616
    %2660 = vmatprep.subr.mxu0 0.0
    %2661 = vmatpush1.xpose.msra.mxu0 %v2615
    %2662 = vmatprep.subr.mxu0 0.0
    %2663 = vmatpush2.xpose.msra.mxu0 0.0
    %2664 = vmatprep.subr.mxu0 0.0
    %2665 = vmatpush2.xpose.msra.mxu0 0.0
    %2666 = vmatprep.subr.mxu0 0.0
    %2667 = vmatpush2.xpose.msra.mxu0 0.0
    %2668 = vmatprep.subr.mxu0 0.0
    %2669 = vmatpush2.xpose.msra.mxu0 0.0
    %2670 = vmatprep.subr.mxu0 0.0
    %2671 = vmatpush2.xpose.msra.mxu0 0.0
    %2672 = vmatprep.subr.mxu0 0.0
    %2673 = vmatpush2.xpose.msra.mxu0 0.0
    %2674 = vmatprep.subr.mxu0 0.0
    %2675 = vmatpush2.xpose.msra.mxu0 0.0
    %2676 = vmatprep.subr.mxu0 0.0
    %2677 = vmatpush2.xpose.msra.mxu0 0.0
    %2678 = vmatprep.subr.mxu0 0.0
    %2679 = vmatpush2.xpose.msra.mxu0 0.0
    %2680 = vmatprep.subr.mxu0 0.0
    %2681 = vmatpush2.xpose.msra.mxu0 0.0
    %2682 = vmatprep.subr.mxu0 0.0
    %2683 = vmatpush2.xpose.msra.mxu0 0.0
    %2684 = vmatprep.subr.mxu0 0.0
    %2685 = vmatpush2.xpose.msra.mxu0 0.0
    %2686 = vmatprep.subr.mxu0 0.0
    %2687 = vmatpush2.xpose.msra.mxu0 0.0
    %2688 = vmatprep.subr.mxu0 0.0
    %2689 = vmatpush2.xpose.msra.mxu0 0.0
    %2690 = vmatprep.subr.mxu0 0.0
    %2691 = vmatpush2.xpose.msra.mxu0 0.0
    %2692 = vmatprep.subr.mxu0 0.0
    %2693 = vmatpush2.xpose.msra.mxu0 0.0
    %2694 = vmatprep.mubr.f32.mxu0 0.0
    %2695 = vmatmul.mubr.f32.gmra.mxu0 %v2619
    %v2696 = vpop.f32.mrf.mxu0
    %v2697 = vadd.f32 %v2629, %v2696
    %v2698 = vpop.f32.mrf.mxu0
    %2699 = vdwg.mxu0
    %v2700 = vld [vmem:[%s1] sm:$0x1]
    %v2701 = vmax.f32 %v2697, 0.0
    %v2702 = vmul.f32 %v2697, %v2700
    %v2703 = vsub.f32 %v2701, %v2702
    %v2704 = vand.u32 2147483647, %v2697
    %v2705 = vsub.f32 0.0, %v2704
    %v2706 = vmul.f32 %v2705, 1.442695
    %v2707 = vpow.pop %v2706
    %v2708 = vadd.f32 %v2707, 1.0
    %v2709 = vlog2.pop %v2708
    %v2710 = vmul.f32 %v2709, 0.6931472
    %v2711 = vmul.f32 -0.5, %v2707
    %v2712 = vadd.f32 %v2711, 1.0
    %v2713 = vmul.f32 %v2712, %v2707
    %v2714 = vand.u32 2147483647, %v2707
    %vm2715 = vcmp.lt.f32.partialorder %v2714, 0.0004427343
    %v2716 = vsel %vm2715, %v2713, %v2710
    %v2717 = vadd.f32 %v2703, %v2716
    %vm2718 = vcmask 253952
    %2719 = vst.msk [vmem:[#allocation15] sm:$0x1] %vm2718, %v2717
    %v2720 = vxor.u32 %v2697, 2147483648
    %v2721 = vmul.f32 %v2720, 1.442695
    %v2722 = vpow.pop %v2721
    %v2723 = vadd.f32 %v2722, 1.0
    %v2724 = vrcp.pop %v2723
    %v2725 = vmul.f32 1.0, %v2724
    %2726 = vst.msk [vmem:[#allocation16] sm:$0x1] %vm2718, %v2725
    // Predicated region
    $region94: #{tpu_custom_call.1} parent=1 // pred_check
      _
    $region95: #{tpu_custom_call.1} parent=1 // pred_check_branch
      %2728 = sbr.rel (0) target = $region97
    $region96: #{tpu_custom_call.1} parent=1 // pred_region
      %s2730 = ssub.s32 16, 16
      %2731 = vsyncadd [#allocation6], %s2730
      %s2733 = sshll.u32 [#allocation15], 4
      %s2734 = int_to_ptr.vmem [resolvable:$true] %s2733
      %2736 = dma.vmem_to_hbm [thread:$0]  %s2734, 16, %s17, [#allocation6]
    $region97: #{tpu_custom_call.1} parent=1 // pred_fallthru
      _
    // Predicated region
    $region98: #{tpu_custom_call.1} parent=1 // pred_check
      _
    $region99: #{tpu_custom_call.1} parent=1 // pred_check_branch
      %2738 = sbr.rel (0) target = $region101
    $region100: #{tpu_custom_call.1} parent=1 // pred_region
      %s2740 = ssub.s32 16, 16
      %2741 = vsyncadd [#allocation17], %s2740
      %s2743 = sshll.u32 [#allocation16], 4
      %s2744 = int_to_ptr.vmem [resolvable:$true] %s2743
      %2746 = dma.vmem_to_hbm [thread:$0]  %s2744, 16, %s18, [#allocation17]
    $region101: #{tpu_custom_call.1} parent=1 // pred_fallthru
      _
    // Predicated region
    $region102: #{tpu_custom_call.1} parent=1 // pred_check
      _
    $region103: #{tpu_custom_call.1} parent=1 // pred_check_branch
      %2748 = sbr.rel (0) target = $region105
    $region104: #{tpu_custom_call.1} parent=1 // pred_region
      %2749 = dma.done [#allocation6], 16
    $region105: #{tpu_custom_call.1} parent=1 // pred_fallthru
      _
    // Predicated region
    $region106: #{tpu_custom_call.1} parent=1 // pred_check
      _
    $region107: #{tpu_custom_call.1} parent=1 // pred_check_branch
      %2751 = sbr.rel (0) target = $region109
    $region108: #{tpu_custom_call.1} parent=1 // pred_region
      %2752 = dma.done [#allocation17], 16
    $region109: #{tpu_custom_call.1} parent=1 // pred_fallthru
      _
    %2753 = vsyncpa [#allocation5], 1
    %2754 = vsyncpa [#allocation8], 1
    %2755 = vsyncpa [#allocation11], 1
    %2756 = vsyncpa [#allocation14], 1
    %2757 = vsyncpa [#allocation6], 1
    %2758 = vsyncpa [#allocation17], 1

</llo_original>
